<compile_context>
chip_gen: v6e
topology: v6e:2x2x1
jax: 0.10.0
libtpu: 0.0.40
codegen_flags: <defaults>
</compile_context>

<pallas_src>
import functools

import jax
import jax.numpy as jnp
import numpy as np
from jax import lax
from jax.experimental import pallas as pl
from jax.experimental.pallas import tpu as pltpu


# ----------------------------- kernel helpers ------------------------------
def _layernorm(h, gamma, beta, eps=1e-5):
    # gamma/beta are (1, C); h is (R, C).  Biased variance, like F.layer_norm.
    mu = jnp.mean(h, axis=-1, keepdims=True)
    var = jnp.mean((h - mu) ** 2, axis=-1, keepdims=True)
    return (h - mu) * lax.rsqrt(var + eps) * gamma + beta


def _erf_poly(x):
    # Abramowitz & Stegun 7.1.26, max abs error 1.5e-7 — uses only exp/abs/VPU
    # polynomials so we do not rely on a lax.erf lowering inside Mosaic.
    a1, a2, a3, a4, a5 = (0.254829592, -0.284496736, 1.421413741,
                          -1.453152027, 1.061405429)
    p = 0.3275911
    ax = jnp.abs(x)
    t = 1.0 / (1.0 + p * ax)
    poly = ((((a5 * t + a4) * t + a3) * t + a2) * t + a1) * t
    e = 1.0 - poly * jnp.exp(-ax * ax)
    return jnp.where(x >= 0.0, e, -e)


def _gelu_exact(x):
    # nn.GELU default = exact erf formulation.
    return 0.5 * x * (1.0 + _erf_poly(x * 0.7071067811865476))


# --------------------------------- kernel ----------------------------------
def block_kernel(x_ref, g1_ref, b1_ref, wqkv_ref, wproj_ref, bproj_ref,
                 g2_ref, b2_ref, wfc1_ref, bfc1_ref, wfc2_ref, bfc2_ref,
                 o_ref, *, num_heads, seq_len, channels, compute_dtype,
                 exact_softmax):
    N, C, H = seq_len, channels, num_heads
    Bb = x_ref.shape[0]
    R = Bb * N                         # batch folded into matmul rows
    hd3 = C // (3 * H)                 # per-head split size
    c3 = C // 3
    cdt = compute_dtype
    NEG = jnp.float32(-1e30)

    # Works for both I/O layouts: (Bb, N*C) [lane-dense] and (Bb, N, C).
    x = x_ref[...].reshape(R, C)

    # ---------------- attention branch: x + proj(attn(norm1(x))) -----------
    h = _layernorm(x, g1_ref[...], b1_ref[...])
    # One lane-dense matmul: output width = H * 8 * hd3 = 128.  The qkv weight
    # is pre-permuted per head into [q4,q5,k3,k4,k5,v3,v4,v5] (q3 dropped,
    # scale folded into the q4/q5 columns on the host).
    qkv = jnp.dot(h.astype(cdt), wqkv_ref[...],
                  preferred_element_type=jnp.float32)            # (R, 8C/3)

    # Column-block masks over the fused 3N key axis (k3 | k4 | k5).
    colv = lax.broadcasted_iota(jnp.int32, (1, 1, 3 * N), 2)

    def chunk(head, role):
        a = (8 * head + role) * hd3
        return qkv[:, a:a + hd3].reshape(Bb, N, hd3)             # (Bb, N, hd3)

    def masked_probs(srows, excluded):
        # Joint softmax numerator/denominator over the two valid key blocks;
        # the excluded block is masked out (exactly 0 after exp).
        keep = (colv < excluded * N) | (colv >= (excluded + 1) * N)
        sm = jnp.where(keep, srows, NEG)
        m = jnp.max(sm, axis=-1, keepdims=True)
        e = jnp.exp(sm - m)
        return e, jnp.sum(e, axis=-1, keepdims=True)

    acc = None                          # (R, C) f32 projection accumulator
    for hh in range(H):                 # H=2 here; fori_loop / grid axis at scale
        q4, q5 = chunk(hh, 0), chunk(hh, 1)
        k3, k4, k5 = chunk(hh, 2), chunk(hh, 3), chunk(hh, 4)
        v3, v4, v5 = chunk(hh, 5), chunk(hh, 6), chunk(hh, 7)

        # Row-stack (sublane concat, 8-row aligned) so each head needs exactly
        # one QK matmul and one PV matmul.
        q_stack = jnp.concatenate([q4, q5], axis=1)              # (Bb, 2N, hd3)
        k_stack = jnp.concatenate([k3, k4, k5], axis=1)          # (Bb, 3N, hd3)
        v_stack = jnp.concatenate([v3, v4, v5], axis=1)          # (Bb, 3N, hd3)

        s = jnp.einsum('bnd,bmd->bnm', q_stack.astype(cdt), k_stack.astype(cdt),
                       preferred_element_type=jnp.float32)       # (Bb, 2N, 3N)
        s4, s5 = s[:, :N, :], s[:, N:, :]

        e3, l3 = masked_probs(s4, 2)    # x3: q4 vs {k3,k4} -> {v3,v4}
        e4, l4 = masked_probs(s5, 1)    # x4: q5 vs {k3,k5} -> {v3,v5}
        e5, l5 = masked_probs(s5, 0)    # x5: q5 vs {k4,k5} -> {v4,v5}

        e_all = jnp.concatenate([e3, e4, e5], axis=1)            # (Bb, 3N, 3N)
        l_all = jnp.concatenate([l3, l4, l5], axis=1)            # (Bb, 3N, 1)

        o_all = jnp.einsum('bnm,bmd->bnd', e_all.astype(cdt), v_stack.astype(cdt),
                           preferred_element_type=jnp.float32)   # (Bb, 3N, hd3)
        inv = (1.0 / l_all) if exact_softmax else pl.reciprocal(l_all, approx=True)
        o_all = o_all * inv

        # Accumulate the projection from sublane-aligned row slabs of wproj
        # (no lane concat of the per-slot / per-head outputs).
        for slot in range(3):
            part = o_all[:, slot * N:(slot + 1) * N, :].reshape(R, hd3)
            row0 = slot * c3 + hh * hd3
            term = jnp.dot(part.astype(cdt), wproj_ref[row0:row0 + hd3, :],
                           preferred_element_type=jnp.float32)
            acc = term if acc is None else acc + term

    x1 = x + acc + bproj_ref[...]

    # ---------------- MLP branch: x + fc2(gelu(fc1(norm2(x)))) -------------
    h2 = _layernorm(x1, g2_ref[...], b2_ref[...])
    h2 = jnp.dot(h2.astype(cdt), wfc1_ref[...],
                 preferred_element_type=jnp.float32) + bfc1_ref[...]
    h2 = _gelu_exact(h2)
    h2 = jnp.dot(h2.astype(cdt), wfc2_ref[...],
                 preferred_element_type=jnp.float32) + bfc2_ref[...]

    o_ref[...] = (x1 + h2).reshape(o_ref.shape)


# ---------------------- host-side weight layout plumbing --------------------
def _permute_qkv_weight(wqkv_t, num_heads, scale):
    """(C, 3C) pre-transposed qkv weight -> (C, 8C/3) weight whose output
    columns are, per head, [q4, q5, k3, k4, k5, v3, v4, v5] (each hd3 wide).
    The unused q3 columns are dropped and `scale` is folded into q4/q5."""
    C = wqkv_t.shape[0]
    hd = C // num_heads
    hd3 = hd // 3
    cols = []
    for h in range(num_heads):
        def col(role, split):
            start = role * C + h * hd + split * hd3
            return wqkv_t[:, start:start + hd3]
        cols += [col(0, 1) * scale, col(0, 2) * scale,        # q4, q5 (scaled)
                 col(1, 0), col(1, 1), col(1, 2),             # k3, k4, k5
                 col(2, 0), col(2, 1), col(2, 2)]             # v3, v4, v5
    return jnp.concatenate(cols, axis=1)


# -------------------------------- wrapper -----------------------------------
def block_forward(x, params, num_heads, *, matmul_dtype=jnp.bfloat16,
                  batch_block=None, lane_dense_io=None):
    B, N, C = x.shape
    head_dim = C // num_heads
    assert C % num_heads == 0, "dim*3 must be divisible by num_heads"
    assert head_dim % 3 == 0, "split attention needs head_dim divisible by 3"
    scale = float(head_dim) ** (-0.5)
    (g1, b1, wqkv_t, wproj_t, bproj, g2, b2, wfc1_t, bfc1, wfc2_t, bfc2) = params
    hidden = wfc1_t.shape[1]

    # Host-side layout plumbing (free): consumption-ordered, scale-folded qkv
    # weight; bf16 cast of all MXU weight operands on every TPU generation.
    wqkv_perm = _permute_qkv_weight(wqkv_t, num_heads, scale).astype(matmul_dtype)
    wproj_c = wproj_t.astype(matmul_dtype)
    wfc1_c = wfc1_t.astype(matmul_dtype)
    wfc2_c = wfc2_t.astype(matmul_dtype)
    qkv_w = wqkv_perm.shape[1]

    # [R4] Pick Bb: fill sublanes (<=256 rows/step) but keep >=2 grid steps so
    # v7x's two TensorCores can split the "parallel" axis and the x/out DMAs
    # pipeline across steps.  On v5e/v6e the larger Bb amortizes ~0.35us/step.
    if batch_block is None:
        divisors = [d for d in range(1, B + 1) if B % d == 0]
        ok = [d for d in divisors if d * N <= 256]
        multi = [d for d in ok if B // d >= 2]
        batch_block = max(multi) if multi else (max(ok) if ok else 1)
    Bb = batch_block
    assert B % Bb == 0

    exact_softmax = jnp.dtype(matmul_dtype) == jnp.dtype(jnp.float32)
    kernel = functools.partial(block_kernel, num_heads=num_heads, seq_len=N,
                               channels=C, compute_dtype=matmul_dtype,
                               exact_softmax=exact_softmax)

    def full(shape):
        # Weights/biases: constant block index -> DMA'd once, stay resident.
        # NOTE: at real ViT dims, single-buffer these (pl.Buffered(1)), set
        # vmem_limit_bytes, and tile fc1/fc2 over the hidden dim ("arbitrary").
        return pl.BlockSpec(shape, lambda i: (0,) * len(shape))

    weight_specs = [
        full((1, C)), full((1, C)),                      # norm1 gamma/beta
        full((C, qkv_w)),                                # qkv weight (permuted)
        full((C, C)), full((1, C)),                      # proj weight/bias
        full((1, C)), full((1, C)),                      # norm2 gamma/beta
        full((C, hidden)), full((1, hidden)),            # fc1 weight/bias
        full((hidden, C)), full((1, C)),                 # fc2 weight/bias
    ]
    weight_args = (g1, b1, wqkv_perm, wproj_c, bproj, g2, b2,
                   wfc1_c, bfc1, wfc2_c, bfc2)
    cparams = pltpu.CompilerParams(dimension_semantics=("parallel",))
    grid = (B // Bb,)

    def run(lane_dense):
        if lane_dense:
            # [R1] 2-D lane-dense layout: last dim N*C is a multiple of 128.
            x_in = x.reshape(B, N * C)
            io_spec = pl.BlockSpec((Bb, N * C), lambda i: (i, 0))
            out_shape = jax.ShapeDtypeStruct((B, N * C), jnp.float32)
        else:
            x_in = x
            io_spec = pl.BlockSpec((Bb, N, C), lambda i: (i, 0, 0))
            out_shape = jax.ShapeDtypeStruct((B, N, C), jnp.float32)
        out = pl.pallas_call(
            kernel,
            out_shape=out_shape,
            grid=grid,
            in_specs=[io_spec] + weight_specs,
            out_specs=io_spec,
            compiler_params=cparams,
        )(x_in, *weight_args)
        return out.reshape(B, N, C)

    if lane_dense_io is None:
        # Prefer the lane-dense layout; fall back to the 3-D layout if this
        # Mosaic build does not lower the (Bb, N*C) <-> (Bb*N, C) reshape.
        try:
            return jax.block_until_ready(run(True))
        except Exception:
            return run(False)
    return run(lane_dense_io)


# ---------------------- pure-JAX reference (PyTorch semantics) ---------------
def block_ref(x, params, num_heads):
    g1, b1, wqkv_t, wproj_t, bproj, g2, b2, wfc1_t, bfc1, wfc2_t, bfc2 = params
    B, N, C = x.shape
    hd = C // num_heads
    hd3 = hd // 3
    scale = float(hd) ** (-0.5)

    def ln(h, g, b):
        mu = h.mean(-1, keepdims=True)
        var = ((h - mu) ** 2).mean(-1, keepdims=True)
        return (h - mu) / jnp.sqrt(var + 1e-5) * g[0] + b[0]

    h = ln(x, g1, b1)
    qkv = h @ wqkv_t
    qkv = qkv.reshape(B, N, 3, num_heads, hd).transpose(2, 0, 3, 1, 4)
    q, k, v = qkv[0], qkv[1], qkv[2]                     # (B, H, N, hd)
    q3, q4, q5 = q[..., :hd3], q[..., hd3:2 * hd3], q[..., 2 * hd3:3 * hd3]
    k3, k4, k5 = k[..., :hd3], k[..., hd3:2 * hd3], k[..., 2 * hd3:3 * hd3]
    v3, v4, v5 = v[..., :hd3], v[..., hd3:2 * hd3], v[..., 2 * hd3:3 * hd3]

    def attn_blk(qq, ka, kb, va, vb):
        kk = jnp.concatenate([ka, kb], axis=2)
        vv = jnp.concatenate([va, vb], axis=2)
        s = jnp.einsum('bhnd,bhmd->bhnm', qq, kk) * scale
        p = jax.nn.softmax(s, axis=-1)
        o = jnp.einsum('bhnm,bhmd->bhnd', p, vv)
        return o.transpose(0, 2, 1, 3).reshape(B, N, C // 3)

    x3 = attn_blk(q4, k3, k4, v3, v4)
    x4 = attn_blk(q5, k3, k5, v3, v5)
    x5 = attn_blk(q5, k4, k5, v4, v5)
    a = jnp.concatenate([x3, x4, x5], axis=-1) @ wproj_t + bproj[0]
    x = x + a
    h2 = ln(x, g2, b2)
    h2 = h2 @ wfc1_t + bfc1[0]
    h2 = jax.nn.gelu(h2, approximate=False)
    h2 = h2 @ wfc2_t + bfc2[0]
    return x + h2


# ---------------------------------- main -------------------------------------
if __name__ == "__main__":
    # Block(dim=16, num_heads=2, mlp_ratio=4.0): operates on C = dim*3 = 48,
    # head_dim = 24 (divisible by 3 as the split attention requires),
    # mlp hidden = int(dim * mlp_ratio) = 64.  B=16, N=8 -> Bb=8, grid=(2,)
    # (>=2 "parallel" steps for v7x) with 64 matmul rows per step.
    dim, num_heads, mlp_ratio = 16, 2, 4.0
    B, N = 16, 8
    C = dim * 3
    hidden = int(dim * mlp_ratio)

    key = jax.random.PRNGKey(0)
    ks = jax.random.split(key, 12)

    def nrm(k, shape, s=0.02):
        return (jax.random.normal(k, shape, jnp.float32) * s).astype(jnp.float32)

    x = jax.random.normal(ks[0], (B, N, C), jnp.float32)

    params = (
        1.0 + nrm(ks[1], (1, C), 0.01),          # norm1 gamma
        nrm(ks[2], (1, C), 0.01),                # norm1 beta
        nrm(ks[3], (C, 3 * C)),                  # qkv weight, pre-transposed (no bias)
        nrm(ks[4], (C, C)),                      # proj weight, pre-transposed
        nrm(ks[5], (1, C), 0.01),                # proj bias
        1.0 + nrm(ks[6], (1, C), 0.01),          # norm2 gamma
        nrm(ks[7], (1, C), 0.01),                # norm2 beta
        nrm(ks[8], (C, hidden)),                 # fc1 weight, pre-transposed
        nrm(ks[9], (1, hidden), 0.01),           # fc1 bias
        nrm(ks[10], (hidden, C)),                # fc2 weight, pre-transposed
        nrm(ks[11], (1, C), 0.01),               # fc2 bias
    )

    ref = jax.block_until_ready(block_ref(x, params, num_heads))

    # bf16 MXU-operand path: the production path on v5e / v6e / v7x.
    out_bf16 = jax.block_until_ready(block_forward(x, params, num_heads))
    np.testing.assert_allclose(np.asarray(out_bf16), np.asarray(ref),
                               rtol=2e-2, atol=2e-2)

    # f32 MXU-operand path (validation): exact softmax divide; tighter tolerance.
    out_f32 = jax.block_until_ready(
        block_forward(x, params, num_heads, matmul_dtype=jnp.float32))
    np.testing.assert_allclose(np.asarray(out_f32), np.asarray(ref),
                               rtol=2e-3, atol=2e-3)

    print("KERNEL_OK")
</pallas_src>

<mosaic_0001>
module attributes {stable_mosaic.version = 11 : i64} {
  func.func @block_kernel(%arg0: i32, %arg1: memref<8x384xf32, #tpu.memory_space<vmem>>, %arg2: memref<1x48xf32, #tpu.memory_space<vmem>>, %arg3: memref<1x48xf32, #tpu.memory_space<vmem>>, %arg4: memref<48x128xbf16, #tpu.memory_space<vmem>>, %arg5: memref<48x48xbf16, #tpu.memory_space<vmem>>, %arg6: memref<1x48xf32, #tpu.memory_space<vmem>>, %arg7: memref<1x48xf32, #tpu.memory_space<vmem>>, %arg8: memref<1x48xf32, #tpu.memory_space<vmem>>, %arg9: memref<48x64xbf16, #tpu.memory_space<vmem>>, %arg10: memref<1x64xf32, #tpu.memory_space<vmem>>, %arg11: memref<64x48xbf16, #tpu.memory_space<vmem>>, %arg12: memref<1x48xf32, #tpu.memory_space<vmem>>, %arg13: memref<8x384xf32, #tpu.memory_space<vmem>>) attributes {dimension_semantics = [#tpu.dimension_semantics<parallel>], iteration_bounds = array<i64: 2>, scalar_prefetch = 0 : i64, scratch_operands = 0 : i64, tpu.core_type = #tpu.core_type<tc>, window_params = [{transform_indices = @transform_0, window_bounds = array<i64: 8, 384>}, {pipeline_mode = #tpu.pipeline_mode<synchronous>, transform_indices = @transform_1, window_bounds = array<i64: 1, 48>}, {pipeline_mode = #tpu.pipeline_mode<synchronous>, transform_indices = @transform_2, window_bounds = array<i64: 1, 48>}, {pipeline_mode = #tpu.pipeline_mode<synchronous>, transform_indices = @transform_3, window_bounds = array<i64: 48, 128>}, {pipeline_mode = #tpu.pipeline_mode<synchronous>, transform_indices = @transform_4, window_bounds = array<i64: 48, 48>}, {pipeline_mode = #tpu.pipeline_mode<synchronous>, transform_indices = @transform_5, window_bounds = array<i64: 1, 48>}, {pipeline_mode = #tpu.pipeline_mode<synchronous>, transform_indices = @transform_6, window_bounds = array<i64: 1, 48>}, {pipeline_mode = #tpu.pipeline_mode<synchronous>, transform_indices = @transform_7, window_bounds = array<i64: 1, 48>}, {pipeline_mode = #tpu.pipeline_mode<synchronous>, transform_indices = @transform_8, window_bounds = array<i64: 48, 64>}, {pipeline_mode = #tpu.pipeline_mode<synchronous>, transform_indices = @transform_9, window_bounds = array<i64: 1, 64>}, {pipeline_mode = #tpu.pipeline_mode<synchronous>, transform_indices = @transform_10, window_bounds = array<i64: 64, 48>}, {pipeline_mode = #tpu.pipeline_mode<synchronous>, transform_indices = @transform_11, window_bounds = array<i64: 1, 48>}, {transform_indices = @transform_12, window_bounds = array<i64: 8, 384>}]} {
    %c0 = arith.constant 0 : index
    %c0_0 = arith.constant 0 : index
    %0 = vector.load %arg1[%c0, %c0_0] : memref<8x384xf32, #tpu.memory_space<vmem>>, vector<8x384xf32>
    %1 = vector.shape_cast %0 : vector<8x384xf32> to vector<64x48xf32>
    %c0_1 = arith.constant 0 : index
    %c0_2 = arith.constant 0 : index
    %2 = vector.load %arg2[%c0_1, %c0_2] : memref<1x48xf32, #tpu.memory_space<vmem>>, vector<1x48xf32>
    %c0_3 = arith.constant 0 : index
    %c0_4 = arith.constant 0 : index
    %3 = vector.load %arg3[%c0_3, %c0_4] : memref<1x48xf32, #tpu.memory_space<vmem>>, vector<1x48xf32>
    %cst = arith.constant dense<0.000000e+00> : vector<64xf32>
    %4 = vector.multi_reduction <add>, %1, %cst [1] : vector<64x48xf32> to vector<64xf32>
    %5 = vector.shape_cast %4 : vector<64xf32> to vector<64x1xf32>
    %cst_5 = arith.constant 4.800000e+01 : f32
    %6 = vector.broadcast %cst_5 : f32 to vector<64x1xf32>
    %7 = arith.divf %5, %6 : vector<64x1xf32>
    %8 = vector.broadcast %7 : vector<64x1xf32> to vector<64x48xf32>
    %9 = arith.subf %1, %8 : vector<64x48xf32>
    %10 = arith.mulf %9, %9 : vector<64x48xf32>
    %cst_6 = arith.constant dense<0.000000e+00> : vector<64xf32>
    %11 = vector.multi_reduction <add>, %10, %cst_6 [1] : vector<64x48xf32> to vector<64xf32>
    %12 = vector.shape_cast %11 : vector<64xf32> to vector<64x1xf32>
    %cst_7 = arith.constant 4.800000e+01 : f32
    %13 = vector.broadcast %cst_7 : f32 to vector<64x1xf32>
    %14 = arith.divf %12, %13 : vector<64x1xf32>
    %15 = vector.broadcast %7 : vector<64x1xf32> to vector<64x48xf32>
    %16 = arith.subf %1, %15 : vector<64x48xf32>
    %cst_8 = arith.constant 9.99999974E-6 : f32
    %17 = vector.broadcast %cst_8 : f32 to vector<64x1xf32>
    %18 = arith.addf %14, %17 : vector<64x1xf32>
    %19 = math.rsqrt %18 : vector<64x1xf32>
    %20 = vector.broadcast %19 : vector<64x1xf32> to vector<64x48xf32>
    %21 = arith.mulf %16, %20 : vector<64x48xf32>
    %22 = vector.broadcast %2 : vector<1x48xf32> to vector<64x48xf32>
    %23 = arith.mulf %21, %22 : vector<64x48xf32>
    %24 = vector.broadcast %3 : vector<1x48xf32> to vector<64x48xf32>
    %25 = arith.addf %23, %24 : vector<64x48xf32>
    %26 = arith.truncf %25 : vector<64x48xf32> to vector<64x48xbf16>
    %c0_9 = arith.constant 0 : index
    %c0_10 = arith.constant 0 : index
    %27 = vector.load %arg4[%c0_9, %c0_10] : memref<48x128xbf16, #tpu.memory_space<vmem>>, vector<48x128xbf16>
    %cst_11 = arith.constant dense<0.000000e+00> : vector<64x128xf32>
    %28 = tpu.matmul %26, %27, %cst_11 {dimension_numbers = #tpu.dot_dimension_numbers<[1], [0], [0], [1], [0, 0, 1, 1], [], []>} : vector<64x48xbf16>, vector<48x128xbf16>, vector<64x128xf32> -> vector<64x128xf32>
    %29 = tpu.iota {dimensions = array<i32: 2>} : vector<1x1x24xi32>
    %30 = vector.extract_strided_slice %28 {offsets = [0, 0], sizes = [64, 8], strides = [1, 1]} : vector<64x128xf32> to vector<64x8xf32>
    %31 = vector.shape_cast %30 : vector<64x8xf32> to vector<8x8x8xf32>
    %32 = vector.extract_strided_slice %28 {offsets = [0, 8], sizes = [64, 8], strides = [1, 1]} : vector<64x128xf32> to vector<64x8xf32>
    %33 = vector.shape_cast %32 : vector<64x8xf32> to vector<8x8x8xf32>
    %34 = vector.extract_strided_slice %28 {offsets = [0, 16], sizes = [64, 8], strides = [1, 1]} : vector<64x128xf32> to vector<64x8xf32>
    %35 = vector.shape_cast %34 : vector<64x8xf32> to vector<8x8x8xf32>
    %36 = vector.extract_strided_slice %28 {offsets = [0, 24], sizes = [64, 8], strides = [1, 1]} : vector<64x128xf32> to vector<64x8xf32>
    %37 = vector.shape_cast %36 : vector<64x8xf32> to vector<8x8x8xf32>
    %38 = vector.extract_strided_slice %28 {offsets = [0, 32], sizes = [64, 8], strides = [1, 1]} : vector<64x128xf32> to vector<64x8xf32>
    %39 = vector.shape_cast %38 : vector<64x8xf32> to vector<8x8x8xf32>
    %40 = vector.extract_strided_slice %28 {offsets = [0, 40], sizes = [64, 8], strides = [1, 1]} : vector<64x128xf32> to vector<64x8xf32>
    %41 = vector.shape_cast %40 : vector<64x8xf32> to vector<8x8x8xf32>
    %42 = vector.extract_strided_slice %28 {offsets = [0, 48], sizes = [64, 8], strides = [1, 1]} : vector<64x128xf32> to vector<64x8xf32>
    %43 = vector.shape_cast %42 : vector<64x8xf32> to vector<8x8x8xf32>
    %44 = vector.extract_strided_slice %28 {offsets = [0, 56], sizes = [64, 8], strides = [1, 1]} : vector<64x128xf32> to vector<64x8xf32>
    %45 = vector.shape_cast %44 : vector<64x8xf32> to vector<8x8x8xf32>
    %46 = tpu.concatenate %31, %33 in 1 : vector<8x8x8xf32>, vector<8x8x8xf32> -> vector<8x16x8xf32>
    %47 = tpu.concatenate %35, %37, %39 in 1 : vector<8x8x8xf32>, vector<8x8x8xf32>, vector<8x8x8xf32> -> vector<8x24x8xf32>
    %48 = tpu.concatenate %41, %43, %45 in 1 : vector<8x8x8xf32>, vector<8x8x8xf32>, vector<8x8x8xf32> -> vector<8x24x8xf32>
    %49 = arith.truncf %46 : vector<8x16x8xf32> to vector<8x16x8xbf16>
    %50 = arith.truncf %47 : vector<8x24x8xf32> to vector<8x24x8xbf16>
    "tpu.trace_start"() <{level = 10 : i32, message = "bnd,bmd->bnm"}> : () -> ()
    %cst_12 = arith.constant dense<0.000000e+00> : vector<8x16x24xf32>
    %51 = tpu.matmul %49, %50, %cst_12 {dimension_numbers = #tpu.dot_dimension_numbers<[2], [2], [1], [1], [0, 0, 0, 1, 1, 1], [0], [0]>} : vector<8x16x8xbf16>, vector<8x24x8xbf16>, vector<8x16x24xf32> -> vector<8x16x24xf32>
    "tpu.trace_stop"() : () -> ()
    %52 = vector.extract_strided_slice %51 {offsets = [0, 0, 0], sizes = [8, 8, 24], strides = [1, 1, 1]} : vector<8x16x24xf32> to vector<8x8x24xf32>
    %53 = vector.extract_strided_slice %51 {offsets = [0, 8, 0], sizes = [8, 8, 24], strides = [1, 1, 1]} : vector<8x16x24xf32> to vector<8x8x24xf32>
    %c16_i32 = arith.constant 16 : i32
    %54 = vector.broadcast %c16_i32 : i32 to vector<1x1x24xi32>
    %55 = arith.cmpi slt, %29, %54 : vector<1x1x24xi32>
    %c24_i32 = arith.constant 24 : i32
    %56 = vector.broadcast %c24_i32 : i32 to vector<1x1x24xi32>
    %57 = arith.cmpi sge, %29, %56 : vector<1x1x24xi32>
    %58 = arith.ori %55, %57 : vector<1x1x24xi1>
    %cst_13 = arith.constant -1.000000e+30 : f32
    %59 = vector.shape_cast %58 : vector<1x1x24xi1> to vector<1x1x24xi1>
    %60 = vector.broadcast %59 : vector<1x1x24xi1> to vector<8x8x24xi1>
    %61 = vector.broadcast %cst_13 : f32 to vector<8x8x24xf32>
    %62 = arith.select %60, %52, %61 : vector<8x8x24xi1>, vector<8x8x24xf32>
    %cst_14 = arith.constant dense<0xFF800000> : vector<8x8xf32>
    %63 = vector.multi_reduction <maximumf>, %62, %cst_14 [2] : vector<8x8x24xf32> to vector<8x8xf32>
    %64 = vector.shape_cast %63 : vector<8x8xf32> to vector<8x8x1xf32>
    %65 = vector.broadcast %64 : vector<8x8x1xf32> to vector<8x8x24xf32>
    %66 = arith.subf %62, %65 : vector<8x8x24xf32>
    %67 = math.exp %66 : vector<8x8x24xf32>
    %cst_15 = arith.constant dense<0.000000e+00> : vector<8x8xf32>
    %68 = vector.multi_reduction <add>, %67, %cst_15 [2] : vector<8x8x24xf32> to vector<8x8xf32>
    %69 = vector.shape_cast %68 : vector<8x8xf32> to vector<8x8x1xf32>
    %c8_i32 = arith.constant 8 : i32
    %70 = vector.broadcast %c8_i32 : i32 to vector<1x1x24xi32>
    %71 = arith.cmpi slt, %29, %70 : vector<1x1x24xi32>
    %c16_i32_16 = arith.constant 16 : i32
    %72 = vector.broadcast %c16_i32_16 : i32 to vector<1x1x24xi32>
    %73 = arith.cmpi sge, %29, %72 : vector<1x1x24xi32>
    %74 = arith.ori %71, %73 : vector<1x1x24xi1>
    %cst_17 = arith.constant -1.000000e+30 : f32
    %75 = vector.shape_cast %74 : vector<1x1x24xi1> to vector<1x1x24xi1>
    %76 = vector.broadcast %75 : vector<1x1x24xi1> to vector<8x8x24xi1>
    %77 = vector.broadcast %cst_17 : f32 to vector<8x8x24xf32>
    %78 = arith.select %76, %53, %77 : vector<8x8x24xi1>, vector<8x8x24xf32>
    %cst_18 = arith.constant dense<0xFF800000> : vector<8x8xf32>
    %79 = vector.multi_reduction <maximumf>, %78, %cst_18 [2] : vector<8x8x24xf32> to vector<8x8xf32>
    %80 = vector.shape_cast %79 : vector<8x8xf32> to vector<8x8x1xf32>
    %81 = vector.broadcast %80 : vector<8x8x1xf32> to vector<8x8x24xf32>
    %82 = arith.subf %78, %81 : vector<8x8x24xf32>
    %83 = math.exp %82 : vector<8x8x24xf32>
    %cst_19 = arith.constant dense<0.000000e+00> : vector<8x8xf32>
    %84 = vector.multi_reduction <add>, %83, %cst_19 [2] : vector<8x8x24xf32> to vector<8x8xf32>
    %85 = vector.shape_cast %84 : vector<8x8xf32> to vector<8x8x1xf32>
    %c0_i32 = arith.constant 0 : i32
    %86 = vector.broadcast %c0_i32 : i32 to vector<1x1x24xi32>
    %87 = arith.cmpi slt, %29, %86 : vector<1x1x24xi32>
    %c8_i32_20 = arith.constant 8 : i32
    %88 = vector.broadcast %c8_i32_20 : i32 to vector<1x1x24xi32>
    %89 = arith.cmpi sge, %29, %88 : vector<1x1x24xi32>
    %90 = arith.ori %87, %89 : vector<1x1x24xi1>
    %cst_21 = arith.constant -1.000000e+30 : f32
    %91 = vector.shape_cast %90 : vector<1x1x24xi1> to vector<1x1x24xi1>
    %92 = vector.broadcast %91 : vector<1x1x24xi1> to vector<8x8x24xi1>
    %93 = vector.broadcast %cst_21 : f32 to vector<8x8x24xf32>
    %94 = arith.select %92, %53, %93 : vector<8x8x24xi1>, vector<8x8x24xf32>
    %cst_22 = arith.constant dense<0xFF800000> : vector<8x8xf32>
    %95 = vector.multi_reduction <maximumf>, %94, %cst_22 [2] : vector<8x8x24xf32> to vector<8x8xf32>
    %96 = vector.shape_cast %95 : vector<8x8xf32> to vector<8x8x1xf32>
    %97 = vector.broadcast %96 : vector<8x8x1xf32> to vector<8x8x24xf32>
    %98 = arith.subf %94, %97 : vector<8x8x24xf32>
    %99 = math.exp %98 : vector<8x8x24xf32>
    %cst_23 = arith.constant dense<0.000000e+00> : vector<8x8xf32>
    %100 = vector.multi_reduction <add>, %99, %cst_23 [2] : vector<8x8x24xf32> to vector<8x8xf32>
    %101 = vector.shape_cast %100 : vector<8x8xf32> to vector<8x8x1xf32>
    %102 = tpu.concatenate %67, %83, %99 in 1 : vector<8x8x24xf32>, vector<8x8x24xf32>, vector<8x8x24xf32> -> vector<8x24x24xf32>
    %103 = tpu.concatenate %69, %85, %101 in 1 : vector<8x8x1xf32>, vector<8x8x1xf32>, vector<8x8x1xf32> -> vector<8x24x1xf32>
    %104 = arith.truncf %102 : vector<8x24x24xf32> to vector<8x24x24xbf16>
    %105 = arith.truncf %48 : vector<8x24x8xf32> to vector<8x24x8xbf16>
    "tpu.trace_start"() <{level = 10 : i32, message = "bnm,bmd->bnd"}> : () -> ()
    %cst_24 = arith.constant dense<0.000000e+00> : vector<8x24x8xf32>
    %106 = tpu.matmul %104, %105, %cst_24 {dimension_numbers = #tpu.dot_dimension_numbers<[2], [1], [1], [2], [0, 0, 0, 1, 1, 2], [0], [0]>} : vector<8x24x24xbf16>, vector<8x24x8xbf16>, vector<8x24x8xf32> -> vector<8x24x8xf32>
    "tpu.trace_stop"() : () -> ()
    %107 = tpu.reciprocal %103 {approx = true} : vector<8x24x1xf32> -> vector<8x24x1xf32>
    %108 = vector.broadcast %107 : vector<8x24x1xf32> to vector<8x24x8xf32>
    %109 = arith.mulf %106, %108 : vector<8x24x8xf32>
    %110 = vector.extract_strided_slice %109 {offsets = [0, 0, 0], sizes = [8, 8, 8], strides = [1, 1, 1]} : vector<8x24x8xf32> to vector<8x8x8xf32>
    %111 = vector.shape_cast %110 : vector<8x8x8xf32> to vector<64x8xf32>
    %112 = arith.truncf %111 : vector<64x8xf32> to vector<64x8xbf16>
    %c0_25 = arith.constant 0 : index
    %c0_26 = arith.constant 0 : index
    %113 = vector.load %arg5[%c0_25, %c0_26] : memref<48x48xbf16, #tpu.memory_space<vmem>>, vector<8x48xbf16>
    %cst_27 = arith.constant dense<0.000000e+00> : vector<64x48xf32>
    %114 = tpu.matmul %112, %113, %cst_27 {dimension_numbers = #tpu.dot_dimension_numbers<[1], [0], [0], [1], [0, 0, 1, 1], [], []>} : vector<64x8xbf16>, vector<8x48xbf16>, vector<64x48xf32> -> vector<64x48xf32>
    %115 = vector.extract_strided_slice %109 {offsets = [0, 8, 0], sizes = [8, 8, 8], strides = [1, 1, 1]} : vector<8x24x8xf32> to vector<8x8x8xf32>
    %116 = vector.shape_cast %115 : vector<8x8x8xf32> to vector<64x8xf32>
    %117 = arith.truncf %116 : vector<64x8xf32> to vector<64x8xbf16>
    %c16 = arith.constant 16 : index
    %c0_28 = arith.constant 0 : index
    %118 = vector.load %arg5[%c16, %c0_28] : memref<48x48xbf16, #tpu.memory_space<vmem>>, vector<8x48xbf16>
    %cst_29 = arith.constant dense<0.000000e+00> : vector<64x48xf32>
    %119 = tpu.matmul %117, %118, %cst_29 {dimension_numbers = #tpu.dot_dimension_numbers<[1], [0], [0], [1], [0, 0, 1, 1], [], []>} : vector<64x8xbf16>, vector<8x48xbf16>, vector<64x48xf32> -> vector<64x48xf32>
    %120 = arith.addf %114, %119 : vector<64x48xf32>
    %121 = vector.extract_strided_slice %109 {offsets = [0, 16, 0], sizes = [8, 8, 8], strides = [1, 1, 1]} : vector<8x24x8xf32> to vector<8x8x8xf32>
    %122 = vector.shape_cast %121 : vector<8x8x8xf32> to vector<64x8xf32>
    %123 = arith.truncf %122 : vector<64x8xf32> to vector<64x8xbf16>
    %c32 = arith.constant 32 : index
    %c0_30 = arith.constant 0 : index
    %124 = vector.load %arg5[%c32, %c0_30] : memref<48x48xbf16, #tpu.memory_space<vmem>>, vector<8x48xbf16>
    %cst_31 = arith.constant dense<0.000000e+00> : vector<64x48xf32>
    %125 = tpu.matmul %123, %124, %cst_31 {dimension_numbers = #tpu.dot_dimension_numbers<[1], [0], [0], [1], [0, 0, 1, 1], [], []>} : vector<64x8xbf16>, vector<8x48xbf16>, vector<64x48xf32> -> vector<64x48xf32>
    %126 = arith.addf %120, %125 : vector<64x48xf32>
    %127 = vector.extract_strided_slice %28 {offsets = [0, 64], sizes = [64, 8], strides = [1, 1]} : vector<64x128xf32> to vector<64x8xf32>
    %128 = vector.shape_cast %127 : vector<64x8xf32> to vector<8x8x8xf32>
    %129 = vector.extract_strided_slice %28 {offsets = [0, 72], sizes = [64, 8], strides = [1, 1]} : vector<64x128xf32> to vector<64x8xf32>
    %130 = vector.shape_cast %129 : vector<64x8xf32> to vector<8x8x8xf32>
    %131 = vector.extract_strided_slice %28 {offsets = [0, 80], sizes = [64, 8], strides = [1, 1]} : vector<64x128xf32> to vector<64x8xf32>
    %132 = vector.shape_cast %131 : vector<64x8xf32> to vector<8x8x8xf32>
    %133 = vector.extract_strided_slice %28 {offsets = [0, 88], sizes = [64, 8], strides = [1, 1]} : vector<64x128xf32> to vector<64x8xf32>
    %134 = vector.shape_cast %133 : vector<64x8xf32> to vector<8x8x8xf32>
    %135 = vector.extract_strided_slice %28 {offsets = [0, 96], sizes = [64, 8], strides = [1, 1]} : vector<64x128xf32> to vector<64x8xf32>
    %136 = vector.shape_cast %135 : vector<64x8xf32> to vector<8x8x8xf32>
    %137 = vector.extract_strided_slice %28 {offsets = [0, 104], sizes = [64, 8], strides = [1, 1]} : vector<64x128xf32> to vector<64x8xf32>
    %138 = vector.shape_cast %137 : vector<64x8xf32> to vector<8x8x8xf32>
    %139 = vector.extract_strided_slice %28 {offsets = [0, 112], sizes = [64, 8], strides = [1, 1]} : vector<64x128xf32> to vector<64x8xf32>
    %140 = vector.shape_cast %139 : vector<64x8xf32> to vector<8x8x8xf32>
    %141 = vector.extract_strided_slice %28 {offsets = [0, 120], sizes = [64, 8], strides = [1, 1]} : vector<64x128xf32> to vector<64x8xf32>
    %142 = vector.shape_cast %141 : vector<64x8xf32> to vector<8x8x8xf32>
    %143 = tpu.concatenate %128, %130 in 1 : vector<8x8x8xf32>, vector<8x8x8xf32> -> vector<8x16x8xf32>
    %144 = tpu.concatenate %132, %134, %136 in 1 : vector<8x8x8xf32>, vector<8x8x8xf32>, vector<8x8x8xf32> -> vector<8x24x8xf32>
    %145 = tpu.concatenate %138, %140, %142 in 1 : vector<8x8x8xf32>, vector<8x8x8xf32>, vector<8x8x8xf32> -> vector<8x24x8xf32>
    %146 = arith.truncf %143 : vector<8x16x8xf32> to vector<8x16x8xbf16>
    %147 = arith.truncf %144 : vector<8x24x8xf32> to vector<8x24x8xbf16>
    "tpu.trace_start"() <{level = 10 : i32, message = "bnd,bmd->bnm"}> : () -> ()
    %cst_32 = arith.constant dense<0.000000e+00> : vector<8x16x24xf32>
    %148 = tpu.matmul %146, %147, %cst_32 {dimension_numbers = #tpu.dot_dimension_numbers<[2], [2], [1], [1], [0, 0, 0, 1, 1, 1], [0], [0]>} : vector<8x16x8xbf16>, vector<8x24x8xbf16>, vector<8x16x24xf32> -> vector<8x16x24xf32>
    "tpu.trace_stop"() : () -> ()
    %149 = vector.extract_strided_slice %148 {offsets = [0, 0, 0], sizes = [8, 8, 24], strides = [1, 1, 1]} : vector<8x16x24xf32> to vector<8x8x24xf32>
    %150 = vector.extract_strided_slice %148 {offsets = [0, 8, 0], sizes = [8, 8, 24], strides = [1, 1, 1]} : vector<8x16x24xf32> to vector<8x8x24xf32>
    %c16_i32_33 = arith.constant 16 : i32
    %151 = vector.broadcast %c16_i32_33 : i32 to vector<1x1x24xi32>
    %152 = arith.cmpi slt, %29, %151 : vector<1x1x24xi32>
    %c24_i32_34 = arith.constant 24 : i32
    %153 = vector.broadcast %c24_i32_34 : i32 to vector<1x1x24xi32>
    %154 = arith.cmpi sge, %29, %153 : vector<1x1x24xi32>
    %155 = arith.ori %152, %154 : vector<1x1x24xi1>
    %cst_35 = arith.constant -1.000000e+30 : f32
    %156 = vector.shape_cast %155 : vector<1x1x24xi1> to vector<1x1x24xi1>
    %157 = vector.broadcast %156 : vector<1x1x24xi1> to vector<8x8x24xi1>
    %158 = vector.broadcast %cst_35 : f32 to vector<8x8x24xf32>
    %159 = arith.select %157, %149, %158 : vector<8x8x24xi1>, vector<8x8x24xf32>
    %cst_36 = arith.constant dense<0xFF800000> : vector<8x8xf32>
    %160 = vector.multi_reduction <maximumf>, %159, %cst_36 [2] : vector<8x8x24xf32> to vector<8x8xf32>
    %161 = vector.shape_cast %160 : vector<8x8xf32> to vector<8x8x1xf32>
    %162 = vector.broadcast %161 : vector<8x8x1xf32> to vector<8x8x24xf32>
    %163 = arith.subf %159, %162 : vector<8x8x24xf32>
    %164 = math.exp %163 : vector<8x8x24xf32>
    %cst_37 = arith.constant dense<0.000000e+00> : vector<8x8xf32>
    %165 = vector.multi_reduction <add>, %164, %cst_37 [2] : vector<8x8x24xf32> to vector<8x8xf32>
    %166 = vector.shape_cast %165 : vector<8x8xf32> to vector<8x8x1xf32>
    %c8_i32_38 = arith.constant 8 : i32
    %167 = vector.broadcast %c8_i32_38 : i32 to vector<1x1x24xi32>
    %168 = arith.cmpi slt, %29, %167 : vector<1x1x24xi32>
    %c16_i32_39 = arith.constant 16 : i32
    %169 = vector.broadcast %c16_i32_39 : i32 to vector<1x1x24xi32>
    %170 = arith.cmpi sge, %29, %169 : vector<1x1x24xi32>
    %171 = arith.ori %168, %170 : vector<1x1x24xi1>
    %cst_40 = arith.constant -1.000000e+30 : f32
    %172 = vector.shape_cast %171 : vector<1x1x24xi1> to vector<1x1x24xi1>
    %173 = vector.broadcast %172 : vector<1x1x24xi1> to vector<8x8x24xi1>
    %174 = vector.broadcast %cst_40 : f32 to vector<8x8x24xf32>
    %175 = arith.select %173, %150, %174 : vector<8x8x24xi1>, vector<8x8x24xf32>
    %cst_41 = arith.constant dense<0xFF800000> : vector<8x8xf32>
    %176 = vector.multi_reduction <maximumf>, %175, %cst_41 [2] : vector<8x8x24xf32> to vector<8x8xf32>
    %177 = vector.shape_cast %176 : vector<8x8xf32> to vector<8x8x1xf32>
    %178 = vector.broadcast %177 : vector<8x8x1xf32> to vector<8x8x24xf32>
    %179 = arith.subf %175, %178 : vector<8x8x24xf32>
    %180 = math.exp %179 : vector<8x8x24xf32>
    %cst_42 = arith.constant dense<0.000000e+00> : vector<8x8xf32>
    %181 = vector.multi_reduction <add>, %180, %cst_42 [2] : vector<8x8x24xf32> to vector<8x8xf32>
    %182 = vector.shape_cast %181 : vector<8x8xf32> to vector<8x8x1xf32>
    %c0_i32_43 = arith.constant 0 : i32
    %183 = vector.broadcast %c0_i32_43 : i32 to vector<1x1x24xi32>
    %184 = arith.cmpi slt, %29, %183 : vector<1x1x24xi32>
    %c8_i32_44 = arith.constant 8 : i32
    %185 = vector.broadcast %c8_i32_44 : i32 to vector<1x1x24xi32>
    %186 = arith.cmpi sge, %29, %185 : vector<1x1x24xi32>
    %187 = arith.ori %184, %186 : vector<1x1x24xi1>
    %cst_45 = arith.constant -1.000000e+30 : f32
    %188 = vector.shape_cast %187 : vector<1x1x24xi1> to vector<1x1x24xi1>
    %189 = vector.broadcast %188 : vector<1x1x24xi1> to vector<8x8x24xi1>
    %190 = vector.broadcast %cst_45 : f32 to vector<8x8x24xf32>
    %191 = arith.select %189, %150, %190 : vector<8x8x24xi1>, vector<8x8x24xf32>
    %cst_46 = arith.constant dense<0xFF800000> : vector<8x8xf32>
    %192 = vector.multi_reduction <maximumf>, %191, %cst_46 [2] : vector<8x8x24xf32> to vector<8x8xf32>
    %193 = vector.shape_cast %192 : vector<8x8xf32> to vector<8x8x1xf32>
    %194 = vector.broadcast %193 : vector<8x8x1xf32> to vector<8x8x24xf32>
    %195 = arith.subf %191, %194 : vector<8x8x24xf32>
    %196 = math.exp %195 : vector<8x8x24xf32>
    %cst_47 = arith.constant dense<0.000000e+00> : vector<8x8xf32>
    %197 = vector.multi_reduction <add>, %196, %cst_47 [2] : vector<8x8x24xf32> to vector<8x8xf32>
    %198 = vector.shape_cast %197 : vector<8x8xf32> to vector<8x8x1xf32>
    %199 = tpu.concatenate %164, %180, %196 in 1 : vector<8x8x24xf32>, vector<8x8x24xf32>, vector<8x8x24xf32> -> vector<8x24x24xf32>
    %200 = tpu.concatenate %166, %182, %198 in 1 : vector<8x8x1xf32>, vector<8x8x1xf32>, vector<8x8x1xf32> -> vector<8x24x1xf32>
    %201 = arith.truncf %199 : vector<8x24x24xf32> to vector<8x24x24xbf16>
    %202 = arith.truncf %145 : vector<8x24x8xf32> to vector<8x24x8xbf16>
    "tpu.trace_start"() <{level = 10 : i32, message = "bnm,bmd->bnd"}> : () -> ()
    %cst_48 = arith.constant dense<0.000000e+00> : vector<8x24x8xf32>
    %203 = tpu.matmul %201, %202, %cst_48 {dimension_numbers = #tpu.dot_dimension_numbers<[2], [1], [1], [2], [0, 0, 0, 1, 1, 2], [0], [0]>} : vector<8x24x24xbf16>, vector<8x24x8xbf16>, vector<8x24x8xf32> -> vector<8x24x8xf32>
    "tpu.trace_stop"() : () -> ()
    %204 = tpu.reciprocal %200 {approx = true} : vector<8x24x1xf32> -> vector<8x24x1xf32>
    %205 = vector.broadcast %204 : vector<8x24x1xf32> to vector<8x24x8xf32>
    %206 = arith.mulf %203, %205 : vector<8x24x8xf32>
    %207 = vector.extract_strided_slice %206 {offsets = [0, 0, 0], sizes = [8, 8, 8], strides = [1, 1, 1]} : vector<8x24x8xf32> to vector<8x8x8xf32>
    %208 = vector.shape_cast %207 : vector<8x8x8xf32> to vector<64x8xf32>
    %209 = arith.truncf %208 : vector<64x8xf32> to vector<64x8xbf16>
    %c8 = arith.constant 8 : index
    %c0_49 = arith.constant 0 : index
    %210 = vector.load %arg5[%c8, %c0_49] : memref<48x48xbf16, #tpu.memory_space<vmem>>, vector<8x48xbf16>
    %cst_50 = arith.constant dense<0.000000e+00> : vector<64x48xf32>
    %211 = tpu.matmul %209, %210, %cst_50 {dimension_numbers = #tpu.dot_dimension_numbers<[1], [0], [0], [1], [0, 0, 1, 1], [], []>} : vector<64x8xbf16>, vector<8x48xbf16>, vector<64x48xf32> -> vector<64x48xf32>
    %212 = arith.addf %126, %211 : vector<64x48xf32>
    %213 = vector.extract_strided_slice %206 {offsets = [0, 8, 0], sizes = [8, 8, 8], strides = [1, 1, 1]} : vector<8x24x8xf32> to vector<8x8x8xf32>
    %214 = vector.shape_cast %213 : vector<8x8x8xf32> to vector<64x8xf32>
    %215 = arith.truncf %214 : vector<64x8xf32> to vector<64x8xbf16>
    %c24 = arith.constant 24 : index
    %c0_51 = arith.constant 0 : index
    %216 = vector.load %arg5[%c24, %c0_51] : memref<48x48xbf16, #tpu.memory_space<vmem>>, vector<8x48xbf16>
    %cst_52 = arith.constant dense<0.000000e+00> : vector<64x48xf32>
    %217 = tpu.matmul %215, %216, %cst_52 {dimension_numbers = #tpu.dot_dimension_numbers<[1], [0], [0], [1], [0, 0, 1, 1], [], []>} : vector<64x8xbf16>, vector<8x48xbf16>, vector<64x48xf32> -> vector<64x48xf32>
    %218 = arith.addf %212, %217 : vector<64x48xf32>
    %219 = vector.extract_strided_slice %206 {offsets = [0, 16, 0], sizes = [8, 8, 8], strides = [1, 1, 1]} : vector<8x24x8xf32> to vector<8x8x8xf32>
    %220 = vector.shape_cast %219 : vector<8x8x8xf32> to vector<64x8xf32>
    %221 = arith.truncf %220 : vector<64x8xf32> to vector<64x8xbf16>
    %c40 = arith.constant 40 : index
    %c0_53 = arith.constant 0 : index
    %222 = vector.load %arg5[%c40, %c0_53] : memref<48x48xbf16, #tpu.memory_space<vmem>>, vector<8x48xbf16>
    %cst_54 = arith.constant dense<0.000000e+00> : vector<64x48xf32>
    %223 = tpu.matmul %221, %222, %cst_54 {dimension_numbers = #tpu.dot_dimension_numbers<[1], [0], [0], [1], [0, 0, 1, 1], [], []>} : vector<64x8xbf16>, vector<8x48xbf16>, vector<64x48xf32> -> vector<64x48xf32>
    %224 = arith.addf %218, %223 : vector<64x48xf32>
    %225 = arith.addf %1, %224 : vector<64x48xf32>
    %c0_55 = arith.constant 0 : index
    %c0_56 = arith.constant 0 : index
    %226 = vector.load %arg6[%c0_55, %c0_56] : memref<1x48xf32, #tpu.memory_space<vmem>>, vector<1x48xf32>
    %227 = vector.broadcast %226 : vector<1x48xf32> to vector<64x48xf32>
    %228 = arith.addf %225, %227 : vector<64x48xf32>
    %c0_57 = arith.constant 0 : index
    %c0_58 = arith.constant 0 : index
    %229 = vector.load %arg7[%c0_57, %c0_58] : memref<1x48xf32, #tpu.memory_space<vmem>>, vector<1x48xf32>
    %c0_59 = arith.constant 0 : index
    %c0_60 = arith.constant 0 : index
    %230 = vector.load %arg8[%c0_59, %c0_60] : memref<1x48xf32, #tpu.memory_space<vmem>>, vector<1x48xf32>
    %cst_61 = arith.constant dense<0.000000e+00> : vector<64xf32>
    %231 = vector.multi_reduction <add>, %228, %cst_61 [1] : vector<64x48xf32> to vector<64xf32>
    %232 = vector.shape_cast %231 : vector<64xf32> to vector<64x1xf32>
    %cst_62 = arith.constant 4.800000e+01 : f32
    %233 = vector.broadcast %cst_62 : f32 to vector<64x1xf32>
    %234 = arith.divf %232, %233 : vector<64x1xf32>
    %235 = vector.broadcast %234 : vector<64x1xf32> to vector<64x48xf32>
    %236 = arith.subf %228, %235 : vector<64x48xf32>
    %237 = arith.mulf %236, %236 : vector<64x48xf32>
    %cst_63 = arith.constant dense<0.000000e+00> : vector<64xf32>
    %238 = vector.multi_reduction <add>, %237, %cst_63 [1] : vector<64x48xf32> to vector<64xf32>
    %239 = vector.shape_cast %238 : vector<64xf32> to vector<64x1xf32>
    %cst_64 = arith.constant 4.800000e+01 : f32
    %240 = vector.broadcast %cst_64 : f32 to vector<64x1xf32>
    %241 = arith.divf %239, %240 : vector<64x1xf32>
    %242 = vector.broadcast %234 : vector<64x1xf32> to vector<64x48xf32>
    %243 = arith.subf %228, %242 : vector<64x48xf32>
    %cst_65 = arith.constant 9.99999974E-6 : f32
    %244 = vector.broadcast %cst_65 : f32 to vector<64x1xf32>
    %245 = arith.addf %241, %244 : vector<64x1xf32>
    %246 = math.rsqrt %245 : vector<64x1xf32>
    %247 = vector.broadcast %246 : vector<64x1xf32> to vector<64x48xf32>
    %248 = arith.mulf %243, %247 : vector<64x48xf32>
    %249 = vector.broadcast %229 : vector<1x48xf32> to vector<64x48xf32>
    %250 = arith.mulf %248, %249 : vector<64x48xf32>
    %251 = vector.broadcast %230 : vector<1x48xf32> to vector<64x48xf32>
    %252 = arith.addf %250, %251 : vector<64x48xf32>
    %253 = arith.truncf %252 : vector<64x48xf32> to vector<64x48xbf16>
    %c0_66 = arith.constant 0 : index
    %c0_67 = arith.constant 0 : index
    %254 = vector.load %arg9[%c0_66, %c0_67] : memref<48x64xbf16, #tpu.memory_space<vmem>>, vector<48x64xbf16>
    %cst_68 = arith.constant dense<0.000000e+00> : vector<64x64xf32>
    %255 = tpu.matmul %253, %254, %cst_68 {dimension_numbers = #tpu.dot_dimension_numbers<[1], [0], [0], [1], [0, 0, 1, 1], [], []>} : vector<64x48xbf16>, vector<48x64xbf16>, vector<64x64xf32> -> vector<64x64xf32>
    %c0_69 = arith.constant 0 : index
    %c0_70 = arith.constant 0 : index
    %256 = vector.load %arg10[%c0_69, %c0_70] : memref<1x64xf32, #tpu.memory_space<vmem>>, vector<1x64xf32>
    %257 = vector.broadcast %256 : vector<1x64xf32> to vector<64x64xf32>
    %258 = arith.addf %255, %257 : vector<64x64xf32>
    %cst_71 = arith.constant 5.000000e-01 : f32
    %259 = vector.broadcast %cst_71 : f32 to vector<64x64xf32>
    %260 = arith.mulf %259, %258 : vector<64x64xf32>
    %cst_72 = arith.constant 0.707106769 : f32
    %261 = vector.broadcast %cst_72 : f32 to vector<64x64xf32>
    %262 = arith.mulf %258, %261 : vector<64x64xf32>
    %263 = math.absf %262 : vector<64x64xf32>
    %cst_73 = arith.constant 0.327591091 : f32
    %264 = vector.broadcast %cst_73 : f32 to vector<64x64xf32>
    %265 = arith.mulf %264, %263 : vector<64x64xf32>
    %cst_74 = arith.constant 1.000000e+00 : f32
    %266 = vector.broadcast %cst_74 : f32 to vector<64x64xf32>
    %267 = arith.addf %266, %265 : vector<64x64xf32>
    %cst_75 = arith.constant 1.000000e+00 : f32
    %268 = vector.broadcast %cst_75 : f32 to vector<64x64xf32>
    %269 = arith.divf %268, %267 : vector<64x64xf32>
    %cst_76 = arith.constant 1.06140542 : f32
    %270 = vector.broadcast %cst_76 : f32 to vector<64x64xf32>
    %271 = arith.mulf %270, %269 : vector<64x64xf32>
    %cst_77 = arith.constant -1.45315206 : f32
    %272 = vector.broadcast %cst_77 : f32 to vector<64x64xf32>
    %273 = arith.addf %271, %272 : vector<64x64xf32>
    %274 = arith.mulf %273, %269 : vector<64x64xf32>
    %cst_78 = arith.constant 1.42141378 : f32
    %275 = vector.broadcast %cst_78 : f32 to vector<64x64xf32>
    %276 = arith.addf %274, %275 : vector<64x64xf32>
    %277 = arith.mulf %276, %269 : vector<64x64xf32>
    %cst_79 = arith.constant -0.284496725 : f32
    %278 = vector.broadcast %cst_79 : f32 to vector<64x64xf32>
    %279 = arith.addf %277, %278 : vector<64x64xf32>
    %280 = arith.mulf %279, %269 : vector<64x64xf32>
    %cst_80 = arith.constant 0.254829586 : f32
    %281 = vector.broadcast %cst_80 : f32 to vector<64x64xf32>
    %282 = arith.addf %280, %281 : vector<64x64xf32>
    %283 = arith.mulf %282, %269 : vector<64x64xf32>
    %cst_81 = arith.constant 0.000000e+00 : f32
    %284 = vector.broadcast %cst_81 : f32 to vector<64x64xf32>
    %285 = arith.subf %284, %263 : vector<64x64xf32>
    %286 = arith.mulf %285, %263 : vector<64x64xf32>
    %287 = math.exp %286 : vector<64x64xf32>
    %288 = arith.mulf %283, %287 : vector<64x64xf32>
    %cst_82 = arith.constant 1.000000e+00 : f32
    %289 = vector.broadcast %cst_82 : f32 to vector<64x64xf32>
    %290 = arith.subf %289, %288 : vector<64x64xf32>
    %cst_83 = arith.constant 0.000000e+00 : f32
    %291 = vector.broadcast %cst_83 : f32 to vector<64x64xf32>
    %292 = arith.cmpf oge, %262, %291 : vector<64x64xf32>
    %cst_84 = arith.constant 0.000000e+00 : f32
    %293 = vector.broadcast %cst_84 : f32 to vector<64x64xf32>
    %294 = arith.subf %293, %290 : vector<64x64xf32>
    %295 = arith.select %292, %290, %294 : vector<64x64xi1>, vector<64x64xf32>
    %cst_85 = arith.constant 1.000000e+00 : f32
    %296 = vector.broadcast %cst_85 : f32 to vector<64x64xf32>
    %297 = arith.addf %296, %295 : vector<64x64xf32>
    %298 = arith.mulf %260, %297 : vector<64x64xf32>
    %299 = arith.truncf %298 : vector<64x64xf32> to vector<64x64xbf16>
    %c0_86 = arith.constant 0 : index
    %c0_87 = arith.constant 0 : index
    %300 = vector.load %arg11[%c0_86, %c0_87] : memref<64x48xbf16, #tpu.memory_space<vmem>>, vector<64x48xbf16>
    %cst_88 = arith.constant dense<0.000000e+00> : vector<64x48xf32>
    %301 = tpu.matmul %299, %300, %cst_88 {dimension_numbers = #tpu.dot_dimension_numbers<[1], [0], [0], [1], [0, 0, 1, 1], [], []>} : vector<64x64xbf16>, vector<64x48xbf16>, vector<64x48xf32> -> vector<64x48xf32>
    %c0_89 = arith.constant 0 : index
    %c0_90 = arith.constant 0 : index
    %302 = vector.load %arg12[%c0_89, %c0_90] : memref<1x48xf32, #tpu.memory_space<vmem>>, vector<1x48xf32>
    %303 = vector.broadcast %302 : vector<1x48xf32> to vector<64x48xf32>
    %304 = arith.addf %301, %303 : vector<64x48xf32>
    %305 = arith.addf %228, %304 : vector<64x48xf32>
    %306 = vector.shape_cast %305 : vector<64x48xf32> to vector<8x384xf32>
    %c0_91 = arith.constant 0 : index
    %c0_92 = arith.constant 0 : index
    %307 = vector.load %arg13[%c0_91, %c0_92] : memref<8x384xf32, #tpu.memory_space<vmem>>, vector<8x384xf32>
    tpu.vector_store %arg13[%c0_91, %c0_92], %306 {strides = array<i32>} : memref<8x384xf32, #tpu.memory_space<vmem>>, vector<8x384xf32>,
    return
  }
  func.func @transform_0(%arg0: i32) -> (i32, i32) {
    %c0_i32 = arith.constant 0 : i32
    %c0_i32_0 = arith.constant 0 : i32
    return %arg0, %c0_i32 : i32, i32
  }
  func.func @transform_1(%arg0: i32) -> (i32, i32) {
    %c0_i32 = arith.constant 0 : i32
    %c0_i32_0 = arith.constant 0 : i32
    %c0_i32_1 = arith.constant 0 : i32
    return %c0_i32, %c0_i32_0 : i32, i32
  }
  func.func @transform_2(%arg0: i32) -> (i32, i32) {
    %c0_i32 = arith.constant 0 : i32
    %c0_i32_0 = arith.constant 0 : i32
    %c0_i32_1 = arith.constant 0 : i32
    return %c0_i32, %c0_i32_0 : i32, i32
  }
  func.func @transform_3(%arg0: i32) -> (i32, i32) {
    %c0_i32 = arith.constant 0 : i32
    %c0_i32_0 = arith.constant 0 : i32
    %c0_i32_1 = arith.constant 0 : i32
    return %c0_i32, %c0_i32_0 : i32, i32
  }
  func.func @transform_4(%arg0: i32) -> (i32, i32) {
    %c0_i32 = arith.constant 0 : i32
    %c0_i32_0 = arith.constant 0 : i32
    %c0_i32_1 = arith.constant 0 : i32
    return %c0_i32, %c0_i32_0 : i32, i32
  }
  func.func @transform_5(%arg0: i32) -> (i32, i32) {
    %c0_i32 = arith.constant 0 : i32
    %c0_i32_0 = arith.constant 0 : i32
    %c0_i32_1 = arith.constant 0 : i32
    return %c0_i32, %c0_i32_0 : i32, i32
  }
  func.func @transform_6(%arg0: i32) -> (i32, i32) {
    %c0_i32 = arith.constant 0 : i32
    %c0_i32_0 = arith.constant 0 : i32
    %c0_i32_1 = arith.constant 0 : i32
    return %c0_i32, %c0_i32_0 : i32, i32
  }
  func.func @transform_7(%arg0: i32) -> (i32, i32) {
    %c0_i32 = arith.constant 0 : i32
    %c0_i32_0 = arith.constant 0 : i32
    %c0_i32_1 = arith.constant 0 : i32
    return %c0_i32, %c0_i32_0 : i32, i32
  }
  func.func @transform_8(%arg0: i32) -> (i32, i32) {
    %c0_i32 = arith.constant 0 : i32
    %c0_i32_0 = arith.constant 0 : i32
    %c0_i32_1 = arith.constant 0 : i32
    return %c0_i32, %c0_i32_0 : i32, i32
  }
  func.func @transform_9(%arg0: i32) -> (i32, i32) {
    %c0_i32 = arith.constant 0 : i32
    %c0_i32_0 = arith.constant 0 : i32
    %c0_i32_1 = arith.constant 0 : i32
    return %c0_i32, %c0_i32_0 : i32, i32
  }
  func.func @transform_10(%arg0: i32) -> (i32, i32) {
    %c0_i32 = arith.constant 0 : i32
    %c0_i32_0 = arith.constant 0 : i32
    %c0_i32_1 = arith.constant 0 : i32
    return %c0_i32, %c0_i32_0 : i32, i32
  }
  func.func @transform_11(%arg0: i32) -> (i32, i32) {
    %c0_i32 = arith.constant 0 : i32
    %c0_i32_0 = arith.constant 0 : i32
    %c0_i32_1 = arith.constant 0 : i32
    return %c0_i32, %c0_i32_0 : i32, i32
  }
  func.func @transform_12(%arg0: i32) -> (i32, i32) {
    %c0_i32 = arith.constant 0 : i32
    %c0_i32_0 = arith.constant 0 : i32
    return %arg0, %c0_i32 : i32, i32
  }
}

module attributes {stable_mosaic.version = 11 : i64} {
  func.func @block_kernel(%arg0: i32, %arg1: memref<8x8x48xf32, #tpu.memory_space<vmem>>, %arg2: memref<1x48xf32, #tpu.memory_space<vmem>>, %arg3: memref<1x48xf32, #tpu.memory_space<vmem>>, %arg4: memref<48x128xbf16, #tpu.memory_space<vmem>>, %arg5: memref<48x48xbf16, #tpu.memory_space<vmem>>, %arg6: memref<1x48xf32, #tpu.memory_space<vmem>>, %arg7: memref<1x48xf32, #tpu.memory_space<vmem>>, %arg8: memref<1x48xf32, #tpu.memory_space<vmem>>, %arg9: memref<48x64xbf16, #tpu.memory_space<vmem>>, %arg10: memref<1x64xf32, #tpu.memory_space<vmem>>, %arg11: memref<64x48xbf16, #tpu.memory_space<vmem>>, %arg12: memref<1x48xf32, #tpu.memory_space<vmem>>, %arg13: memref<8x8x48xf32, #tpu.memory_space<vmem>>) attributes {dimension_semantics = [#tpu.dimension_semantics<parallel>], iteration_bounds = array<i64: 2>, scalar_prefetch = 0 : i64, scratch_operands = 0 : i64, tpu.core_type = #tpu.core_type<tc>, window_params = [{transform_indices = @transform_0, window_bounds = array<i64: 8, 8, 48>}, {pipeline_mode = #tpu.pipeline_mode<synchronous>, transform_indices = @transform_1, window_bounds = array<i64: 1, 48>}, {pipeline_mode = #tpu.pipeline_mode<synchronous>, transform_indices = @transform_2, window_bounds = array<i64: 1, 48>}, {pipeline_mode = #tpu.pipeline_mode<synchronous>, transform_indices = @transform_3, window_bounds = array<i64: 48, 128>}, {pipeline_mode = #tpu.pipeline_mode<synchronous>, transform_indices = @transform_4, window_bounds = array<i64: 48, 48>}, {pipeline_mode = #tpu.pipeline_mode<synchronous>, transform_indices = @transform_5, window_bounds = array<i64: 1, 48>}, {pipeline_mode = #tpu.pipeline_mode<synchronous>, transform_indices = @transform_6, window_bounds = array<i64: 1, 48>}, {pipeline_mode = #tpu.pipeline_mode<synchronous>, transform_indices = @transform_7, window_bounds = array<i64: 1, 48>}, {pipeline_mode = #tpu.pipeline_mode<synchronous>, transform_indices = @transform_8, window_bounds = array<i64: 48, 64>}, {pipeline_mode = #tpu.pipeline_mode<synchronous>, transform_indices = @transform_9, window_bounds = array<i64: 1, 64>}, {pipeline_mode = #tpu.pipeline_mode<synchronous>, transform_indices = @transform_10, window_bounds = array<i64: 64, 48>}, {pipeline_mode = #tpu.pipeline_mode<synchronous>, transform_indices = @transform_11, window_bounds = array<i64: 1, 48>}, {transform_indices = @transform_12, window_bounds = array<i64: 8, 8, 48>}]} {
    %c0 = arith.constant 0 : index
    %c0_0 = arith.constant 0 : index
    %c0_1 = arith.constant 0 : index
    %0 = vector.load %arg1[%c0, %c0_0, %c0_1] : memref<8x8x48xf32, #tpu.memory_space<vmem>>, vector<8x8x48xf32>
    %1 = vector.shape_cast %0 : vector<8x8x48xf32> to vector<64x48xf32>
    %c0_2 = arith.constant 0 : index
    %c0_3 = arith.constant 0 : index
    %2 = vector.load %arg2[%c0_2, %c0_3] : memref<1x48xf32, #tpu.memory_space<vmem>>, vector<1x48xf32>
    %c0_4 = arith.constant 0 : index
    %c0_5 = arith.constant 0 : index
    %3 = vector.load %arg3[%c0_4, %c0_5] : memref<1x48xf32, #tpu.memory_space<vmem>>, vector<1x48xf32>
    %cst = arith.constant dense<0.000000e+00> : vector<64xf32>
    %4 = vector.multi_reduction <add>, %1, %cst [1] : vector<64x48xf32> to vector<64xf32>
    %5 = vector.shape_cast %4 : vector<64xf32> to vector<64x1xf32>
    %cst_6 = arith.constant 4.800000e+01 : f32
    %6 = vector.broadcast %cst_6 : f32 to vector<64x1xf32>
    %7 = arith.divf %5, %6 : vector<64x1xf32>
    %8 = vector.broadcast %7 : vector<64x1xf32> to vector<64x48xf32>
    %9 = arith.subf %1, %8 : vector<64x48xf32>
    %10 = arith.mulf %9, %9 : vector<64x48xf32>
    %cst_7 = arith.constant dense<0.000000e+00> : vector<64xf32>
    %11 = vector.multi_reduction <add>, %10, %cst_7 [1] : vector<64x48xf32> to vector<64xf32>
    %12 = vector.shape_cast %11 : vector<64xf32> to vector<64x1xf32>
    %cst_8 = arith.constant 4.800000e+01 : f32
    %13 = vector.broadcast %cst_8 : f32 to vector<64x1xf32>
    %14 = arith.divf %12, %13 : vector<64x1xf32>
    %15 = vector.broadcast %7 : vector<64x1xf32> to vector<64x48xf32>
    %16 = arith.subf %1, %15 : vector<64x48xf32>
    %cst_9 = arith.constant 9.99999974E-6 : f32
    %17 = vector.broadcast %cst_9 : f32 to vector<64x1xf32>
    %18 = arith.addf %14, %17 : vector<64x1xf32>
    %19 = math.rsqrt %18 : vector<64x1xf32>
    %20 = vector.broadcast %19 : vector<64x1xf32> to vector<64x48xf32>
    %21 = arith.mulf %16, %20 : vector<64x48xf32>
    %22 = vector.broadcast %2 : vector<1x48xf32> to vector<64x48xf32>
    %23 = arith.mulf %21, %22 : vector<64x48xf32>
    %24 = vector.broadcast %3 : vector<1x48xf32> to vector<64x48xf32>
    %25 = arith.addf %23, %24 : vector<64x48xf32>
    %26 = arith.truncf %25 : vector<64x48xf32> to vector<64x48xbf16>
    %c0_10 = arith.constant 0 : index
    %c0_11 = arith.constant 0 : index
    %27 = vector.load %arg4[%c0_10, %c0_11] : memref<48x128xbf16, #tpu.memory_space<vmem>>, vector<48x128xbf16>
    %cst_12 = arith.constant dense<0.000000e+00> : vector<64x128xf32>
    %28 = tpu.matmul %26, %27, %cst_12 {dimension_numbers = #tpu.dot_dimension_numbers<[1], [0], [0], [1], [0, 0, 1, 1], [], []>} : vector<64x48xbf16>, vector<48x128xbf16>, vector<64x128xf32> -> vector<64x128xf32>
    %29 = tpu.iota {dimensions = array<i32: 2>} : vector<1x1x24xi32>
    %30 = vector.extract_strided_slice %28 {offsets = [0, 0], sizes = [64, 8], strides = [1, 1]} : vector<64x128xf32> to vector<64x8xf32>
    %31 = vector.shape_cast %30 : vector<64x8xf32> to vector<8x8x8xf32>
    %32 = vector.extract_strided_slice %28 {offsets = [0, 8], sizes = [64, 8], strides = [1, 1]} : vector<64x128xf32> to vector<64x8xf32>
    %33 = vector.shape_cast %32 : vector<64x8xf32> to vector<8x8x8xf32>
    %34 = vector.extract_strided_slice %28 {offsets = [0, 16], sizes = [64, 8], strides = [1, 1]} : vector<64x128xf32> to vector<64x8xf32>
    %35 = vector.shape_cast %34 : vector<64x8xf32> to vector<8x8x8xf32>
    %36 = vector.extract_strided_slice %28 {offsets = [0, 24], sizes = [64, 8], strides = [1, 1]} : vector<64x128xf32> to vector<64x8xf32>
    %37 = vector.shape_cast %36 : vector<64x8xf32> to vector<8x8x8xf32>
    %38 = vector.extract_strided_slice %28 {offsets = [0, 32], sizes = [64, 8], strides = [1, 1]} : vector<64x128xf32> to vector<64x8xf32>
    %39 = vector.shape_cast %38 : vector<64x8xf32> to vector<8x8x8xf32>
    %40 = vector.extract_strided_slice %28 {offsets = [0, 40], sizes = [64, 8], strides = [1, 1]} : vector<64x128xf32> to vector<64x8xf32>
    %41 = vector.shape_cast %40 : vector<64x8xf32> to vector<8x8x8xf32>
    %42 = vector.extract_strided_slice %28 {offsets = [0, 48], sizes = [64, 8], strides = [1, 1]} : vector<64x128xf32> to vector<64x8xf32>
    %43 = vector.shape_cast %42 : vector<64x8xf32> to vector<8x8x8xf32>
    %44 = vector.extract_strided_slice %28 {offsets = [0, 56], sizes = [64, 8], strides = [1, 1]} : vector<64x128xf32> to vector<64x8xf32>
    %45 = vector.shape_cast %44 : vector<64x8xf32> to vector<8x8x8xf32>
    %46 = tpu.concatenate %31, %33 in 1 : vector<8x8x8xf32>, vector<8x8x8xf32> -> vector<8x16x8xf32>
    %47 = tpu.concatenate %35, %37, %39 in 1 : vector<8x8x8xf32>, vector<8x8x8xf32>, vector<8x8x8xf32> -> vector<8x24x8xf32>
    %48 = tpu.concatenate %41, %43, %45 in 1 : vector<8x8x8xf32>, vector<8x8x8xf32>, vector<8x8x8xf32> -> vector<8x24x8xf32>
    %49 = arith.truncf %46 : vector<8x16x8xf32> to vector<8x16x8xbf16>
    %50 = arith.truncf %47 : vector<8x24x8xf32> to vector<8x24x8xbf16>
    "tpu.trace_start"() <{level = 10 : i32, message = "bnd,bmd->bnm"}> : () -> ()
    %cst_13 = arith.constant dense<0.000000e+00> : vector<8x16x24xf32>
    %51 = tpu.matmul %49, %50, %cst_13 {dimension_numbers = #tpu.dot_dimension_numbers<[2], [2], [1], [1], [0, 0, 0, 1, 1, 1], [0], [0]>} : vector<8x16x8xbf16>, vector<8x24x8xbf16>, vector<8x16x24xf32> -> vector<8x16x24xf32>
    "tpu.trace_stop"() : () -> ()
    %52 = vector.extract_strided_slice %51 {offsets = [0, 0, 0], sizes = [8, 8, 24], strides = [1, 1, 1]} : vector<8x16x24xf32> to vector<8x8x24xf32>
    %53 = vector.extract_strided_slice %51 {offsets = [0, 8, 0], sizes = [8, 8, 24], strides = [1, 1, 1]} : vector<8x16x24xf32> to vector<8x8x24xf32>
    %c16_i32 = arith.constant 16 : i32
    %54 = vector.broadcast %c16_i32 : i32 to vector<1x1x24xi32>
    %55 = arith.cmpi slt, %29, %54 : vector<1x1x24xi32>
    %c24_i32 = arith.constant 24 : i32
    %56 = vector.broadcast %c24_i32 : i32 to vector<1x1x24xi32>
    %57 = arith.cmpi sge, %29, %56 : vector<1x1x24xi32>
    %58 = arith.ori %55, %57 : vector<1x1x24xi1>
    %cst_14 = arith.constant -1.000000e+30 : f32
    %59 = vector.shape_cast %58 : vector<1x1x24xi1> to vector<1x1x24xi1>
    %60 = vector.broadcast %59 : vector<1x1x24xi1> to vector<8x8x24xi1>
    %61 = vector.broadcast %cst_14 : f32 to vector<8x8x24xf32>
    %62 = arith.select %60, %52, %61 : vector<8x8x24xi1>, vector<8x8x24xf32>
    %cst_15 = arith.constant dense<0xFF800000> : vector<8x8xf32>
    %63 = vector.multi_reduction <maximumf>, %62, %cst_15 [2] : vector<8x8x24xf32> to vector<8x8xf32>
    %64 = vector.shape_cast %63 : vector<8x8xf32> to vector<8x8x1xf32>
    %65 = vector.broadcast %64 : vector<8x8x1xf32> to vector<8x8x24xf32>
    %66 = arith.subf %62, %65 : vector<8x8x24xf32>
    %67 = math.exp %66 : vector<8x8x24xf32>
    %cst_16 = arith.constant dense<0.000000e+00> : vector<8x8xf32>
    %68 = vector.multi_reduction <add>, %67, %cst_16 [2] : vector<8x8x24xf32> to vector<8x8xf32>
    %69 = vector.shape_cast %68 : vector<8x8xf32> to vector<8x8x1xf32>
    %c8_i32 = arith.constant 8 : i32
    %70 = vector.broadcast %c8_i32 : i32 to vector<1x1x24xi32>
    %71 = arith.cmpi slt, %29, %70 : vector<1x1x24xi32>
    %c16_i32_17 = arith.constant 16 : i32
    %72 = vector.broadcast %c16_i32_17 : i32 to vector<1x1x24xi32>
    %73 = arith.cmpi sge, %29, %72 : vector<1x1x24xi32>
    %74 = arith.ori %71, %73 : vector<1x1x24xi1>
    %cst_18 = arith.constant -1.000000e+30 : f32
    %75 = vector.shape_cast %74 : vector<1x1x24xi1> to vector<1x1x24xi1>
    %76 = vector.broadcast %75 : vector<1x1x24xi1> to vector<8x8x24xi1>
    %77 = vector.broadcast %cst_18 : f32 to vector<8x8x24xf32>
    %78 = arith.select %76, %53, %77 : vector<8x8x24xi1>, vector<8x8x24xf32>
    %cst_19 = arith.constant dense<0xFF800000> : vector<8x8xf32>
    %79 = vector.multi_reduction <maximumf>, %78, %cst_19 [2] : vector<8x8x24xf32> to vector<8x8xf32>
    %80 = vector.shape_cast %79 : vector<8x8xf32> to vector<8x8x1xf32>
    %81 = vector.broadcast %80 : vector<8x8x1xf32> to vector<8x8x24xf32>
    %82 = arith.subf %78, %81 : vector<8x8x24xf32>
    %83 = math.exp %82 : vector<8x8x24xf32>
    %cst_20 = arith.constant dense<0.000000e+00> : vector<8x8xf32>
    %84 = vector.multi_reduction <add>, %83, %cst_20 [2] : vector<8x8x24xf32> to vector<8x8xf32>
    %85 = vector.shape_cast %84 : vector<8x8xf32> to vector<8x8x1xf32>
    %c0_i32 = arith.constant 0 : i32
    %86 = vector.broadcast %c0_i32 : i32 to vector<1x1x24xi32>
    %87 = arith.cmpi slt, %29, %86 : vector<1x1x24xi32>
    %c8_i32_21 = arith.constant 8 : i32
    %88 = vector.broadcast %c8_i32_21 : i32 to vector<1x1x24xi32>
    %89 = arith.cmpi sge, %29, %88 : vector<1x1x24xi32>
    %90 = arith.ori %87, %89 : vector<1x1x24xi1>
    %cst_22 = arith.constant -1.000000e+30 : f32
    %91 = vector.shape_cast %90 : vector<1x1x24xi1> to vector<1x1x24xi1>
    %92 = vector.broadcast %91 : vector<1x1x24xi1> to vector<8x8x24xi1>
    %93 = vector.broadcast %cst_22 : f32 to vector<8x8x24xf32>
    %94 = arith.select %92, %53, %93 : vector<8x8x24xi1>, vector<8x8x24xf32>
    %cst_23 = arith.constant dense<0xFF800000> : vector<8x8xf32>
    %95 = vector.multi_reduction <maximumf>, %94, %cst_23 [2] : vector<8x8x24xf32> to vector<8x8xf32>
    %96 = vector.shape_cast %95 : vector<8x8xf32> to vector<8x8x1xf32>
    %97 = vector.broadcast %96 : vector<8x8x1xf32> to vector<8x8x24xf32>
    %98 = arith.subf %94, %97 : vector<8x8x24xf32>
    %99 = math.exp %98 : vector<8x8x24xf32>
    %cst_24 = arith.constant dense<0.000000e+00> : vector<8x8xf32>
    %100 = vector.multi_reduction <add>, %99, %cst_24 [2] : vector<8x8x24xf32> to vector<8x8xf32>
    %101 = vector.shape_cast %100 : vector<8x8xf32> to vector<8x8x1xf32>
    %102 = tpu.concatenate %67, %83, %99 in 1 : vector<8x8x24xf32>, vector<8x8x24xf32>, vector<8x8x24xf32> -> vector<8x24x24xf32>
    %103 = tpu.concatenate %69, %85, %101 in 1 : vector<8x8x1xf32>, vector<8x8x1xf32>, vector<8x8x1xf32> -> vector<8x24x1xf32>
    %104 = arith.truncf %102 : vector<8x24x24xf32> to vector<8x24x24xbf16>
    %105 = arith.truncf %48 : vector<8x24x8xf32> to vector<8x24x8xbf16>
    "tpu.trace_start"() <{level = 10 : i32, message = "bnm,bmd->bnd"}> : () -> ()
    %cst_25 = arith.constant dense<0.000000e+00> : vector<8x24x8xf32>
    %106 = tpu.matmul %104, %105, %cst_25 {dimension_numbers = #tpu.dot_dimension_numbers<[2], [1], [1], [2], [0, 0, 0, 1, 1, 2], [0], [0]>} : vector<8x24x24xbf16>, vector<8x24x8xbf16>, vector<8x24x8xf32> -> vector<8x24x8xf32>
    "tpu.trace_stop"() : () -> ()
    %107 = tpu.reciprocal %103 {approx = true} : vector<8x24x1xf32> -> vector<8x24x1xf32>
    %108 = vector.broadcast %107 : vector<8x24x1xf32> to vector<8x24x8xf32>
    %109 = arith.mulf %106, %108 : vector<8x24x8xf32>
    %110 = vector.extract_strided_slice %109 {offsets = [0, 0, 0], sizes = [8, 8, 8], strides = [1, 1, 1]} : vector<8x24x8xf32> to vector<8x8x8xf32>
    %111 = vector.shape_cast %110 : vector<8x8x8xf32> to vector<64x8xf32>
    %112 = arith.truncf %111 : vector<64x8xf32> to vector<64x8xbf16>
    %c0_26 = arith.constant 0 : index
    %c0_27 = arith.constant 0 : index
    %113 = vector.load %arg5[%c0_26, %c0_27] : memref<48x48xbf16, #tpu.memory_space<vmem>>, vector<8x48xbf16>
    %cst_28 = arith.constant dense<0.000000e+00> : vector<64x48xf32>
    %114 = tpu.matmul %112, %113, %cst_28 {dimension_numbers = #tpu.dot_dimension_numbers<[1], [0], [0], [1], [0, 0, 1, 1], [], []>} : vector<64x8xbf16>, vector<8x48xbf16>, vector<64x48xf32> -> vector<64x48xf32>
    %115 = vector.extract_strided_slice %109 {offsets = [0, 8, 0], sizes = [8, 8, 8], strides = [1, 1, 1]} : vector<8x24x8xf32> to vector<8x8x8xf32>
    %116 = vector.shape_cast %115 : vector<8x8x8xf32> to vector<64x8xf32>
    %117 = arith.truncf %116 : vector<64x8xf32> to vector<64x8xbf16>
    %c16 = arith.constant 16 : index
    %c0_29 = arith.constant 0 : index
    %118 = vector.load %arg5[%c16, %c0_29] : memref<48x48xbf16, #tpu.memory_space<vmem>>, vector<8x48xbf16>
    %cst_30 = arith.constant dense<0.000000e+00> : vector<64x48xf32>
    %119 = tpu.matmul %117, %118, %cst_30 {dimension_numbers = #tpu.dot_dimension_numbers<[1], [0], [0], [1], [0, 0, 1, 1], [], []>} : vector<64x8xbf16>, vector<8x48xbf16>, vector<64x48xf32> -> vector<64x48xf32>
    %120 = arith.addf %114, %119 : vector<64x48xf32>
    %121 = vector.extract_strided_slice %109 {offsets = [0, 16, 0], sizes = [8, 8, 8], strides = [1, 1, 1]} : vector<8x24x8xf32> to vector<8x8x8xf32>
    %122 = vector.shape_cast %121 : vector<8x8x8xf32> to vector<64x8xf32>
    %123 = arith.truncf %122 : vector<64x8xf32> to vector<64x8xbf16>
    %c32 = arith.constant 32 : index
    %c0_31 = arith.constant 0 : index
    %124 = vector.load %arg5[%c32, %c0_31] : memref<48x48xbf16, #tpu.memory_space<vmem>>, vector<8x48xbf16>
    %cst_32 = arith.constant dense<0.000000e+00> : vector<64x48xf32>
    %125 = tpu.matmul %123, %124, %cst_32 {dimension_numbers = #tpu.dot_dimension_numbers<[1], [0], [0], [1], [0, 0, 1, 1], [], []>} : vector<64x8xbf16>, vector<8x48xbf16>, vector<64x48xf32> -> vector<64x48xf32>
    %126 = arith.addf %120, %125 : vector<64x48xf32>
    %127 = vector.extract_strided_slice %28 {offsets = [0, 64], sizes = [64, 8], strides = [1, 1]} : vector<64x128xf32> to vector<64x8xf32>
    %128 = vector.shape_cast %127 : vector<64x8xf32> to vector<8x8x8xf32>
    %129 = vector.extract_strided_slice %28 {offsets = [0, 72], sizes = [64, 8], strides = [1, 1]} : vector<64x128xf32> to vector<64x8xf32>
    %130 = vector.shape_cast %129 : vector<64x8xf32> to vector<8x8x8xf32>
    %131 = vector.extract_strided_slice %28 {offsets = [0, 80], sizes = [64, 8], strides = [1, 1]} : vector<64x128xf32> to vector<64x8xf32>
    %132 = vector.shape_cast %131 : vector<64x8xf32> to vector<8x8x8xf32>
    %133 = vector.extract_strided_slice %28 {offsets = [0, 88], sizes = [64, 8], strides = [1, 1]} : vector<64x128xf32> to vector<64x8xf32>
    %134 = vector.shape_cast %133 : vector<64x8xf32> to vector<8x8x8xf32>
    %135 = vector.extract_strided_slice %28 {offsets = [0, 96], sizes = [64, 8], strides = [1, 1]} : vector<64x128xf32> to vector<64x8xf32>
    %136 = vector.shape_cast %135 : vector<64x8xf32> to vector<8x8x8xf32>
    %137 = vector.extract_strided_slice %28 {offsets = [0, 104], sizes = [64, 8], strides = [1, 1]} : vector<64x128xf32> to vector<64x8xf32>
    %138 = vector.shape_cast %137 : vector<64x8xf32> to vector<8x8x8xf32>
    %139 = vector.extract_strided_slice %28 {offsets = [0, 112], sizes = [64, 8], strides = [1, 1]} : vector<64x128xf32> to vector<64x8xf32>
    %140 = vector.shape_cast %139 : vector<64x8xf32> to vector<8x8x8xf32>
    %141 = vector.extract_strided_slice %28 {offsets = [0, 120], sizes = [64, 8], strides = [1, 1]} : vector<64x128xf32> to vector<64x8xf32>
    %142 = vector.shape_cast %141 : vector<64x8xf32> to vector<8x8x8xf32>
    %143 = tpu.concatenate %128, %130 in 1 : vector<8x8x8xf32>, vector<8x8x8xf32> -> vector<8x16x8xf32>
    %144 = tpu.concatenate %132, %134, %136 in 1 : vector<8x8x8xf32>, vector<8x8x8xf32>, vector<8x8x8xf32> -> vector<8x24x8xf32>
    %145 = tpu.concatenate %138, %140, %142 in 1 : vector<8x8x8xf32>, vector<8x8x8xf32>, vector<8x8x8xf32> -> vector<8x24x8xf32>
    %146 = arith.truncf %143 : vector<8x16x8xf32> to vector<8x16x8xbf16>
    %147 = arith.truncf %144 : vector<8x24x8xf32> to vector<8x24x8xbf16>
    "tpu.trace_start"() <{level = 10 : i32, message = "bnd,bmd->bnm"}> : () -> ()
    %cst_33 = arith.constant dense<0.000000e+00> : vector<8x16x24xf32>
    %148 = tpu.matmul %146, %147, %cst_33 {dimension_numbers = #tpu.dot_dimension_numbers<[2], [2], [1], [1], [0, 0, 0, 1, 1, 1], [0], [0]>} : vector<8x16x8xbf16>, vector<8x24x8xbf16>, vector<8x16x24xf32> -> vector<8x16x24xf32>
    "tpu.trace_stop"() : () -> ()
    %149 = vector.extract_strided_slice %148 {offsets = [0, 0, 0], sizes = [8, 8, 24], strides = [1, 1, 1]} : vector<8x16x24xf32> to vector<8x8x24xf32>
    %150 = vector.extract_strided_slice %148 {offsets = [0, 8, 0], sizes = [8, 8, 24], strides = [1, 1, 1]} : vector<8x16x24xf32> to vector<8x8x24xf32>
    %c16_i32_34 = arith.constant 16 : i32
    %151 = vector.broadcast %c16_i32_34 : i32 to vector<1x1x24xi32>
    %152 = arith.cmpi slt, %29, %151 : vector<1x1x24xi32>
    %c24_i32_35 = arith.constant 24 : i32
    %153 = vector.broadcast %c24_i32_35 : i32 to vector<1x1x24xi32>
    %154 = arith.cmpi sge, %29, %153 : vector<1x1x24xi32>
    %155 = arith.ori %152, %154 : vector<1x1x24xi1>
    %cst_36 = arith.constant -1.000000e+30 : f32
    %156 = vector.shape_cast %155 : vector<1x1x24xi1> to vector<1x1x24xi1>
    %157 = vector.broadcast %156 : vector<1x1x24xi1> to vector<8x8x24xi1>
    %158 = vector.broadcast %cst_36 : f32 to vector<8x8x24xf32>
    %159 = arith.select %157, %149, %158 : vector<8x8x24xi1>, vector<8x8x24xf32>
    %cst_37 = arith.constant dense<0xFF800000> : vector<8x8xf32>
    %160 = vector.multi_reduction <maximumf>, %159, %cst_37 [2] : vector<8x8x24xf32> to vector<8x8xf32>
    %161 = vector.shape_cast %160 : vector<8x8xf32> to vector<8x8x1xf32>
    %162 = vector.broadcast %161 : vector<8x8x1xf32> to vector<8x8x24xf32>
    %163 = arith.subf %159, %162 : vector<8x8x24xf32>
    %164 = math.exp %163 : vector<8x8x24xf32>
    %cst_38 = arith.constant dense<0.000000e+00> : vector<8x8xf32>
    %165 = vector.multi_reduction <add>, %164, %cst_38 [2] : vector<8x8x24xf32> to vector<8x8xf32>
    %166 = vector.shape_cast %165 : vector<8x8xf32> to vector<8x8x1xf32>
    %c8_i32_39 = arith.constant 8 : i32
    %167 = vector.broadcast %c8_i32_39 : i32 to vector<1x1x24xi32>
    %168 = arith.cmpi slt, %29, %167 : vector<1x1x24xi32>
    %c16_i32_40 = arith.constant 16 : i32
    %169 = vector.broadcast %c16_i32_40 : i32 to vector<1x1x24xi32>
    %170 = arith.cmpi sge, %29, %169 : vector<1x1x24xi32>
    %171 = arith.ori %168, %170 : vector<1x1x24xi1>
    %cst_41 = arith.constant -1.000000e+30 : f32
    %172 = vector.shape_cast %171 : vector<1x1x24xi1> to vector<1x1x24xi1>
    %173 = vector.broadcast %172 : vector<1x1x24xi1> to vector<8x8x24xi1>
    %174 = vector.broadcast %cst_41 : f32 to vector<8x8x24xf32>
    %175 = arith.select %173, %150, %174 : vector<8x8x24xi1>, vector<8x8x24xf32>
    %cst_42 = arith.constant dense<0xFF800000> : vector<8x8xf32>
    %176 = vector.multi_reduction <maximumf>, %175, %cst_42 [2] : vector<8x8x24xf32> to vector<8x8xf32>
    %177 = vector.shape_cast %176 : vector<8x8xf32> to vector<8x8x1xf32>
    %178 = vector.broadcast %177 : vector<8x8x1xf32> to vector<8x8x24xf32>
    %179 = arith.subf %175, %178 : vector<8x8x24xf32>
    %180 = math.exp %179 : vector<8x8x24xf32>
    %cst_43 = arith.constant dense<0.000000e+00> : vector<8x8xf32>
    %181 = vector.multi_reduction <add>, %180, %cst_43 [2] : vector<8x8x24xf32> to vector<8x8xf32>
    %182 = vector.shape_cast %181 : vector<8x8xf32> to vector<8x8x1xf32>
    %c0_i32_44 = arith.constant 0 : i32
    %183 = vector.broadcast %c0_i32_44 : i32 to vector<1x1x24xi32>
    %184 = arith.cmpi slt, %29, %183 : vector<1x1x24xi32>
    %c8_i32_45 = arith.constant 8 : i32
    %185 = vector.broadcast %c8_i32_45 : i32 to vector<1x1x24xi32>
    %186 = arith.cmpi sge, %29, %185 : vector<1x1x24xi32>
    %187 = arith.ori %184, %186 : vector<1x1x24xi1>
    %cst_46 = arith.constant -1.000000e+30 : f32
    %188 = vector.shape_cast %187 : vector<1x1x24xi1> to vector<1x1x24xi1>
    %189 = vector.broadcast %188 : vector<1x1x24xi1> to vector<8x8x24xi1>
    %190 = vector.broadcast %cst_46 : f32 to vector<8x8x24xf32>
    %191 = arith.select %189, %150, %190 : vector<8x8x24xi1>, vector<8x8x24xf32>
    %cst_47 = arith.constant dense<0xFF800000> : vector<8x8xf32>
    %192 = vector.multi_reduction <maximumf>, %191, %cst_47 [2] : vector<8x8x24xf32> to vector<8x8xf32>
    %193 = vector.shape_cast %192 : vector<8x8xf32> to vector<8x8x1xf32>
    %194 = vector.broadcast %193 : vector<8x8x1xf32> to vector<8x8x24xf32>
    %195 = arith.subf %191, %194 : vector<8x8x24xf32>
    %196 = math.exp %195 : vector<8x8x24xf32>
    %cst_48 = arith.constant dense<0.000000e+00> : vector<8x8xf32>
    %197 = vector.multi_reduction <add>, %196, %cst_48 [2] : vector<8x8x24xf32> to vector<8x8xf32>
    %198 = vector.shape_cast %197 : vector<8x8xf32> to vector<8x8x1xf32>
    %199 = tpu.concatenate %164, %180, %196 in 1 : vector<8x8x24xf32>, vector<8x8x24xf32>, vector<8x8x24xf32> -> vector<8x24x24xf32>
    %200 = tpu.concatenate %166, %182, %198 in 1 : vector<8x8x1xf32>, vector<8x8x1xf32>, vector<8x8x1xf32> -> vector<8x24x1xf32>
    %201 = arith.truncf %199 : vector<8x24x24xf32> to vector<8x24x24xbf16>
    %202 = arith.truncf %145 : vector<8x24x8xf32> to vector<8x24x8xbf16>
    "tpu.trace_start"() <{level = 10 : i32, message = "bnm,bmd->bnd"}> : () -> ()
    %cst_49 = arith.constant dense<0.000000e+00> : vector<8x24x8xf32>
    %203 = tpu.matmul %201, %202, %cst_49 {dimension_numbers = #tpu.dot_dimension_numbers<[2], [1], [1], [2], [0, 0, 0, 1, 1, 2], [0], [0]>} : vector<8x24x24xbf16>, vector<8x24x8xbf16>, vector<8x24x8xf32> -> vector<8x24x8xf32>
    "tpu.trace_stop"() : () -> ()
    %204 = tpu.reciprocal %200 {approx = true} : vector<8x24x1xf32> -> vector<8x24x1xf32>
    %205 = vector.broadcast %204 : vector<8x24x1xf32> to vector<8x24x8xf32>
    %206 = arith.mulf %203, %205 : vector<8x24x8xf32>
    %207 = vector.extract_strided_slice %206 {offsets = [0, 0, 0], sizes = [8, 8, 8], strides = [1, 1, 1]} : vector<8x24x8xf32> to vector<8x8x8xf32>
    %208 = vector.shape_cast %207 : vector<8x8x8xf32> to vector<64x8xf32>
    %209 = arith.truncf %208 : vector<64x8xf32> to vector<64x8xbf16>
    %c8 = arith.constant 8 : index
    %c0_50 = arith.constant 0 : index
    %210 = vector.load %arg5[%c8, %c0_50] : memref<48x48xbf16, #tpu.memory_space<vmem>>, vector<8x48xbf16>
    %cst_51 = arith.constant dense<0.000000e+00> : vector<64x48xf32>
    %211 = tpu.matmul %209, %210, %cst_51 {dimension_numbers = #tpu.dot_dimension_numbers<[1], [0], [0], [1], [0, 0, 1, 1], [], []>} : vector<64x8xbf16>, vector<8x48xbf16>, vector<64x48xf32> -> vector<64x48xf32>
    %212 = arith.addf %126, %211 : vector<64x48xf32>
    %213 = vector.extract_strided_slice %206 {offsets = [0, 8, 0], sizes = [8, 8, 8], strides = [1, 1, 1]} : vector<8x24x8xf32> to vector<8x8x8xf32>
    %214 = vector.shape_cast %213 : vector<8x8x8xf32> to vector<64x8xf32>
    %215 = arith.truncf %214 : vector<64x8xf32> to vector<64x8xbf16>
    %c24 = arith.constant 24 : index
    %c0_52 = arith.constant 0 : index
    %216 = vector.load %arg5[%c24, %c0_52] : memref<48x48xbf16, #tpu.memory_space<vmem>>, vector<8x48xbf16>
    %cst_53 = arith.constant dense<0.000000e+00> : vector<64x48xf32>
    %217 = tpu.matmul %215, %216, %cst_53 {dimension_numbers = #tpu.dot_dimension_numbers<[1], [0], [0], [1], [0, 0, 1, 1], [], []>} : vector<64x8xbf16>, vector<8x48xbf16>, vector<64x48xf32> -> vector<64x48xf32>
    %218 = arith.addf %212, %217 : vector<64x48xf32>
    %219 = vector.extract_strided_slice %206 {offsets = [0, 16, 0], sizes = [8, 8, 8], strides = [1, 1, 1]} : vector<8x24x8xf32> to vector<8x8x8xf32>
    %220 = vector.shape_cast %219 : vector<8x8x8xf32> to vector<64x8xf32>
    %221 = arith.truncf %220 : vector<64x8xf32> to vector<64x8xbf16>
    %c40 = arith.constant 40 : index
    %c0_54 = arith.constant 0 : index
    %222 = vector.load %arg5[%c40, %c0_54] : memref<48x48xbf16, #tpu.memory_space<vmem>>, vector<8x48xbf16>
    %cst_55 = arith.constant dense<0.000000e+00> : vector<64x48xf32>
    %223 = tpu.matmul %221, %222, %cst_55 {dimension_numbers = #tpu.dot_dimension_numbers<[1], [0], [0], [1], [0, 0, 1, 1], [], []>} : vector<64x8xbf16>, vector<8x48xbf16>, vector<64x48xf32> -> vector<64x48xf32>
    %224 = arith.addf %218, %223 : vector<64x48xf32>
    %225 = arith.addf %1, %224 : vector<64x48xf32>
    %c0_56 = arith.constant 0 : index
    %c0_57 = arith.constant 0 : index
    %226 = vector.load %arg6[%c0_56, %c0_57] : memref<1x48xf32, #tpu.memory_space<vmem>>, vector<1x48xf32>
    %227 = vector.broadcast %226 : vector<1x48xf32> to vector<64x48xf32>
    %228 = arith.addf %225, %227 : vector<64x48xf32>
    %c0_58 = arith.constant 0 : index
    %c0_59 = arith.constant 0 : index
    %229 = vector.load %arg7[%c0_58, %c0_59] : memref<1x48xf32, #tpu.memory_space<vmem>>, vector<1x48xf32>
    %c0_60 = arith.constant 0 : index
    %c0_61 = arith.constant 0 : index
    %230 = vector.load %arg8[%c0_60, %c0_61] : memref<1x48xf32, #tpu.memory_space<vmem>>, vector<1x48xf32>
    %cst_62 = arith.constant dense<0.000000e+00> : vector<64xf32>
    %231 = vector.multi_reduction <add>, %228, %cst_62 [1] : vector<64x48xf32> to vector<64xf32>
    %232 = vector.shape_cast %231 : vector<64xf32> to vector<64x1xf32>
    %cst_63 = arith.constant 4.800000e+01 : f32
    %233 = vector.broadcast %cst_63 : f32 to vector<64x1xf32>
    %234 = arith.divf %232, %233 : vector<64x1xf32>
    %235 = vector.broadcast %234 : vector<64x1xf32> to vector<64x48xf32>
    %236 = arith.subf %228, %235 : vector<64x48xf32>
    %237 = arith.mulf %236, %236 : vector<64x48xf32>
    %cst_64 = arith.constant dense<0.000000e+00> : vector<64xf32>
    %238 = vector.multi_reduction <add>, %237, %cst_64 [1] : vector<64x48xf32> to vector<64xf32>
    %239 = vector.shape_cast %238 : vector<64xf32> to vector<64x1xf32>
    %cst_65 = arith.constant 4.800000e+01 : f32
    %240 = vector.broadcast %cst_65 : f32 to vector<64x1xf32>
    %241 = arith.divf %239, %240 : vector<64x1xf32>
    %242 = vector.broadcast %234 : vector<64x1xf32> to vector<64x48xf32>
    %243 = arith.subf %228, %242 : vector<64x48xf32>
    %cst_66 = arith.constant 9.99999974E-6 : f32
    %244 = vector.broadcast %cst_66 : f32 to vector<64x1xf32>
    %245 = arith.addf %241, %244 : vector<64x1xf32>
    %246 = math.rsqrt %245 : vector<64x1xf32>
    %247 = vector.broadcast %246 : vector<64x1xf32> to vector<64x48xf32>
    %248 = arith.mulf %243, %247 : vector<64x48xf32>
    %249 = vector.broadcast %229 : vector<1x48xf32> to vector<64x48xf32>
    %250 = arith.mulf %248, %249 : vector<64x48xf32>
    %251 = vector.broadcast %230 : vector<1x48xf32> to vector<64x48xf32>
    %252 = arith.addf %250, %251 : vector<64x48xf32>
    %253 = arith.truncf %252 : vector<64x48xf32> to vector<64x48xbf16>
    %c0_67 = arith.constant 0 : index
    %c0_68 = arith.constant 0 : index
    %254 = vector.load %arg9[%c0_67, %c0_68] : memref<48x64xbf16, #tpu.memory_space<vmem>>, vector<48x64xbf16>
    %cst_69 = arith.constant dense<0.000000e+00> : vector<64x64xf32>
    %255 = tpu.matmul %253, %254, %cst_69 {dimension_numbers = #tpu.dot_dimension_numbers<[1], [0], [0], [1], [0, 0, 1, 1], [], []>} : vector<64x48xbf16>, vector<48x64xbf16>, vector<64x64xf32> -> vector<64x64xf32>
    %c0_70 = arith.constant 0 : index
    %c0_71 = arith.constant 0 : index
    %256 = vector.load %arg10[%c0_70, %c0_71] : memref<1x64xf32, #tpu.memory_space<vmem>>, vector<1x64xf32>
    %257 = vector.broadcast %256 : vector<1x64xf32> to vector<64x64xf32>
    %258 = arith.addf %255, %257 : vector<64x64xf32>
    %cst_72 = arith.constant 5.000000e-01 : f32
    %259 = vector.broadcast %cst_72 : f32 to vector<64x64xf32>
    %260 = arith.mulf %259, %258 : vector<64x64xf32>
    %cst_73 = arith.constant 0.707106769 : f32
    %261 = vector.broadcast %cst_73 : f32 to vector<64x64xf32>
    %262 = arith.mulf %258, %261 : vector<64x64xf32>
    %263 = math.absf %262 : vector<64x64xf32>
    %cst_74 = arith.constant 0.327591091 : f32
    %264 = vector.broadcast %cst_74 : f32 to vector<64x64xf32>
    %265 = arith.mulf %264, %263 : vector<64x64xf32>
    %cst_75 = arith.constant 1.000000e+00 : f32
    %266 = vector.broadcast %cst_75 : f32 to vector<64x64xf32>
    %267 = arith.addf %266, %265 : vector<64x64xf32>
    %cst_76 = arith.constant 1.000000e+00 : f32
    %268 = vector.broadcast %cst_76 : f32 to vector<64x64xf32>
    %269 = arith.divf %268, %267 : vector<64x64xf32>
    %cst_77 = arith.constant 1.06140542 : f32
    %270 = vector.broadcast %cst_77 : f32 to vector<64x64xf32>
    %271 = arith.mulf %270, %269 : vector<64x64xf32>
    %cst_78 = arith.constant -1.45315206 : f32
    %272 = vector.broadcast %cst_78 : f32 to vector<64x64xf32>
    %273 = arith.addf %271, %272 : vector<64x64xf32>
    %274 = arith.mulf %273, %269 : vector<64x64xf32>
    %cst_79 = arith.constant 1.42141378 : f32
    %275 = vector.broadcast %cst_79 : f32 to vector<64x64xf32>
    %276 = arith.addf %274, %275 : vector<64x64xf32>
    %277 = arith.mulf %276, %269 : vector<64x64xf32>
    %cst_80 = arith.constant -0.284496725 : f32
    %278 = vector.broadcast %cst_80 : f32 to vector<64x64xf32>
    %279 = arith.addf %277, %278 : vector<64x64xf32>
    %280 = arith.mulf %279, %269 : vector<64x64xf32>
    %cst_81 = arith.constant 0.254829586 : f32
    %281 = vector.broadcast %cst_81 : f32 to vector<64x64xf32>
    %282 = arith.addf %280, %281 : vector<64x64xf32>
    %283 = arith.mulf %282, %269 : vector<64x64xf32>
    %cst_82 = arith.constant 0.000000e+00 : f32
    %284 = vector.broadcast %cst_82 : f32 to vector<64x64xf32>
    %285 = arith.subf %284, %263 : vector<64x64xf32>
    %286 = arith.mulf %285, %263 : vector<64x64xf32>
    %287 = math.exp %286 : vector<64x64xf32>
    %288 = arith.mulf %283, %287 : vector<64x64xf32>
    %cst_83 = arith.constant 1.000000e+00 : f32
    %289 = vector.broadcast %cst_83 : f32 to vector<64x64xf32>
    %290 = arith.subf %289, %288 : vector<64x64xf32>
    %cst_84 = arith.constant 0.000000e+00 : f32
    %291 = vector.broadcast %cst_84 : f32 to vector<64x64xf32>
    %292 = arith.cmpf oge, %262, %291 : vector<64x64xf32>
    %cst_85 = arith.constant 0.000000e+00 : f32
    %293 = vector.broadcast %cst_85 : f32 to vector<64x64xf32>
    %294 = arith.subf %293, %290 : vector<64x64xf32>
    %295 = arith.select %292, %290, %294 : vector<64x64xi1>, vector<64x64xf32>
    %cst_86 = arith.constant 1.000000e+00 : f32
    %296 = vector.broadcast %cst_86 : f32 to vector<64x64xf32>
    %297 = arith.addf %296, %295 : vector<64x64xf32>
    %298 = arith.mulf %260, %297 : vector<64x64xf32>
    %299 = arith.truncf %298 : vector<64x64xf32> to vector<64x64xbf16>
    %c0_87 = arith.constant 0 : index
    %c0_88 = arith.constant 0 : index
    %300 = vector.load %arg11[%c0_87, %c0_88] : memref<64x48xbf16, #tpu.memory_space<vmem>>, vector<64x48xbf16>
    %cst_89 = arith.constant dense<0.000000e+00> : vector<64x48xf32>
    %301 = tpu.matmul %299, %300, %cst_89 {dimension_numbers = #tpu.dot_dimension_numbers<[1], [0], [0], [1], [0, 0, 1, 1], [], []>} : vector<64x64xbf16>, vector<64x48xbf16>, vector<64x48xf32> -> vector<64x48xf32>
    %c0_90 = arith.constant 0 : index
    %c0_91 = arith.constant 0 : index
    %302 = vector.load %arg12[%c0_90, %c0_91] : memref<1x48xf32, #tpu.memory_space<vmem>>, vector<1x48xf32>
    %303 = vector.broadcast %302 : vector<1x48xf32> to vector<64x48xf32>
    %304 = arith.addf %301, %303 : vector<64x48xf32>
    %305 = arith.addf %228, %304 : vector<64x48xf32>
    %306 = vector.shape_cast %305 : vector<64x48xf32> to vector<8x8x48xf32>
    %c0_92 = arith.constant 0 : index
    %c0_93 = arith.constant 0 : index
    %c0_94 = arith.constant 0 : index
    %307 = vector.load %arg13[%c0_92, %c0_93, %c0_94] : memref<8x8x48xf32, #tpu.memory_space<vmem>>, vector<8x8x48xf32>
    tpu.vector_store %arg13[%c0_92, %c0_93, %c0_94], %306 {strides = array<i32>} : memref<8x8x48xf32, #tpu.memory_space<vmem>>, vector<8x8x48xf32>,
    return
  }
  func.func @transform_0(%arg0: i32) -> (i32, i32, i32) {
    %c0_i32 = arith.constant 0 : i32
    %c0_i32_0 = arith.constant 0 : i32
    %c0_i32_1 = arith.constant 0 : i32
    return %arg0, %c0_i32, %c0_i32_0 : i32, i32, i32
  }
  func.func @transform_1(%arg0: i32) -> (i32, i32) {
    %c0_i32 = arith.constant 0 : i32
    %c0_i32_0 = arith.constant 0 : i32
    %c0_i32_1 = arith.constant 0 : i32
    return %c0_i32, %c0_i32_0 : i32, i32
  }
  func.func @transform_2(%arg0: i32) -> (i32, i32) {
    %c0_i32 = arith.constant 0 : i32
    %c0_i32_0 = arith.constant 0 : i32
    %c0_i32_1 = arith.constant 0 : i32
    return %c0_i32, %c0_i32_0 : i32, i32
  }
  func.func @transform_3(%arg0: i32) -> (i32, i32) {
    %c0_i32 = arith.constant 0 : i32
    %c0_i32_0 = arith.constant 0 : i32
    %c0_i32_1 = arith.constant 0 : i32
    return %c0_i32, %c0_i32_0 : i32, i32
  }
  func.func @transform_4(%arg0: i32) -> (i32, i32) {
    %c0_i32 = arith.constant 0 : i32
    %c0_i32_0 = arith.constant 0 : i32
    %c0_i32_1 = arith.constant 0 : i32
    return %c0_i32, %c0_i32_0 : i32, i32
  }
  func.func @transform_5(%arg0: i32) -> (i32, i32) {
    %c0_i32 = arith.constant 0 : i32
    %c0_i32_0 = arith.constant 0 : i32
    %c0_i32_1 = arith.constant 0 : i32
    return %c0_i32, %c0_i32_0 : i32, i32
  }
  func.func @transform_6(%arg0: i32) -> (i32, i32) {
    %c0_i32 = arith.constant 0 : i32
    %c0_i32_0 = arith.constant 0 : i32
    %c0_i32_1 = arith.constant 0 : i32
    return %c0_i32, %c0_i32_0 : i32, i32
  }
  func.func @transform_7(%arg0: i32) -> (i32, i32) {
    %c0_i32 = arith.constant 0 : i32
    %c0_i32_0 = arith.constant 0 : i32
    %c0_i32_1 = arith.constant 0 : i32
    return %c0_i32, %c0_i32_0 : i32, i32
  }
  func.func @transform_8(%arg0: i32) -> (i32, i32) {
    %c0_i32 = arith.constant 0 : i32
    %c0_i32_0 = arith.constant 0 : i32
    %c0_i32_1 = arith.constant 0 : i32
    return %c0_i32, %c0_i32_0 : i32, i32
  }
  func.func @transform_9(%arg0: i32) -> (i32, i32) {
    %c0_i32 = arith.constant 0 : i32
    %c0_i32_0 = arith.constant 0 : i32
    %c0_i32_1 = arith.constant 0 : i32
    return %c0_i32, %c0_i32_0 : i32, i32
  }
  func.func @transform_10(%arg0: i32) -> (i32, i32) {
    %c0_i32 = arith.constant 0 : i32
    %c0_i32_0 = arith.constant 0 : i32
    %c0_i32_1 = arith.constant 0 : i32
    return %c0_i32, %c0_i32_0 : i32, i32
  }
  func.func @transform_11(%arg0: i32) -> (i32, i32) {
    %c0_i32 = arith.constant 0 : i32
    %c0_i32_0 = arith.constant 0 : i32
    %c0_i32_1 = arith.constant 0 : i32
    return %c0_i32, %c0_i32_0 : i32, i32
  }
  func.func @transform_12(%arg0: i32) -> (i32, i32, i32) {
    %c0_i32 = arith.constant 0 : i32
    %c0_i32_0 = arith.constant 0 : i32
    %c0_i32_1 = arith.constant 0 : i32
    return %arg0, %c0_i32, %c0_i32_0 : i32, i32, i32
  }
}

</mosaic_0001>

<llo_original>
// kernel: tpu_custom_call.1
$region0: #{tpu_custom_call.1}
  #allocation0 [shape = 'u32[]', space=smem, size = 0x4, offset = 0x4, fixed_abs, tag = 'smem constant byte address 0x4 - core index']
  #allocation1 [shape = 'u32[144,128]{1,0:T(1,128)}', space=vmem, size = 0x12000, scoped, tag = 'internal scratch']
  %s0 = inlined_call_operand.hbm [shape: f32[16,8,48], index: 0, kind: input, shape index: {}]
  %s1 = inlined_call_operand.vmem [shape: f32[1,48], index: 1, kind: input, shape index: {}]
  %s2 = inlined_call_operand.vmem [shape: f32[1,48], index: 2, kind: input, shape index: {}]
  %s3 = inlined_call_operand.vmem [shape: bf16[48,128], index: 3, kind: input, shape index: {}]
  %s4 = inlined_call_operand.vmem [shape: bf16[48,48], index: 4, kind: input, shape index: {}]
  %s5 = inlined_call_operand.vmem [shape: f32[1,48], index: 5, kind: input, shape index: {}]
  %s6 = inlined_call_operand.vmem [shape: f32[1,48], index: 6, kind: input, shape index: {}]
  %s7 = inlined_call_operand.vmem [shape: f32[1,48], index: 7, kind: input, shape index: {}]
  %s8 = inlined_call_operand.hbm [shape: bf16[48,64], index: 8, kind: input, shape index: {}]
  %s9 = inlined_call_operand.vmem [shape: f32[1,64], index: 9, kind: input, shape index: {}]
  %s10 = inlined_call_operand.vmem [shape: bf16[64,48], index: 10, kind: input, shape index: {}]
  %s11 = inlined_call_operand.vmem [shape: f32[1,48], index: 11, kind: input, shape index: {}]
  %s12 = inlined_call_operand.hbm [shape: f32[16,8,48], index: 12, kind: output, shape index: {}]
  %s13 = sld [smem:[#allocation0]]
  $region89: #{tpu_custom_call.1} parent=0
    _
  %s15 = ssub.s32 1, %s13
  %s16 = scalar_select 0, %s15, %s13
  $region1: #{tpu_custom_call.1} parent=0
    #allocation2 [shape = 'u8[65536]{0}', space=vmem, size = 0x10000, scoped, tag = 'input window, operand 0']
    #allocation3 [shape = 's32[2]{0}', space=sflag, size = 0x8, scoped, tag = 'scoped memory for tpu_custom_call.1']
    #allocation4 [shape = 's32[2]{0}', space=sflag, size = 0x8, scoped, tag = 'scoped memory for tpu_custom_call.1']
    #allocation5 [shape = 'u8[12288]{0}', space=vmem, size = 0x3000, scoped, tag = 'input window, operand 8, single buffered']
    #allocation6 [shape = 's32[1]{0}', space=sflag, size = 0x4, scoped, tag = 'scoped memory for tpu_custom_call.1']
    #allocation7 [shape = 'u8[65536]{0}', space=vmem, size = 0x10000, scoped, tag = 'output window, operand 0']
    %17 = vsyncpa [#allocation3], 0
    %s18 = scalar_lea.sflag [#allocation3], 1
    %19 = vsyncpa %s18, 0
    %20 = vsyncpa [#allocation6], 0
    %21 = vsyncpa [#allocation4], 0
    %s22 = scalar_lea.sflag [#allocation4], 1
    %23 = vsyncpa %s22, 0
    loop: start=0, step=1, limit=4
    $region2: #{tpu_custom_call.1} parent=1 // loop_pre_header
      _
    $region3: #{tpu_custom_call.1} parent=1 // loop_header
      %s25 = sphi 0, %s29
      %p26 = scmp.ge.s32.totalorder %s25, 4
      %s35 = sphi 0, %s37
      %s38 = sphi 0, %s35
      %s39 = sphi 0, %s38
      %s55 = sphi 0, %s39
      %s59 = sphi 0, %s59
      %s61 = sphi 0, %s59
      %s62 = sphi 0, %s61
      %s76 = sphi 0, %s62
      %s80 = sphi 0, %s80
      %s82 = sphi 0, %s80
      %s83 = sphi 0, %s82
      %s97 = sphi 0, %s83
      %s101 = sphi 0, %s101
      %s103 = sphi 0, %s101
      %s104 = sphi 0, %s103
      %s118 = sphi 0, %s104
      %s122 = sphi 0, %s122
      %s124 = sphi 0, %s122
      %s125 = sphi 0, %s124
      %s139 = sphi 0, %s125
      %s143 = sphi 0, %s143
      %s145 = sphi 0, %s143
      %s146 = sphi 0, %s145
      %s160 = sphi 0, %s146
      %s164 = sphi 0, %s164
      %s166 = sphi 0, %s164
      %s167 = sphi 0, %s166
      %s181 = sphi 0, %s167
      %s185 = sphi 0, %s185
      %s187 = sphi 0, %s185
      %s188 = sphi 0, %s187
      %s202 = sphi 0, %s188
      %s206 = sphi 0, %s206
      %s208 = sphi 0, %s206
      %s209 = sphi 0, %s208
      %s223 = sphi 0, %s209
      %s227 = sphi 0, %s227
      %s229 = sphi 0, %s227
      %s230 = sphi 0, %s229
      %s244 = sphi 0, %s230
      %s248 = sphi 0, %s248
      %s250 = sphi 0, %s248
      %s251 = sphi 0, %s250
      %s265 = sphi 0, %s251
      %s269 = sphi 0, %s269
      %s271 = sphi 0, %s269
      %s272 = sphi 0, %s271
      %s286 = sphi 0, %s272
      %s292 = sphi 0, %s294
      %s295 = sphi 0, %s292
      %s296 = sphi 0, %s295
      %s312 = sphi 0, %s296
    $region4: #{tpu_custom_call.1} parent=1 // loop_header_branch
      %28 = sbr.rel (%p26) target = $region8
    $region5: #{tpu_custom_call.1} parent=1 // loop_body
      %s30 = ssub.s32 %s25, 1
      %s31 = ssub.s32 %s25, 2
      %s32 = sadd.s32 %s25, 1
      %s33 = ssub.s32 %s25, %s32
      %p34 = scmp.eq.s32.totalorder %s33, 0
      %s36 = sadd.s32 %s35, 1
      %s37 = scalar_select %p34, %s35, %s36
      %p40 = pneg %p34
      %p41 = scmp.eq.s32.totalorder %s25, 1
      %p42 = por %p40, %p41
      %p43 = scmp.ne.s32.totalorder %s35, %s38
      %p44 = scmp.eq.s32.totalorder %s25, 0
      %p45 = por %p43, %p44
      %p46 = scmp.ne.s32.totalorder %s35, %s38
      %p47 = scmp.eq.s32.totalorder %s30, 1
      %p48 = por %p46, %p47
      %p49 = scmp.ne.s32.totalorder %s38, %s39
      %p50 = scmp.eq.s32.totalorder %s30, 0
      %p51 = por %p49, %p50
      %p52 = scmp.ne.s32.totalorder %s38, %s39
      %p53 = scmp.eq.s32.totalorder %s31, 1
      %p54 = por %p52, %p53
      %p56 = scmp.ne.s32.totalorder %s39, %s55
      %p57 = scmp.eq.s32.totalorder %s31, 0
      %p58 = por %p56, %p57
      %s60 = sadd.s32 %s59, 1
      %p63 = scmp.eq.s32.totalorder %s25, 1
      %p64 = scmp.ne.s32.totalorder %s59, %s61
      %p65 = scmp.eq.s32.totalorder %s25, 0
      %p66 = por %p64, %p65
      %p67 = scmp.ne.s32.totalorder %s59, %s61
      %p68 = scmp.eq.s32.totalorder %s30, 1
      %p69 = por %p67, %p68
      %p70 = scmp.ne.s32.totalorder %s61, %s62
      %p71 = scmp.eq.s32.totalorder %s30, 0
      %p72 = por %p70, %p71
      %p73 = scmp.ne.s32.totalorder %s61, %s62
      %p74 = scmp.eq.s32.totalorder %s31, 1
      %p75 = por %p73, %p74
      %p77 = scmp.ne.s32.totalorder %s62, %s76
      %p78 = scmp.eq.s32.totalorder %s31, 0
      %p79 = por %p77, %p78
      %s81 = sadd.s32 %s80, 1
      %p84 = scmp.eq.s32.totalorder %s25, 1
      %p85 = scmp.ne.s32.totalorder %s80, %s82
      %p86 = scmp.eq.s32.totalorder %s25, 0
      %p87 = por %p85, %p86
      %p88 = scmp.ne.s32.totalorder %s80, %s82
      %p89 = scmp.eq.s32.totalorder %s30, 1
      %p90 = por %p88, %p89
      %p91 = scmp.ne.s32.totalorder %s82, %s83
      %p92 = scmp.eq.s32.totalorder %s30, 0
      %p93 = por %p91, %p92
      %p94 = scmp.ne.s32.totalorder %s82, %s83
      %p95 = scmp.eq.s32.totalorder %s31, 1
      %p96 = por %p94, %p95
      %p98 = scmp.ne.s32.totalorder %s83, %s97
      %p99 = scmp.eq.s32.totalorder %s31, 0
      %p100 = por %p98, %p99
      %s102 = sadd.s32 %s101, 1
      %p105 = scmp.eq.s32.totalorder %s25, 1
      %p106 = scmp.ne.s32.totalorder %s101, %s103
      %p107 = scmp.eq.s32.totalorder %s25, 0
      %p108 = por %p106, %p107
      %p109 = scmp.ne.s32.totalorder %s101, %s103
      %p110 = scmp.eq.s32.totalorder %s30, 1
      %p111 = por %p109, %p110
      %p112 = scmp.ne.s32.totalorder %s103, %s104
      %p113 = scmp.eq.s32.totalorder %s30, 0
      %p114 = por %p112, %p113
      %p115 = scmp.ne.s32.totalorder %s103, %s104
      %p116 = scmp.eq.s32.totalorder %s31, 1
      %p117 = por %p115, %p116
      %p119 = scmp.ne.s32.totalorder %s104, %s118
      %p120 = scmp.eq.s32.totalorder %s31, 0
      %p121 = por %p119, %p120
      %s123 = sadd.s32 %s122, 1
      %p126 = scmp.eq.s32.totalorder %s25, 1
      %p127 = scmp.ne.s32.totalorder %s122, %s124
      %p128 = scmp.eq.s32.totalorder %s25, 0
      %p129 = por %p127, %p128
      %p130 = scmp.ne.s32.totalorder %s122, %s124
      %p131 = scmp.eq.s32.totalorder %s30, 1
      %p132 = por %p130, %p131
      %p133 = scmp.ne.s32.totalorder %s124, %s125
      %p134 = scmp.eq.s32.totalorder %s30, 0
      %p135 = por %p133, %p134
      %p136 = scmp.ne.s32.totalorder %s124, %s125
      %p137 = scmp.eq.s32.totalorder %s31, 1
      %p138 = por %p136, %p137
      %p140 = scmp.ne.s32.totalorder %s125, %s139
      %p141 = scmp.eq.s32.totalorder %s31, 0
      %p142 = por %p140, %p141
      %s144 = sadd.s32 %s143, 1
      %p147 = scmp.eq.s32.totalorder %s25, 1
      %p148 = scmp.ne.s32.totalorder %s143, %s145
      %p149 = scmp.eq.s32.totalorder %s25, 0
      %p150 = por %p148, %p149
      %p151 = scmp.ne.s32.totalorder %s143, %s145
      %p152 = scmp.eq.s32.totalorder %s30, 1
      %p153 = por %p151, %p152
      %p154 = scmp.ne.s32.totalorder %s145, %s146
      %p155 = scmp.eq.s32.totalorder %s30, 0
      %p156 = por %p154, %p155
      %p157 = scmp.ne.s32.totalorder %s145, %s146
      %p158 = scmp.eq.s32.totalorder %s31, 1
      %p159 = por %p157, %p158
      %p161 = scmp.ne.s32.totalorder %s146, %s160
      %p162 = scmp.eq.s32.totalorder %s31, 0
      %p163 = por %p161, %p162
      %s165 = sadd.s32 %s164, 1
      %p168 = scmp.eq.s32.totalorder %s25, 1
      %p169 = scmp.ne.s32.totalorder %s164, %s166
      %p170 = scmp.eq.s32.totalorder %s25, 0
      %p171 = por %p169, %p170
      %p172 = scmp.ne.s32.totalorder %s164, %s166
      %p173 = scmp.eq.s32.totalorder %s30, 1
      %p174 = por %p172, %p173
      %p175 = scmp.ne.s32.totalorder %s166, %s167
      %p176 = scmp.eq.s32.totalorder %s30, 0
      %p177 = por %p175, %p176
      %p178 = scmp.ne.s32.totalorder %s166, %s167
      %p179 = scmp.eq.s32.totalorder %s31, 1
      %p180 = por %p178, %p179
      %p182 = scmp.ne.s32.totalorder %s167, %s181
      %p183 = scmp.eq.s32.totalorder %s31, 0
      %p184 = por %p182, %p183
      %s186 = sadd.s32 %s185, 1
      %p189 = scmp.eq.s32.totalorder %s25, 1
      %p190 = scmp.ne.s32.totalorder %s185, %s187
      %p191 = scmp.eq.s32.totalorder %s25, 0
      %p192 = por %p190, %p191
      %p193 = scmp.ne.s32.totalorder %s185, %s187
      %p194 = scmp.eq.s32.totalorder %s30, 1
      %p195 = por %p193, %p194
      %p196 = scmp.ne.s32.totalorder %s187, %s188
      %p197 = scmp.eq.s32.totalorder %s30, 0
      %p198 = por %p196, %p197
      %p199 = scmp.ne.s32.totalorder %s187, %s188
      %p200 = scmp.eq.s32.totalorder %s31, 1
      %p201 = por %p199, %p200
      %p203 = scmp.ne.s32.totalorder %s188, %s202
      %p204 = scmp.eq.s32.totalorder %s31, 0
      %p205 = por %p203, %p204
      %s207 = sadd.s32 %s206, 1
      %p210 = scmp.eq.s32.totalorder %s25, 1
      %p211 = scmp.ne.s32.totalorder %s206, %s208
      %p212 = scmp.eq.s32.totalorder %s25, 0
      %p213 = por %p211, %p212
      %p214 = scmp.ne.s32.totalorder %s206, %s208
      %p215 = scmp.eq.s32.totalorder %s30, 1
      %p216 = por %p214, %p215
      %p217 = scmp.ne.s32.totalorder %s208, %s209
      %p218 = scmp.eq.s32.totalorder %s30, 0
      %p219 = por %p217, %p218
      %p220 = scmp.ne.s32.totalorder %s208, %s209
      %p221 = scmp.eq.s32.totalorder %s31, 1
      %p222 = por %p220, %p221
      %p224 = scmp.ne.s32.totalorder %s209, %s223
      %p225 = scmp.eq.s32.totalorder %s31, 0
      %p226 = por %p224, %p225
      %s228 = sadd.s32 %s227, 1
      %p231 = scmp.eq.s32.totalorder %s25, 1
      %p232 = scmp.ne.s32.totalorder %s227, %s229
      %p233 = scmp.eq.s32.totalorder %s25, 0
      %p234 = por %p232, %p233
      %p235 = scmp.ne.s32.totalorder %s227, %s229
      %p236 = scmp.eq.s32.totalorder %s30, 1
      %p237 = por %p235, %p236
      %p238 = scmp.ne.s32.totalorder %s229, %s230
      %p239 = scmp.eq.s32.totalorder %s30, 0
      %p240 = por %p238, %p239
      %p241 = scmp.ne.s32.totalorder %s229, %s230
      %p242 = scmp.eq.s32.totalorder %s31, 1
      %p243 = por %p241, %p242
      %p245 = scmp.ne.s32.totalorder %s230, %s244
      %p246 = scmp.eq.s32.totalorder %s31, 0
      %p247 = por %p245, %p246
      %s249 = sadd.s32 %s248, 1
      %p252 = scmp.eq.s32.totalorder %s25, 1
      %p253 = scmp.ne.s32.totalorder %s248, %s250
      %p254 = scmp.eq.s32.totalorder %s25, 0
      %p255 = por %p253, %p254
      %p256 = scmp.ne.s32.totalorder %s248, %s250
      %p257 = scmp.eq.s32.totalorder %s30, 1
      %p258 = por %p256, %p257
      %p259 = scmp.ne.s32.totalorder %s250, %s251
      %p260 = scmp.eq.s32.totalorder %s30, 0
      %p261 = por %p259, %p260
      %p262 = scmp.ne.s32.totalorder %s250, %s251
      %p263 = scmp.eq.s32.totalorder %s31, 1
      %p264 = por %p262, %p263
      %p266 = scmp.ne.s32.totalorder %s251, %s265
      %p267 = scmp.eq.s32.totalorder %s31, 0
      %p268 = por %p266, %p267
      %s270 = sadd.s32 %s269, 1
      %p273 = scmp.eq.s32.totalorder %s25, 1
      %p274 = scmp.ne.s32.totalorder %s269, %s271
      %p275 = scmp.eq.s32.totalorder %s25, 0
      %p276 = por %p274, %p275
      %p277 = scmp.ne.s32.totalorder %s269, %s271
      %p278 = scmp.eq.s32.totalorder %s30, 1
      %p279 = por %p277, %p278
      %p280 = scmp.ne.s32.totalorder %s271, %s272
      %p281 = scmp.eq.s32.totalorder %s30, 0
      %p282 = por %p280, %p281
      %p283 = scmp.ne.s32.totalorder %s271, %s272
      %p284 = scmp.eq.s32.totalorder %s31, 1
      %p285 = por %p283, %p284
      %p287 = scmp.ne.s32.totalorder %s272, %s286
      %p288 = scmp.eq.s32.totalorder %s31, 0
      %p289 = por %p287, %p288
      %s290 = ssub.s32 %s25, %s32
      %p291 = scmp.eq.s32.totalorder %s290, 0
      %s293 = sadd.s32 %s292, 1
      %s294 = scalar_select %p291, %s292, %s293
      %p297 = pneg %p291
      %p298 = scmp.eq.s32.totalorder %s25, 1
      %p299 = por %p297, %p298
      %p300 = scmp.ne.s32.totalorder %s292, %s295
      %p301 = scmp.eq.s32.totalorder %s25, 0
      %p302 = por %p300, %p301
      %p303 = scmp.ne.s32.totalorder %s292, %s295
      %p304 = scmp.eq.s32.totalorder %s30, 1
      %p305 = por %p303, %p304
      %p306 = scmp.ne.s32.totalorder %s295, %s296
      %p307 = scmp.eq.s32.totalorder %s30, 0
      %p308 = por %p306, %p307
      %p309 = scmp.ne.s32.totalorder %s295, %s296
      %p310 = scmp.eq.s32.totalorder %s31, 1
      %p311 = por %p309, %p310
      %p313 = scmp.ne.s32.totalorder %s296, %s312
      %p314 = scmp.eq.s32.totalorder %s31, 0
      %p315 = por %p313, %p314
      %p316 = scmp.le.s32.totalorder 1, %s25
      %p317 = scmp.lt.s32.totalorder %s25, 3
      %p318 = pnand %p316, %p317
      %p319 = pneg %p318
      // Predicated region
      $region9: #{tpu_custom_call.1} parent=5 // pred_check
        _
      $region10: #{tpu_custom_call.1} parent=5 // pred_check_branch
        %321 = sbr.rel (%p318) target = $region12
      $region11: #{tpu_custom_call.1} parent=5 // pred_region
        %s322 = ssub.s32 %s25, 1
        // Predicated region
        $region13: #{tpu_custom_call.1} parent=11 // pred_check
          %p323 = pneg %p72
        $region14: #{tpu_custom_call.1} parent=11 // pred_check_branch
          %325 = sbr.rel (%p323) target = $region16
        $region15: #{tpu_custom_call.1} parent=11 // pred_region
          _
        $region16: #{tpu_custom_call.1} parent=11 // pred_fallthru
          _
        // Predicated region
        $region17: #{tpu_custom_call.1} parent=11 // pred_check
          %p326 = pneg %p93
        $region18: #{tpu_custom_call.1} parent=11 // pred_check_branch
          %328 = sbr.rel (%p326) target = $region20
        $region19: #{tpu_custom_call.1} parent=11 // pred_region
          _
        $region20: #{tpu_custom_call.1} parent=11 // pred_fallthru
          _
        // Predicated region
        $region21: #{tpu_custom_call.1} parent=11 // pred_check
          %p329 = pneg %p114
        $region22: #{tpu_custom_call.1} parent=11 // pred_check_branch
          %331 = sbr.rel (%p329) target = $region24
        $region23: #{tpu_custom_call.1} parent=11 // pred_region
          _
        $region24: #{tpu_custom_call.1} parent=11 // pred_fallthru
          _
        // Predicated region
        $region25: #{tpu_custom_call.1} parent=11 // pred_check
          %p332 = pneg %p135
        $region26: #{tpu_custom_call.1} parent=11 // pred_check_branch
          %334 = sbr.rel (%p332) target = $region28
        $region27: #{tpu_custom_call.1} parent=11 // pred_region
          _
        $region28: #{tpu_custom_call.1} parent=11 // pred_fallthru
          _
        // Predicated region
        $region29: #{tpu_custom_call.1} parent=11 // pred_check
          %p335 = pneg %p156
        $region30: #{tpu_custom_call.1} parent=11 // pred_check_branch
          %337 = sbr.rel (%p335) target = $region32
        $region31: #{tpu_custom_call.1} parent=11 // pred_region
          _
        $region32: #{tpu_custom_call.1} parent=11 // pred_fallthru
          _
        // Predicated region
        $region33: #{tpu_custom_call.1} parent=11 // pred_check
          %p338 = pneg %p177
        $region34: #{tpu_custom_call.1} parent=11 // pred_check_branch
          %340 = sbr.rel (%p338) target = $region36
        $region35: #{tpu_custom_call.1} parent=11 // pred_region
          _
        $region36: #{tpu_custom_call.1} parent=11 // pred_fallthru
          _
        // Predicated region
        $region37: #{tpu_custom_call.1} parent=11 // pred_check
          %p341 = pneg %p198
        $region38: #{tpu_custom_call.1} parent=11 // pred_check_branch
          %343 = sbr.rel (%p341) target = $region40
        $region39: #{tpu_custom_call.1} parent=11 // pred_region
          _
        $region40: #{tpu_custom_call.1} parent=11 // pred_fallthru
          _
        // Predicated region
        $region41: #{tpu_custom_call.1} parent=11 // pred_check
          %p344 = pneg %p219
        $region42: #{tpu_custom_call.1} parent=11 // pred_check_branch
          %346 = sbr.rel (%p344) target = $region44
        $region43: #{tpu_custom_call.1} parent=11 // pred_region
          %s348 = ssub.s32 384, 384
          %349 = vsyncadd [#allocation6], %s348
          %s350 = sshll.u32 [#allocation5], 4
          %s351 = int_to_ptr.vmem [resolvable:$true] %s350
          %356 = dma.hbm_to_vmem [thread:$0]  %s8, 384, %s351, [#allocation6], 64, 64, 4
        $region44: #{tpu_custom_call.1} parent=11 // pred_fallthru
          _
        // Predicated region
        $region45: #{tpu_custom_call.1} parent=11 // pred_check
          %p357 = pneg %p240
        $region46: #{tpu_custom_call.1} parent=11 // pred_check_branch
          %359 = sbr.rel (%p357) target = $region48
        $region47: #{tpu_custom_call.1} parent=11 // pred_region
          _
        $region48: #{tpu_custom_call.1} parent=11 // pred_fallthru
          _
        // Predicated region
        $region49: #{tpu_custom_call.1} parent=11 // pred_check
          %p360 = pneg %p261
        $region50: #{tpu_custom_call.1} parent=11 // pred_check_branch
          %362 = sbr.rel (%p360) target = $region52
        $region51: #{tpu_custom_call.1} parent=11 // pred_region
          _
        $region52: #{tpu_custom_call.1} parent=11 // pred_fallthru
          _
        // Predicated region
        $region53: #{tpu_custom_call.1} parent=11 // pred_check
          %p363 = pneg %p282
        $region54: #{tpu_custom_call.1} parent=11 // pred_check_branch
          %365 = sbr.rel (%p363) target = $region56
        $region55: #{tpu_custom_call.1} parent=11 // pred_region
          _
        $region56: #{tpu_custom_call.1} parent=11 // pred_fallthru
          _
      $region12: #{tpu_custom_call.1} parent=5 // pred_fallthru
        _
      %p366 = scmp.lt.s32.totalorder %s25, 2
      // Predicated region
      $region57: #{tpu_custom_call.1} parent=5 // pred_check
        %p367 = pneg %p366
      $region58: #{tpu_custom_call.1} parent=5 // pred_check_branch
        %369 = sbr.rel (%p367) target = $region60
      $region59: #{tpu_custom_call.1} parent=5 // pred_region
        // Predicated region
        $region61: #{tpu_custom_call.1} parent=59 // pred_check
          %p370 = pneg %p45
        $region62: #{tpu_custom_call.1} parent=59 // pred_check_branch
          %372 = sbr.rel (%p370) target = $region64
        $region63: #{tpu_custom_call.1} parent=59 // pred_region
          %s373 = sand.u32 %s35, 1
          %s374 = scalar_lea.sflag [#allocation3], %s373
          %s375 = sand.u32 %s35, 1
          %s376 = smul.addr %s375, 64
          %s377 = scalar_lea.vmem [#allocation2], %s376
          %s378 = smul.u32 8, %s25
          %s380 = ssub.s32 1024, 1024
          %381 = vsyncadd %s374, %s380
          %s382 = smul.addr %s378, 128
          %s383 = scalar_lea.hbm %s0, %s382
          %s384 = sshll.u32 %s377, 4
          %s385 = int_to_ptr.vmem [resolvable:$true] %s384
          %390 = dma.hbm_to_vmem [thread:$0]  %s383, 1024, %s385, %s374, 128, 128, 8
        $region64: #{tpu_custom_call.1} parent=59 // pred_fallthru
          _
      $region60: #{tpu_custom_call.1} parent=5 // pred_fallthru
        _
      %p391 = scmp.le.s32.totalorder 1, %s25
      %p392 = scmp.lt.s32.totalorder %s25, 3
      %p393 = pnand %p391, %p392
      %p394 = pneg %p393
      // Predicated region
      $region65: #{tpu_custom_call.1} parent=5 // pred_check
        _
      $region66: #{tpu_custom_call.1} parent=5 // pred_check_branch
        %396 = sbr.rel (%p393) target = $region68
      $region67: #{tpu_custom_call.1} parent=5 // pred_region
        %s397 = ssub.s32 %s25, 1
        %s398 = sand.u32 %s38, 1
        %s399 = scalar_lea.sflag [#allocation3], %s398
        %s400 = sand.u32 %s38, 1
        %s401 = smul.addr %s400, 64
        %s402 = scalar_lea.vmem [#allocation2], %s401
        // Predicated region
        $region69: #{tpu_custom_call.1} parent=67 // pred_check
          %p403 = pneg %p51
        $region70: #{tpu_custom_call.1} parent=67 // pred_check_branch
          %405 = sbr.rel (%p403) target = $region72
        $region71: #{tpu_custom_call.1} parent=67 // pred_region
          %406 = dma.done %s399, 1024
        $region72: #{tpu_custom_call.1} parent=67 // pred_fallthru
          _
        // Predicated region
        $region73: #{tpu_custom_call.1} parent=67 // pred_check
          %p407 = pneg %p219
        $region74: #{tpu_custom_call.1} parent=67 // pred_check_branch
          %409 = sbr.rel (%p407) target = $region76
        $region75: #{tpu_custom_call.1} parent=67 // pred_region
          %410 = dma.done [#allocation6], 384
        $region76: #{tpu_custom_call.1} parent=67 // pred_fallthru
          _
        %s411 = sand.u32 %s38, 1
        %s412 = scalar_lea.sflag [#allocation3], %s411
        %s413 = sand.u32 %s38, 1
        %s414 = smul.addr %s413, 64
        %s415 = scalar_lea.vmem [#allocation2], %s414
        %p416 = pneg %p51
        %p417 = pneg %p48
        %p418 = pneg %p72
        %p419 = pneg %p69
        %p420 = pneg %p93
        %p421 = pneg %p90
        %p422 = pneg %p114
        %p423 = pneg %p111
        %p424 = pneg %p135
        %p425 = pneg %p132
        %p426 = pneg %p156
        %p427 = pneg %p153
        %p428 = pneg %p177
        %p429 = pneg %p174
        %p430 = pneg %p198
        %p431 = pneg %p195
        %p432 = pneg %p219
        %p433 = pneg %p216
        %p434 = pneg %p240
        %p435 = pneg %p237
        %p436 = pneg %p261
        %p437 = pneg %p258
        %p438 = pneg %p282
        %p439 = pneg %p279
        %p440 = pneg %p308
        %p441 = pneg %p305
        %s442 = sand.u32 %s295, 1
        %s443 = scalar_lea.sflag [#allocation4], %s442
        %s444 = sand.u32 %s295, 1
        %s445 = smul.addr %s444, 64
        %s446 = scalar_lea.vmem [#allocation7], %s445
        %s447 = smul.u32 8, %s30
        %s448 = smul.u32 8, %s30
        %v450 = vld [vmem:[%s402] sm:$0xff]
        %v451 = vld [vmem:[%s402 + $0x8] sm:$0xff]
        %v452 = vld [vmem:[%s402 + $0x10] sm:$0xff]
        %v453 = vld [vmem:[%s402 + $0x18] sm:$0xff]
        %v454 = vld [vmem:[%s402 + $0x20] sm:$0xff]
        %v455 = vld [vmem:[%s402 + $0x28] sm:$0xff]
        %v456 = vld [vmem:[%s402 + $0x30] sm:$0xff]
        %v457 = vld [vmem:[%s402 + $0x38] sm:$0xff]
        %v458 = vld [vmem:[%s1] sm:$0x1]
        %v459 = vld [vmem:[%s2] sm:$0x1]
        %vm460 = vcmask 392192
        %v461 = vsel %vm460, %v450, 0.0
        %462 = vadd.xlane.f32.xlu0 %v461
        %v463 = vpop.xlane.xlu0 %462
        %v464 = vsel %vm460, %v451, 0.0
        %465 = vadd.xlane.f32.xlu0 %v464
        %v466 = vpop.xlane.xlu0 %465
        %v467 = vsel %vm460, %v452, 0.0
        %468 = vadd.xlane.f32.xlu0 %v467
        %v469 = vpop.xlane.xlu0 %468
        %v470 = vsel %vm460, %v453, 0.0
        %471 = vadd.xlane.f32.xlu0 %v470
        %v472 = vpop.xlane.xlu0 %471
        %v473 = vsel %vm460, %v454, 0.0
        %474 = vadd.xlane.f32.xlu0 %v473
        %v475 = vpop.xlane.xlu0 %474
        %v476 = vsel %vm460, %v455, 0.0
        %477 = vadd.xlane.f32.xlu0 %v476
        %v478 = vpop.xlane.xlu0 %477
        %v479 = vsel %vm460, %v456, 0.0
        %480 = vadd.xlane.f32.xlu0 %v479
        %v481 = vpop.xlane.xlu0 %480
        %v482 = vsel %vm460, %v457, 0.0
        %483 = vadd.xlane.f32.xlu0 %v482
        %v484 = vpop.xlane.xlu0 %483
        %v485 = vrcp.pop 48.0
        %v486 = vmul.f32 %v463, %v485
        %v487 = vmul.f32 %v466, %v485
        %v488 = vmul.f32 %v469, %v485
        %v489 = vmul.f32 %v472, %v485
        %v490 = vmul.f32 %v475, %v485
        %v491 = vmul.f32 %v478, %v485
        %v492 = vmul.f32 %v481, %v485
        %v493 = vmul.f32 %v484, %v485
        %v494 = vsub.f32 %v450, %v486
        %v495 = vsub.f32 %v451, %v487
        %v496 = vsub.f32 %v452, %v488
        %v497 = vsub.f32 %v453, %v489
        %v498 = vsub.f32 %v454, %v490
        %v499 = vsub.f32 %v455, %v491
        %v500 = vsub.f32 %v456, %v492
        %v501 = vsub.f32 %v457, %v493
        %v502 = vmul.f32 %v494, %v494
        %v503 = vmul.f32 %v495, %v495
        %v504 = vmul.f32 %v496, %v496
        %v505 = vmul.f32 %v497, %v497
        %v506 = vmul.f32 %v498, %v498
        %v507 = vmul.f32 %v499, %v499
        %v508 = vmul.f32 %v500, %v500
        %v509 = vmul.f32 %v501, %v501
        %v510 = vsel %vm460, %v502, 0.0
        %511 = vadd.xlane.f32.xlu0 %v510
        %v512 = vpop.xlane.xlu0 %511
        %v513 = vsel %vm460, %v503, 0.0
        %514 = vadd.xlane.f32.xlu0 %v513
        %v515 = vpop.xlane.xlu0 %514
        %v516 = vsel %vm460, %v504, 0.0
        %517 = vadd.xlane.f32.xlu0 %v516
        %v518 = vpop.xlane.xlu0 %517
        %v519 = vsel %vm460, %v505, 0.0
        %520 = vadd.xlane.f32.xlu0 %v519
        %v521 = vpop.xlane.xlu0 %520
        %v522 = vsel %vm460, %v506, 0.0
        %523 = vadd.xlane.f32.xlu0 %v522
        %v524 = vpop.xlane.xlu0 %523
        %v525 = vsel %vm460, %v507, 0.0
        %526 = vadd.xlane.f32.xlu0 %v525
        %v527 = vpop.xlane.xlu0 %526
        %v528 = vsel %vm460, %v508, 0.0
        %529 = vadd.xlane.f32.xlu0 %v528
        %v530 = vpop.xlane.xlu0 %529
        %v531 = vsel %vm460, %v509, 0.0
        %532 = vadd.xlane.f32.xlu0 %v531
        %v533 = vpop.xlane.xlu0 %532
        %v534 = vmul.f32 %v512, %v485
        %v535 = vmul.f32 %v515, %v485
        %v536 = vmul.f32 %v518, %v485
        %v537 = vmul.f32 %v521, %v485
        %v538 = vmul.f32 %v524, %v485
        %v539 = vmul.f32 %v527, %v485
        %v540 = vmul.f32 %v530, %v485
        %v541 = vmul.f32 %v533, %v485
        %v542 = vadd.f32 %v534, 1e-05
        %v543 = vadd.f32 %v535, 1e-05
        %v544 = vadd.f32 %v536, 1e-05
        %v545 = vadd.f32 %v537, 1e-05
        %v546 = vadd.f32 %v538, 1e-05
        %v547 = vadd.f32 %v539, 1e-05
        %v548 = vadd.f32 %v540, 1e-05
        %v549 = vadd.f32 %v541, 1e-05
        %v550 = vrsqrt.pop %v542
        %v551 = vrsqrt.pop %v543
        %v552 = vrsqrt.pop %v544
        %v553 = vrsqrt.pop %v545
        %v554 = vrsqrt.pop %v546
        %v555 = vrsqrt.pop %v547
        %v556 = vrsqrt.pop %v548
        %v557 = vrsqrt.pop %v549
        %v558 = vmul.f32 %v494, %v550
        %v559 = vmul.f32 %v495, %v551
        %v560 = vmul.f32 %v496, %v552
        %v561 = vmul.f32 %v497, %v553
        %v562 = vmul.f32 %v498, %v554
        %v563 = vmul.f32 %v499, %v555
        %v564 = vmul.f32 %v500, %v556
        %v565 = vmul.f32 %v501, %v557
        %v567 = vlaneseq
        %v568 = vshrl.u32 %v567, 7
        %v569 = vsub.s32 0, %v568
        %v570 = vrot.slane %v458, %v569
        %v572 = vmul.f32 %v558, %v570
        %v573 = vmul.f32 %v559, %v570
        %v574 = vmul.f32 %v560, %v570
        %v575 = vmul.f32 %v561, %v570
        %v576 = vmul.f32 %v562, %v570
        %v577 = vmul.f32 %v563, %v570
        %v578 = vmul.f32 %v564, %v570
        %v579 = vmul.f32 %v565, %v570
        %v581 = vlaneseq
        %v582 = vshrl.u32 %v581, 7
        %v583 = vsub.s32 0, %v582
        %v584 = vrot.slane %v459, %v583
        %v586 = vadd.f32 %v572, %v584
        %v587 = vadd.f32 %v573, %v584
        %v588 = vadd.f32 %v574, %v584
        %v589 = vadd.f32 %v575, %v584
        %v590 = vadd.f32 %v576, %v584
        %v591 = vadd.f32 %v577, %v584
        %v592 = vadd.f32 %v578, %v584
        %v593 = vadd.f32 %v579, %v584
        %v594 = vpack.c.bf16 %v587, %v586
        %v595 = vpack.c.bf16 %v589, %v588
        %v596 = vpack.c.bf16 %v591, %v590
        %v597 = vpack.c.bf16 %v593, %v592
        %v598 = vld [vmem:[%s3] sm:$0xf]
        %v599 = vld [vmem:[%s3 + $0x4] sm:$0xf]
        %v600 = vld [vmem:[%s3 + $0x8] sm:$0xf]
        %v601 = vld [vmem:[%s3 + $0xc] sm:$0xf]
        %v602 = vld [vmem:[%s3 + $0x10] sm:$0xf]
        %v603 = vld [vmem:[%s3 + $0x14] sm:$0xf]
        %v610 = vunpack.c.l.b16 %v598
        %v611 = vunpack.c.l.b16 %v599
        %v612 = vunpack.c.l.b16 %v600
        %v613 = vunpack.c.l.b16 %v601
        %v614 = vunpack.c.l.b16 %v602
        %v615 = vunpack.c.l.b16 %v603
        %v616 = vpack.c.b16 %v611, %v610
        %v617 = vpack.c.b16 %v613, %v612
        %v618 = vpack.c.b16 %v615, %v614
        %v623 = vsel %vm460, %v594, 0
        %v626 = vsel %vm460, %v595, 0
        %v629 = vsel %vm460, %v596, 0
        %v632 = vsel %vm460, %v597, 0
        %634 = vmatprep.subr.bf16.mxu0 0
        %635 = vmatpush1.bf16.msra.mxu0 0
        %636 = vmatprep.subr.bf16.mxu0 0
        %637 = vmatpush1.bf16.msra.mxu0 0
        %638 = vmatprep.subr.bf16.mxu0 0
        %639 = vmatpush1.bf16.msra.mxu0 0
        %640 = vmatprep.subr.bf16.mxu0 0
        %641 = vmatpush1.bf16.msra.mxu0 0
        %642 = vmatprep.subr.bf16.mxu0 0
        %643 = vmatpush1.bf16.msra.mxu0 0
        %644 = vmatprep.subr.bf16.mxu0 0
        %645 = vmatpush1.bf16.msra.mxu0 %v618
        %646 = vmatprep.subr.bf16.mxu0 0
        %647 = vmatpush1.bf16.msra.mxu0 %v617
        %648 = vmatprep.subr.bf16.mxu0 0
        %649 = vmatpush1.bf16.msra.mxu0 %v616
        %650 = vmatprep.subr.bf16.mxu0 0
        %651 = vmatpush2.bf16.msra.mxu0 0
        %652 = vmatprep.subr.bf16.mxu0 0
        %653 = vmatpush2.bf16.msra.mxu0 0
        %654 = vmatprep.subr.bf16.mxu0 0
        %655 = vmatpush2.bf16.msra.mxu0 0
        %656 = vmatprep.subr.bf16.mxu0 0
        %657 = vmatpush2.bf16.msra.mxu0 0
        %658 = vmatprep.subr.bf16.mxu0 0
        %659 = vmatpush2.bf16.msra.mxu0 0
        %660 = vmatprep.subr.bf16.mxu0 0
        %661 = vmatpush2.bf16.msra.mxu0 0
        %662 = vmatprep.subr.bf16.mxu0 0
        %663 = vmatpush2.bf16.msra.mxu0 0
        %664 = vmatprep.subr.bf16.mxu0 0
        %665 = vmatpush2.bf16.msra.mxu0 0
        %666 = vmatprep.mubr.bf16.mxu0 0
        %667 = vmatmul.mubr.bf16.gmra.mxu0 %v623
        %v668 = vpop.f32.mrf.mxu0
        %v669 = vadd.f32 0.0, %v668
        %v670 = vpop.f32.mrf.mxu0
        %v671 = vpop.f32.mrf.mxu0
        %v672 = vadd.f32 0.0, %v671
        %v673 = vpop.f32.mrf.mxu0
        %674 = vmatprep.mubr.bf16.mxu0 0
        %675 = vmatmul.mubr.bf16.gmra.mxu0 %v626
        %v676 = vpop.f32.mrf.mxu0
        %v677 = vadd.f32 0.0, %v676
        %v678 = vpop.f32.mrf.mxu0
        %v679 = vpop.f32.mrf.mxu0
        %v680 = vadd.f32 0.0, %v679
        %v681 = vpop.f32.mrf.mxu0
        %682 = vmatprep.mubr.bf16.mxu0 0
        %683 = vmatmul.mubr.bf16.gmra.mxu0 %v629
        %v684 = vpop.f32.mrf.mxu0
        %v685 = vadd.f32 0.0, %v684
        %v686 = vpop.f32.mrf.mxu0
        %v687 = vpop.f32.mrf.mxu0
        %v688 = vadd.f32 0.0, %v687
        %v689 = vpop.f32.mrf.mxu0
        %690 = vmatprep.mubr.bf16.mxu0 0
        %691 = vmatmul.mubr.bf16.gmra.mxu0 %v632
        %v692 = vpop.f32.mrf.mxu0
        %v693 = vadd.f32 0.0, %v692
        %v694 = vpop.f32.mrf.mxu0
        %v695 = vpop.f32.mrf.mxu0
        %v696 = vadd.f32 0.0, %v695
        %v697 = vpop.f32.mrf.mxu0
        %698 = vdwg.mxu0
        %v699 = vlaneseq
        %v700 = vand.u32 %v699, 127
        %709 = vrot.lane.b32.xlu0 %v669, 120
        %v710 = vpop.permute.xlu0 %709
        %711 = vrot.lane.b32.xlu0 %v672, 120
        %v712 = vpop.permute.xlu0 %711
        %713 = vrot.lane.b32.xlu0 %v677, 120
        %v714 = vpop.permute.xlu0 %713
        %715 = vrot.lane.b32.xlu0 %v680, 120
        %v716 = vpop.permute.xlu0 %715
        %717 = vrot.lane.b32.xlu0 %v685, 120
        %v718 = vpop.permute.xlu0 %717
        %719 = vrot.lane.b32.xlu0 %v688, 120
        %v720 = vpop.permute.xlu0 %719
        %721 = vrot.lane.b32.xlu0 %v693, 120
        %v722 = vpop.permute.xlu0 %721
        %723 = vrot.lane.b32.xlu0 %v696, 120
        %v724 = vpop.permute.xlu0 %723
        %733 = vrot.lane.b32.xlu0 %v669, 112
        %v734 = vpop.permute.xlu0 %733
        %735 = vrot.lane.b32.xlu0 %v672, 112
        %v736 = vpop.permute.xlu0 %735
        %737 = vrot.lane.b32.xlu0 %v677, 112
        %v738 = vpop.permute.xlu0 %737
        %739 = vrot.lane.b32.xlu0 %v680, 112
        %v740 = vpop.permute.xlu0 %739
        %741 = vrot.lane.b32.xlu0 %v685, 112
        %v742 = vpop.permute.xlu0 %741
        %743 = vrot.lane.b32.xlu0 %v688, 112
        %v744 = vpop.permute.xlu0 %743
        %745 = vrot.lane.b32.xlu0 %v693, 112
        %v746 = vpop.permute.xlu0 %745
        %747 = vrot.lane.b32.xlu0 %v696, 112
        %v748 = vpop.permute.xlu0 %747
        %v757 = vpack.c.bf16 %v710, %v669
        %v758 = vpack.c.bf16 %v712, %v672
        %v759 = vpack.c.bf16 %v714, %v677
        %v760 = vpack.c.bf16 %v716, %v680
        %v761 = vpack.c.bf16 %v718, %v685
        %v762 = vpack.c.bf16 %v720, %v688
        %v763 = vpack.c.bf16 %v722, %v693
        %v764 = vpack.c.bf16 %v724, %v696
        %v765 = vpack.c.bf16 %v734, %v734
        %v766 = vpack.c.bf16 %v736, %v736
        %v767 = vpack.c.bf16 %v738, %v738
        %v768 = vpack.c.bf16 %v740, %v740
        %v769 = vpack.c.bf16 %v742, %v742
        %v770 = vpack.c.bf16 %v744, %v744
        %v771 = vpack.c.bf16 %v746, %v746
        %v772 = vpack.c.bf16 %v748, %v748
        %775 = vrot.lane.b32.xlu0 %v757, 112
        %v776 = vpop.permute.xlu0 %775
        %777 = vrot.lane.b32.xlu0 %v765, 112
        %v778 = vpop.permute.xlu0 %777
        %vm779 = vcmask 64512
        %v781 = vsel %vm779, %v757, 0
        %v784 = vsel %vm779, %v776, 0
        %v787 = vsel %vm779, %v778, 0
        %789 = vmatprep.subr.bf16.mxu0 0
        %790 = vmatpush1.bf16.xpose.msra.mxu0 0
        %791 = vmatprep.subr.bf16.mxu0 0
        %792 = vmatpush1.bf16.xpose.msra.mxu0 0
        %793 = vmatprep.subr.bf16.mxu0 0
        %794 = vmatpush1.bf16.xpose.msra.mxu0 0
        %795 = vmatprep.subr.bf16.mxu0 0
        %796 = vmatpush1.bf16.xpose.msra.mxu0 0
        %797 = vmatprep.subr.bf16.mxu0 0
        %798 = vmatpush1.bf16.xpose.msra.mxu0 0
        %799 = vmatprep.subr.bf16.mxu0 0
        %800 = vmatpush1.bf16.xpose.msra.mxu0 0
        %801 = vmatprep.subr.bf16.mxu0 0
        %802 = vmatpush1.bf16.xpose.msra.mxu0 %v787
        %803 = vmatprep.subr.bf16.mxu0 0
        %804 = vmatpush1.bf16.xpose.msra.mxu0 %v784
        %805 = vmatprep.subr.bf16.mxu0 0
        %806 = vmatpush2.bf16.xpose.msra.mxu0 0
        %807 = vmatprep.subr.bf16.mxu0 0
        %808 = vmatpush2.bf16.xpose.msra.mxu0 0
        %809 = vmatprep.subr.bf16.mxu0 0
        %810 = vmatpush2.bf16.xpose.msra.mxu0 0
        %811 = vmatprep.subr.bf16.mxu0 0
        %812 = vmatpush2.bf16.xpose.msra.mxu0 0
        %813 = vmatprep.subr.bf16.mxu0 0
        %814 = vmatpush2.bf16.xpose.msra.mxu0 0
        %815 = vmatprep.subr.bf16.mxu0 0
        %816 = vmatpush2.bf16.xpose.msra.mxu0 0
        %817 = vmatprep.subr.bf16.mxu0 0
        %818 = vmatpush2.bf16.xpose.msra.mxu0 0
        %819 = vmatprep.subr.bf16.mxu0 0
        %820 = vmatpush2.bf16.xpose.msra.mxu0 0
        %821 = vmatprep.mubr.bf16.mxu0 0
        %822 = vmatmul.mubr.bf16.gmra.mxu0 %v781
        %v823 = vpop.f32.mrf.mxu0
        %v824 = vadd.f32 0.0, %v823
        %v825 = vpop.f32.mrf.mxu0
        %v826 = vpop.f32.mrf.mxu0
        %v827 = vadd.f32 0.0, %v826
        %v828 = vpop.f32.mrf.mxu0
        %829 = vdwg.mxu0
        %832 = vrot.lane.b32.xlu0 %v758, 112
        %v833 = vpop.permute.xlu0 %832
        %834 = vrot.lane.b32.xlu0 %v766, 112
        %v835 = vpop.permute.xlu0 %834
        %v837 = vsel %vm779, %v758, 0
        %v840 = vsel %vm779, %v833, 0
        %v843 = vsel %vm779, %v835, 0
        %845 = vmatprep.subr.bf16.mxu0 0
        %846 = vmatpush1.bf16.xpose.msra.mxu0 0
        %847 = vmatprep.subr.bf16.mxu0 0
        %848 = vmatpush1.bf16.xpose.msra.mxu0 0
        %849 = vmatprep.subr.bf16.mxu0 0
        %850 = vmatpush1.bf16.xpose.msra.mxu0 0
        %851 = vmatprep.subr.bf16.mxu0 0
        %852 = vmatpush1.bf16.xpose.msra.mxu0 0
        %853 = vmatprep.subr.bf16.mxu0 0
        %854 = vmatpush1.bf16.xpose.msra.mxu0 0
        %855 = vmatprep.subr.bf16.mxu0 0
        %856 = vmatpush1.bf16.xpose.msra.mxu0 0
        %857 = vmatprep.subr.bf16.mxu0 0
        %858 = vmatpush1.bf16.xpose.msra.mxu0 %v843
        %859 = vmatprep.subr.bf16.mxu0 0
        %860 = vmatpush1.bf16.xpose.msra.mxu0 %v840
        %861 = vmatprep.subr.bf16.mxu0 0
        %862 = vmatpush2.bf16.xpose.msra.mxu0 0
        %863 = vmatprep.subr.bf16.mxu0 0
        %864 = vmatpush2.bf16.xpose.msra.mxu0 0
        %865 = vmatprep.subr.bf16.mxu0 0
        %866 = vmatpush2.bf16.xpose.msra.mxu0 0
        %867 = vmatprep.subr.bf16.mxu0 0
        %868 = vmatpush2.bf16.xpose.msra.mxu0 0
        %869 = vmatprep.subr.bf16.mxu0 0
        %870 = vmatpush2.bf16.xpose.msra.mxu0 0
        %871 = vmatprep.subr.bf16.mxu0 0
        %872 = vmatpush2.bf16.xpose.msra.mxu0 0
        %873 = vmatprep.subr.bf16.mxu0 0
        %874 = vmatpush2.bf16.xpose.msra.mxu0 0
        %875 = vmatprep.subr.bf16.mxu0 0
        %876 = vmatpush2.bf16.xpose.msra.mxu0 0
        %877 = vmatprep.mubr.bf16.mxu0 0
        %878 = vmatmul.mubr.bf16.gmra.mxu0 %v837
        %v879 = vpop.f32.mrf.mxu0
        %v880 = vadd.f32 0.0, %v879
        %v881 = vpop.f32.mrf.mxu0
        %v882 = vpop.f32.mrf.mxu0
        %v883 = vadd.f32 0.0, %v882
        %v884 = vpop.f32.mrf.mxu0
        %885 = vdwg.mxu0
        %888 = vrot.lane.b32.xlu0 %v759, 112
        %v889 = vpop.permute.xlu0 %888
        %890 = vrot.lane.b32.xlu0 %v767, 112
        %v891 = vpop.permute.xlu0 %890
        %v893 = vsel %vm779, %v759, 0
        %v896 = vsel %vm779, %v889, 0
        %v899 = vsel %vm779, %v891, 0
        %901 = vmatprep.subr.bf16.mxu0 0
        %902 = vmatpush1.bf16.xpose.msra.mxu0 0
        %903 = vmatprep.subr.bf16.mxu0 0
        %904 = vmatpush1.bf16.xpose.msra.mxu0 0
        %905 = vmatprep.subr.bf16.mxu0 0
        %906 = vmatpush1.bf16.xpose.msra.mxu0 0
        %907 = vmatprep.subr.bf16.mxu0 0
        %908 = vmatpush1.bf16.xpose.msra.mxu0 0
        %909 = vmatprep.subr.bf16.mxu0 0
        %910 = vmatpush1.bf16.xpose.msra.mxu0 0
        %911 = vmatprep.subr.bf16.mxu0 0
        %912 = vmatpush1.bf16.xpose.msra.mxu0 0
        %913 = vmatprep.subr.bf16.mxu0 0
        %914 = vmatpush1.bf16.xpose.msra.mxu0 %v899
        %915 = vmatprep.subr.bf16.mxu0 0
        %916 = vmatpush1.bf16.xpose.msra.mxu0 %v896
        %917 = vmatprep.subr.bf16.mxu0 0
        %918 = vmatpush2.bf16.xpose.msra.mxu0 0
        %919 = vmatprep.subr.bf16.mxu0 0
        %920 = vmatpush2.bf16.xpose.msra.mxu0 0
        %921 = vmatprep.subr.bf16.mxu0 0
        %922 = vmatpush2.bf16.xpose.msra.mxu0 0
        %923 = vmatprep.subr.bf16.mxu0 0
        %924 = vmatpush2.bf16.xpose.msra.mxu0 0
        %925 = vmatprep.subr.bf16.mxu0 0
        %926 = vmatpush2.bf16.xpose.msra.mxu0 0
        %927 = vmatprep.subr.bf16.mxu0 0
        %928 = vmatpush2.bf16.xpose.msra.mxu0 0
        %929 = vmatprep.subr.bf16.mxu0 0
        %930 = vmatpush2.bf16.xpose.msra.mxu0 0
        %931 = vmatprep.subr.bf16.mxu0 0
        %932 = vmatpush2.bf16.xpose.msra.mxu0 0
        %933 = vmatprep.mubr.bf16.mxu0 0
        %934 = vmatmul.mubr.bf16.gmra.mxu0 %v893
        %v935 = vpop.f32.mrf.mxu0
        %v936 = vadd.f32 0.0, %v935
        %v937 = vpop.f32.mrf.mxu0
        %v938 = vpop.f32.mrf.mxu0
        %v939 = vadd.f32 0.0, %v938
        %v940 = vpop.f32.mrf.mxu0
        %941 = vdwg.mxu0
        %944 = vrot.lane.b32.xlu0 %v760, 112
        %v945 = vpop.permute.xlu0 %944
        %946 = vrot.lane.b32.xlu0 %v768, 112
        %v947 = vpop.permute.xlu0 %946
        %v949 = vsel %vm779, %v760, 0
        %v952 = vsel %vm779, %v945, 0
        %v955 = vsel %vm779, %v947, 0
        %957 = vmatprep.subr.bf16.mxu0 0
        %958 = vmatpush1.bf16.xpose.msra.mxu0 0
        %959 = vmatprep.subr.bf16.mxu0 0
        %960 = vmatpush1.bf16.xpose.msra.mxu0 0
        %961 = vmatprep.subr.bf16.mxu0 0
        %962 = vmatpush1.bf16.xpose.msra.mxu0 0
        %963 = vmatprep.subr.bf16.mxu0 0
        %964 = vmatpush1.bf16.xpose.msra.mxu0 0
        %965 = vmatprep.subr.bf16.mxu0 0
        %966 = vmatpush1.bf16.xpose.msra.mxu0 0
        %967 = vmatprep.subr.bf16.mxu0 0
        %968 = vmatpush1.bf16.xpose.msra.mxu0 0
        %969 = vmatprep.subr.bf16.mxu0 0
        %970 = vmatpush1.bf16.xpose.msra.mxu0 %v955
        %971 = vmatprep.subr.bf16.mxu0 0
        %972 = vmatpush1.bf16.xpose.msra.mxu0 %v952
        %973 = vmatprep.subr.bf16.mxu0 0
        %974 = vmatpush2.bf16.xpose.msra.mxu0 0
        %975 = vmatprep.subr.bf16.mxu0 0
        %976 = vmatpush2.bf16.xpose.msra.mxu0 0
        %977 = vmatprep.subr.bf16.mxu0 0
        %978 = vmatpush2.bf16.xpose.msra.mxu0 0
        %979 = vmatprep.subr.bf16.mxu0 0
        %980 = vmatpush2.bf16.xpose.msra.mxu0 0
        %981 = vmatprep.subr.bf16.mxu0 0
        %982 = vmatpush2.bf16.xpose.msra.mxu0 0
        %983 = vmatprep.subr.bf16.mxu0 0
        %984 = vmatpush2.bf16.xpose.msra.mxu0 0
        %985 = vmatprep.subr.bf16.mxu0 0
        %986 = vmatpush2.bf16.xpose.msra.mxu0 0
        %987 = vmatprep.subr.bf16.mxu0 0
        %988 = vmatpush2.bf16.xpose.msra.mxu0 0
        %989 = vmatprep.mubr.bf16.mxu0 0
        %990 = vmatmul.mubr.bf16.gmra.mxu0 %v949
        %v991 = vpop.f32.mrf.mxu0
        %v992 = vadd.f32 0.0, %v991
        %v993 = vpop.f32.mrf.mxu0
        %v994 = vpop.f32.mrf.mxu0
        %v995 = vadd.f32 0.0, %v994
        %v996 = vpop.f32.mrf.mxu0
        %997 = vdwg.mxu0
        %1000 = vrot.lane.b32.xlu0 %v761, 112
        %v1001 = vpop.permute.xlu0 %1000
        %1002 = vrot.lane.b32.xlu0 %v769, 112
        %v1003 = vpop.permute.xlu0 %1002
        %v1005 = vsel %vm779, %v761, 0
        %v1008 = vsel %vm779, %v1001, 0
        %v1011 = vsel %vm779, %v1003, 0
        %1013 = vmatprep.subr.bf16.mxu0 0
        %1014 = vmatpush1.bf16.xpose.msra.mxu0 0
        %1015 = vmatprep.subr.bf16.mxu0 0
        %1016 = vmatpush1.bf16.xpose.msra.mxu0 0
        %1017 = vmatprep.subr.bf16.mxu0 0
        %1018 = vmatpush1.bf16.xpose.msra.mxu0 0
        %1019 = vmatprep.subr.bf16.mxu0 0
        %1020 = vmatpush1.bf16.xpose.msra.mxu0 0
        %1021 = vmatprep.subr.bf16.mxu0 0
        %1022 = vmatpush1.bf16.xpose.msra.mxu0 0
        %1023 = vmatprep.subr.bf16.mxu0 0
        %1024 = vmatpush1.bf16.xpose.msra.mxu0 0
        %1025 = vmatprep.subr.bf16.mxu0 0
        %1026 = vmatpush1.bf16.xpose.msra.mxu0 %v1011
        %1027 = vmatprep.subr.bf16.mxu0 0
        %1028 = vmatpush1.bf16.xpose.msra.mxu0 %v1008
        %1029 = vmatprep.subr.bf16.mxu0 0
        %1030 = vmatpush2.bf16.xpose.msra.mxu0 0
        %1031 = vmatprep.subr.bf16.mxu0 0
        %1032 = vmatpush2.bf16.xpose.msra.mxu0 0
        %1033 = vmatprep.subr.bf16.mxu0 0
        %1034 = vmatpush2.bf16.xpose.msra.mxu0 0
        %1035 = vmatprep.subr.bf16.mxu0 0
        %1036 = vmatpush2.bf16.xpose.msra.mxu0 0
        %1037 = vmatprep.subr.bf16.mxu0 0
        %1038 = vmatpush2.bf16.xpose.msra.mxu0 0
        %1039 = vmatprep.subr.bf16.mxu0 0
        %1040 = vmatpush2.bf16.xpose.msra.mxu0 0
        %1041 = vmatprep.subr.bf16.mxu0 0
        %1042 = vmatpush2.bf16.xpose.msra.mxu0 0
        %1043 = vmatprep.subr.bf16.mxu0 0
        %1044 = vmatpush2.bf16.xpose.msra.mxu0 0
        %1045 = vmatprep.mubr.bf16.mxu0 0
        %1046 = vmatmul.mubr.bf16.gmra.mxu0 %v1005
        %v1047 = vpop.f32.mrf.mxu0
        %v1048 = vadd.f32 0.0, %v1047
        %v1049 = vpop.f32.mrf.mxu0
        %v1050 = vpop.f32.mrf.mxu0
        %v1051 = vadd.f32 0.0, %v1050
        %v1052 = vpop.f32.mrf.mxu0
        %1053 = vdwg.mxu0
        %1056 = vrot.lane.b32.xlu0 %v762, 112
        %v1057 = vpop.permute.xlu0 %1056
        %1058 = vrot.lane.b32.xlu0 %v770, 112
        %v1059 = vpop.permute.xlu0 %1058
        %v1061 = vsel %vm779, %v762, 0
        %v1064 = vsel %vm779, %v1057, 0
        %v1067 = vsel %vm779, %v1059, 0
        %1069 = vmatprep.subr.bf16.mxu0 0
        %1070 = vmatpush1.bf16.xpose.msra.mxu0 0
        %1071 = vmatprep.subr.bf16.mxu0 0
        %1072 = vmatpush1.bf16.xpose.msra.mxu0 0
        %1073 = vmatprep.subr.bf16.mxu0 0
        %1074 = vmatpush1.bf16.xpose.msra.mxu0 0
        %1075 = vmatprep.subr.bf16.mxu0 0
        %1076 = vmatpush1.bf16.xpose.msra.mxu0 0
        %1077 = vmatprep.subr.bf16.mxu0 0
        %1078 = vmatpush1.bf16.xpose.msra.mxu0 0
        %1079 = vmatprep.subr.bf16.mxu0 0
        %1080 = vmatpush1.bf16.xpose.msra.mxu0 0
        %1081 = vmatprep.subr.bf16.mxu0 0
        %1082 = vmatpush1.bf16.xpose.msra.mxu0 %v1067
        %1083 = vmatprep.subr.bf16.mxu0 0
        %1084 = vmatpush1.bf16.xpose.msra.mxu0 %v1064
        %1085 = vmatprep.subr.bf16.mxu0 0
        %1086 = vmatpush2.bf16.xpose.msra.mxu0 0
        %1087 = vmatprep.subr.bf16.mxu0 0
        %1088 = vmatpush2.bf16.xpose.msra.mxu0 0
        %1089 = vmatprep.subr.bf16.mxu0 0
        %1090 = vmatpush2.bf16.xpose.msra.mxu0 0
        %1091 = vmatprep.subr.bf16.mxu0 0
        %1092 = vmatpush2.bf16.xpose.msra.mxu0 0
        %1093 = vmatprep.subr.bf16.mxu0 0
        %1094 = vmatpush2.bf16.xpose.msra.mxu0 0
        %1095 = vmatprep.subr.bf16.mxu0 0
        %1096 = vmatpush2.bf16.xpose.msra.mxu0 0
        %1097 = vmatprep.subr.bf16.mxu0 0
        %1098 = vmatpush2.bf16.xpose.msra.mxu0 0
        %1099 = vmatprep.subr.bf16.mxu0 0
        %1100 = vmatpush2.bf16.xpose.msra.mxu0 0
        %1101 = vmatprep.mubr.bf16.mxu0 0
        %1102 = vmatmul.mubr.bf16.gmra.mxu0 %v1061
        %v1103 = vpop.f32.mrf.mxu0
        %v1104 = vadd.f32 0.0, %v1103
        %v1105 = vpop.f32.mrf.mxu0
        %v1106 = vpop.f32.mrf.mxu0
        %v1107 = vadd.f32 0.0, %v1106
        %v1108 = vpop.f32.mrf.mxu0
        %1109 = vdwg.mxu0
        %1112 = vrot.lane.b32.xlu0 %v763, 112
        %v1113 = vpop.permute.xlu0 %1112
        %1114 = vrot.lane.b32.xlu0 %v771, 112
        %v1115 = vpop.permute.xlu0 %1114
        %v1117 = vsel %vm779, %v763, 0
        %v1120 = vsel %vm779, %v1113, 0
        %v1123 = vsel %vm779, %v1115, 0
        %1125 = vmatprep.subr.bf16.mxu0 0
        %1126 = vmatpush1.bf16.xpose.msra.mxu0 0
        %1127 = vmatprep.subr.bf16.mxu0 0
        %1128 = vmatpush1.bf16.xpose.msra.mxu0 0
        %1129 = vmatprep.subr.bf16.mxu0 0
        %1130 = vmatpush1.bf16.xpose.msra.mxu0 0
        %1131 = vmatprep.subr.bf16.mxu0 0
        %1132 = vmatpush1.bf16.xpose.msra.mxu0 0
        %1133 = vmatprep.subr.bf16.mxu0 0
        %1134 = vmatpush1.bf16.xpose.msra.mxu0 0
        %1135 = vmatprep.subr.bf16.mxu0 0
        %1136 = vmatpush1.bf16.xpose.msra.mxu0 0
        %1137 = vmatprep.subr.bf16.mxu0 0
        %1138 = vmatpush1.bf16.xpose.msra.mxu0 %v1123
        %1139 = vmatprep.subr.bf16.mxu0 0
        %1140 = vmatpush1.bf16.xpose.msra.mxu0 %v1120
        %1141 = vmatprep.subr.bf16.mxu0 0
        %1142 = vmatpush2.bf16.xpose.msra.mxu0 0
        %1143 = vmatprep.subr.bf16.mxu0 0
        %1144 = vmatpush2.bf16.xpose.msra.mxu0 0
        %1145 = vmatprep.subr.bf16.mxu0 0
        %1146 = vmatpush2.bf16.xpose.msra.mxu0 0
        %1147 = vmatprep.subr.bf16.mxu0 0
        %1148 = vmatpush2.bf16.xpose.msra.mxu0 0
        %1149 = vmatprep.subr.bf16.mxu0 0
        %1150 = vmatpush2.bf16.xpose.msra.mxu0 0
        %1151 = vmatprep.subr.bf16.mxu0 0
        %1152 = vmatpush2.bf16.xpose.msra.mxu0 0
        %1153 = vmatprep.subr.bf16.mxu0 0
        %1154 = vmatpush2.bf16.xpose.msra.mxu0 0
        %1155 = vmatprep.subr.bf16.mxu0 0
        %1156 = vmatpush2.bf16.xpose.msra.mxu0 0
        %1157 = vmatprep.mubr.bf16.mxu0 0
        %1158 = vmatmul.mubr.bf16.gmra.mxu0 %v1117
        %v1159 = vpop.f32.mrf.mxu0
        %v1160 = vadd.f32 0.0, %v1159
        %v1161 = vpop.f32.mrf.mxu0
        %v1162 = vpop.f32.mrf.mxu0
        %v1163 = vadd.f32 0.0, %v1162
        %v1164 = vpop.f32.mrf.mxu0
        %1165 = vdwg.mxu0
        %1168 = vrot.lane.b32.xlu0 %v764, 112
        %v1169 = vpop.permute.xlu0 %1168
        %1170 = vrot.lane.b32.xlu0 %v772, 112
        %v1171 = vpop.permute.xlu0 %1170
        %v1173 = vsel %vm779, %v764, 0
        %v1176 = vsel %vm779, %v1169, 0
        %v1179 = vsel %vm779, %v1171, 0
        %1181 = vmatprep.subr.bf16.mxu0 0
        %1182 = vmatpush1.bf16.xpose.msra.mxu0 0
        %1183 = vmatprep.subr.bf16.mxu0 0
        %1184 = vmatpush1.bf16.xpose.msra.mxu0 0
        %1185 = vmatprep.subr.bf16.mxu0 0
        %1186 = vmatpush1.bf16.xpose.msra.mxu0 0
        %1187 = vmatprep.subr.bf16.mxu0 0
        %1188 = vmatpush1.bf16.xpose.msra.mxu0 0
        %1189 = vmatprep.subr.bf16.mxu0 0
        %1190 = vmatpush1.bf16.xpose.msra.mxu0 0
        %1191 = vmatprep.subr.bf16.mxu0 0
        %1192 = vmatpush1.bf16.xpose.msra.mxu0 0
        %1193 = vmatprep.subr.bf16.mxu0 0
        %1194 = vmatpush1.bf16.xpose.msra.mxu0 %v1179
        %1195 = vmatprep.subr.bf16.mxu0 0
        %1196 = vmatpush1.bf16.xpose.msra.mxu0 %v1176
        %1197 = vmatprep.subr.bf16.mxu0 0
        %1198 = vmatpush2.bf16.xpose.msra.mxu0 0
        %1199 = vmatprep.subr.bf16.mxu0 0
        %1200 = vmatpush2.bf16.xpose.msra.mxu0 0
        %1201 = vmatprep.subr.bf16.mxu0 0
        %1202 = vmatpush2.bf16.xpose.msra.mxu0 0
        %1203 = vmatprep.subr.bf16.mxu0 0
        %1204 = vmatpush2.bf16.xpose.msra.mxu0 0
        %1205 = vmatprep.subr.bf16.mxu0 0
        %1206 = vmatpush2.bf16.xpose.msra.mxu0 0
        %1207 = vmatprep.subr.bf16.mxu0 0
        %1208 = vmatpush2.bf16.xpose.msra.mxu0 0
        %1209 = vmatprep.subr.bf16.mxu0 0
        %1210 = vmatpush2.bf16.xpose.msra.mxu0 0
        %1211 = vmatprep.subr.bf16.mxu0 0
        %1212 = vmatpush2.bf16.xpose.msra.mxu0 0
        %1213 = vmatprep.mubr.bf16.mxu0 0
        %1214 = vmatmul.mubr.bf16.gmra.mxu0 %v1173
        %v1215 = vpop.f32.mrf.mxu0
        %v1216 = vadd.f32 0.0, %v1215
        %v1217 = vpop.f32.mrf.mxu0
        %v1218 = vpop.f32.mrf.mxu0
        %v1219 = vadd.f32 0.0, %v1218
        %v1220 = vpop.f32.mrf.mxu0
        %1221 = vdwg.mxu0
        %vm1222 = vcmp.lt.s32.totalorder %v700, 16
        %vm1223 = vcmp.ge.s32.totalorder %v700, 24
        %vm1224 = vmor %vm1222, %vm1223
        %v1225 = vsel %vm1224, 1, 0
        %vm1226 = vcmp.eq.s32.totalorder %v1225, 1
        %v1227 = vsel %vm1226, %v824, -1e+30
        %v1228 = vsel %vm1226, %v880, -1e+30
        %v1229 = vsel %vm1226, %v936, -1e+30
        %v1230 = vsel %vm1226, %v992, -1e+30
        %v1231 = vsel %vm1226, %v1048, -1e+30
        %v1232 = vsel %vm1226, %v1104, -1e+30
        %v1233 = vsel %vm1226, %v1160, -1e+30
        %v1234 = vsel %vm1226, %v1216, -1e+30
        %vm1235 = vcmask 195584
        %v1236 = vsel %vm1235, %v1227, -inf
        %1237 = vmax.xlane.f32.xlu0 %v1236
        %v1238 = vpop.xlane.xlu0 %1237
        %v1239 = vsel %vm1235, %v1228, -inf
        %1240 = vmax.xlane.f32.xlu0 %v1239
        %v1241 = vpop.xlane.xlu0 %1240
        %v1242 = vsel %vm1235, %v1229, -inf
        %1243 = vmax.xlane.f32.xlu0 %v1242
        %v1244 = vpop.xlane.xlu0 %1243
        %v1245 = vsel %vm1235, %v1230, -inf
        %1246 = vmax.xlane.f32.xlu0 %v1245
        %v1247 = vpop.xlane.xlu0 %1246
        %v1248 = vsel %vm1235, %v1231, -inf
        %1249 = vmax.xlane.f32.xlu0 %v1248
        %v1250 = vpop.xlane.xlu0 %1249
        %v1251 = vsel %vm1235, %v1232, -inf
        %1252 = vmax.xlane.f32.xlu0 %v1251
        %v1253 = vpop.xlane.xlu0 %1252
        %v1254 = vsel %vm1235, %v1233, -inf
        %1255 = vmax.xlane.f32.xlu0 %v1254
        %v1256 = vpop.xlane.xlu0 %1255
        %v1257 = vsel %vm1235, %v1234, -inf
        %1258 = vmax.xlane.f32.xlu0 %v1257
        %v1259 = vpop.xlane.xlu0 %1258
        %v1260 = vsub.f32 %v1227, %v1238
        %v1261 = vsub.f32 %v1228, %v1241
        %v1262 = vsub.f32 %v1229, %v1244
        %v1263 = vsub.f32 %v1230, %v1247
        %v1264 = vsub.f32 %v1231, %v1250
        %v1265 = vsub.f32 %v1232, %v1253
        %v1266 = vsub.f32 %v1233, %v1256
        %v1267 = vsub.f32 %v1234, %v1259
        %v1268 = vmul.f32 %v1260, 1.442695
        %v1269 = vpow.pop %v1268
        %v1270 = vmul.f32 %v1261, 1.442695
        %v1271 = vpow.pop %v1270
        %v1272 = vmul.f32 %v1262, 1.442695
        %v1273 = vpow.pop %v1272
        %v1274 = vmul.f32 %v1263, 1.442695
        %v1275 = vpow.pop %v1274
        %v1276 = vmul.f32 %v1264, 1.442695
        %v1277 = vpow.pop %v1276
        %v1278 = vmul.f32 %v1265, 1.442695
        %v1279 = vpow.pop %v1278
        %v1280 = vmul.f32 %v1266, 1.442695
        %v1281 = vpow.pop %v1280
        %v1282 = vmul.f32 %v1267, 1.442695
        %v1283 = vpow.pop %v1282
        %v1284 = vsel %vm1235, %v1269, 0.0
        %1285 = vadd.xlane.f32.xlu0 %v1284
        %v1286 = vpop.xlane.xlu0 %1285
        %v1287 = vsel %vm1235, %v1271, 0.0
        %1288 = vadd.xlane.f32.xlu0 %v1287
        %v1289 = vpop.xlane.xlu0 %1288
        %v1290 = vsel %vm1235, %v1273, 0.0
        %1291 = vadd.xlane.f32.xlu0 %v1290
        %v1292 = vpop.xlane.xlu0 %1291
        %v1293 = vsel %vm1235, %v1275, 0.0
        %1294 = vadd.xlane.f32.xlu0 %v1293
        %v1295 = vpop.xlane.xlu0 %1294
        %v1296 = vsel %vm1235, %v1277, 0.0
        %1297 = vadd.xlane.f32.xlu0 %v1296
        %v1298 = vpop.xlane.xlu0 %1297
        %v1299 = vsel %vm1235, %v1279, 0.0
        %1300 = vadd.xlane.f32.xlu0 %v1299
        %v1301 = vpop.xlane.xlu0 %1300
        %v1302 = vsel %vm1235, %v1281, 0.0
        %1303 = vadd.xlane.f32.xlu0 %v1302
        %v1304 = vpop.xlane.xlu0 %1303
        %v1305 = vsel %vm1235, %v1283, 0.0
        %1306 = vadd.xlane.f32.xlu0 %v1305
        %v1307 = vpop.xlane.xlu0 %1306
        %vm1308 = vcmp.lt.s32.totalorder %v700, 8
        %vm1309 = vcmp.ge.s32.totalorder %v700, 16
        %vm1310 = vmor %vm1308, %vm1309
        %v1311 = vsel %vm1310, 1, 0
        %vm1312 = vcmp.eq.s32.totalorder %v1311, 1
        %v1313 = vsel %vm1312, %v827, -1e+30
        %v1314 = vsel %vm1312, %v883, -1e+30
        %v1315 = vsel %vm1312, %v939, -1e+30
        %v1316 = vsel %vm1312, %v995, -1e+30
        %v1317 = vsel %vm1312, %v1051, -1e+30
        %v1318 = vsel %vm1312, %v1107, -1e+30
        %v1319 = vsel %vm1312, %v1163, -1e+30
        %v1320 = vsel %vm1312, %v1219, -1e+30
        %v1321 = vsel %vm1235, %v1313, -inf
        %1322 = vmax.xlane.f32.xlu0 %v1321
        %v1323 = vpop.xlane.xlu0 %1322
        %v1324 = vsel %vm1235, %v1314, -inf
        %1325 = vmax.xlane.f32.xlu0 %v1324
        %v1326 = vpop.xlane.xlu0 %1325
        %v1327 = vsel %vm1235, %v1315, -inf
        %1328 = vmax.xlane.f32.xlu0 %v1327
        %v1329 = vpop.xlane.xlu0 %1328
        %v1330 = vsel %vm1235, %v1316, -inf
        %1331 = vmax.xlane.f32.xlu0 %v1330
        %v1332 = vpop.xlane.xlu0 %1331
        %v1333 = vsel %vm1235, %v1317, -inf
        %1334 = vmax.xlane.f32.xlu0 %v1333
        %v1335 = vpop.xlane.xlu0 %1334
        %v1336 = vsel %vm1235, %v1318, -inf
        %1337 = vmax.xlane.f32.xlu0 %v1336
        %v1338 = vpop.xlane.xlu0 %1337
        %v1339 = vsel %vm1235, %v1319, -inf
        %1340 = vmax.xlane.f32.xlu0 %v1339
        %v1341 = vpop.xlane.xlu0 %1340
        %v1342 = vsel %vm1235, %v1320, -inf
        %1343 = vmax.xlane.f32.xlu0 %v1342
        %v1344 = vpop.xlane.xlu0 %1343
        %v1345 = vsub.f32 %v1313, %v1323
        %v1346 = vsub.f32 %v1314, %v1326
        %v1347 = vsub.f32 %v1315, %v1329
        %v1348 = vsub.f32 %v1316, %v1332
        %v1349 = vsub.f32 %v1317, %v1335
        %v1350 = vsub.f32 %v1318, %v1338
        %v1351 = vsub.f32 %v1319, %v1341
        %v1352 = vsub.f32 %v1320, %v1344
        %v1353 = vmul.f32 %v1345, 1.442695
        %v1354 = vpow.pop %v1353
        %v1355 = vmul.f32 %v1346, 1.442695
        %v1356 = vpow.pop %v1355
        %v1357 = vmul.f32 %v1347, 1.442695
        %v1358 = vpow.pop %v1357
        %v1359 = vmul.f32 %v1348, 1.442695
        %v1360 = vpow.pop %v1359
        %v1361 = vmul.f32 %v1349, 1.442695
        %v1362 = vpow.pop %v1361
        %v1363 = vmul.f32 %v1350, 1.442695
        %v1364 = vpow.pop %v1363
        %v1365 = vmul.f32 %v1351, 1.442695
        %v1366 = vpow.pop %v1365
        %v1367 = vmul.f32 %v1352, 1.442695
        %v1368 = vpow.pop %v1367
        %v1369 = vsel %vm1235, %v1354, 0.0
        %1370 = vadd.xlane.f32.xlu0 %v1369
        %v1371 = vpop.xlane.xlu0 %1370
        %v1372 = vsel %vm1235, %v1356, 0.0
        %1373 = vadd.xlane.f32.xlu0 %v1372
        %v1374 = vpop.xlane.xlu0 %1373
        %v1375 = vsel %vm1235, %v1358, 0.0
        %1376 = vadd.xlane.f32.xlu0 %v1375
        %v1377 = vpop.xlane.xlu0 %1376
        %v1378 = vsel %vm1235, %v1360, 0.0
        %1379 = vadd.xlane.f32.xlu0 %v1378
        %v1380 = vpop.xlane.xlu0 %1379
        %v1381 = vsel %vm1235, %v1362, 0.0
        %1382 = vadd.xlane.f32.xlu0 %v1381
        %v1383 = vpop.xlane.xlu0 %1382
        %v1384 = vsel %vm1235, %v1364, 0.0
        %1385 = vadd.xlane.f32.xlu0 %v1384
        %v1386 = vpop.xlane.xlu0 %1385
        %v1387 = vsel %vm1235, %v1366, 0.0
        %1388 = vadd.xlane.f32.xlu0 %v1387
        %v1389 = vpop.xlane.xlu0 %1388
        %v1390 = vsel %vm1235, %v1368, 0.0
        %1391 = vadd.xlane.f32.xlu0 %v1390
        %v1392 = vpop.xlane.xlu0 %1391
        %vm1393 = vcmp.lt.s32.totalorder %v700, 0
        %vm1394 = vcmp.ge.s32.totalorder %v700, 8
        %vm1395 = vmor %vm1393, %vm1394
        %v1396 = vsel %vm1395, 1, 0
        %vm1397 = vcmp.eq.s32.totalorder %v1396, 1
        %v1398 = vsel %vm1397, %v827, -1e+30
        %v1399 = vsel %vm1397, %v883, -1e+30
        %v1400 = vsel %vm1397, %v939, -1e+30
        %v1401 = vsel %vm1397, %v995, -1e+30
        %v1402 = vsel %vm1397, %v1051, -1e+30
        %v1403 = vsel %vm1397, %v1107, -1e+30
        %v1404 = vsel %vm1397, %v1163, -1e+30
        %v1405 = vsel %vm1397, %v1219, -1e+30
        %v1406 = vsel %vm1235, %v1398, -inf
        %1407 = vmax.xlane.f32.xlu0 %v1406
        %v1408 = vpop.xlane.xlu0 %1407
        %v1409 = vsel %vm1235, %v1399, -inf
        %1410 = vmax.xlane.f32.xlu0 %v1409
        %v1411 = vpop.xlane.xlu0 %1410
        %v1412 = vsel %vm1235, %v1400, -inf
        %1413 = vmax.xlane.f32.xlu0 %v1412
        %v1414 = vpop.xlane.xlu0 %1413
        %v1415 = vsel %vm1235, %v1401, -inf
        %1416 = vmax.xlane.f32.xlu0 %v1415
        %v1417 = vpop.xlane.xlu0 %1416
        %v1418 = vsel %vm1235, %v1402, -inf
        %1419 = vmax.xlane.f32.xlu0 %v1418
        %v1420 = vpop.xlane.xlu0 %1419
        %v1421 = vsel %vm1235, %v1403, -inf
        %1422 = vmax.xlane.f32.xlu0 %v1421
        %v1423 = vpop.xlane.xlu0 %1422
        %v1424 = vsel %vm1235, %v1404, -inf
        %1425 = vmax.xlane.f32.xlu0 %v1424
        %v1426 = vpop.xlane.xlu0 %1425
        %v1427 = vsel %vm1235, %v1405, -inf
        %1428 = vmax.xlane.f32.xlu0 %v1427
        %v1429 = vpop.xlane.xlu0 %1428
        %v1430 = vsub.f32 %v1398, %v1408
        %v1431 = vsub.f32 %v1399, %v1411
        %v1432 = vsub.f32 %v1400, %v1414
        %v1433 = vsub.f32 %v1401, %v1417
        %v1434 = vsub.f32 %v1402, %v1420
        %v1435 = vsub.f32 %v1403, %v1423
        %v1436 = vsub.f32 %v1404, %v1426
        %v1437 = vsub.f32 %v1405, %v1429
        %v1438 = vmul.f32 %v1430, 1.442695
        %v1439 = vpow.pop %v1438
        %v1440 = vmul.f32 %v1431, 1.442695
        %v1441 = vpow.pop %v1440
        %v1442 = vmul.f32 %v1432, 1.442695
        %v1443 = vpow.pop %v1442
        %v1444 = vmul.f32 %v1433, 1.442695
        %v1445 = vpow.pop %v1444
        %v1446 = vmul.f32 %v1434, 1.442695
        %v1447 = vpow.pop %v1446
        %v1448 = vmul.f32 %v1435, 1.442695
        %v1449 = vpow.pop %v1448
        %v1450 = vmul.f32 %v1436, 1.442695
        %v1451 = vpow.pop %v1450
        %v1452 = vmul.f32 %v1437, 1.442695
        %v1453 = vpow.pop %v1452
        %v1454 = vsel %vm1235, %v1439, 0.0
        %1455 = vadd.xlane.f32.xlu0 %v1454
        %v1456 = vpop.xlane.xlu0 %1455
        %v1457 = vsel %vm1235, %v1441, 0.0
        %1458 = vadd.xlane.f32.xlu0 %v1457
        %v1459 = vpop.xlane.xlu0 %1458
        %v1460 = vsel %vm1235, %v1443, 0.0
        %1461 = vadd.xlane.f32.xlu0 %v1460
        %v1462 = vpop.xlane.xlu0 %1461
        %v1463 = vsel %vm1235, %v1445, 0.0
        %1464 = vadd.xlane.f32.xlu0 %v1463
        %v1465 = vpop.xlane.xlu0 %1464
        %v1466 = vsel %vm1235, %v1447, 0.0
        %1467 = vadd.xlane.f32.xlu0 %v1466
        %v1468 = vpop.xlane.xlu0 %1467
        %v1469 = vsel %vm1235, %v1449, 0.0
        %1470 = vadd.xlane.f32.xlu0 %v1469
        %v1471 = vpop.xlane.xlu0 %1470
        %v1472 = vsel %vm1235, %v1451, 0.0
        %1473 = vadd.xlane.f32.xlu0 %v1472
        %v1474 = vpop.xlane.xlu0 %1473
        %v1475 = vsel %vm1235, %v1453, 0.0
        %1476 = vadd.xlane.f32.xlu0 %v1475
        %v1477 = vpop.xlane.xlu0 %1476
        %v1478 = vpack.c.bf16 %v1354, %v1269
        %v1479 = vpack.c.bf16 %v1439, %v1439
        %v1480 = vpack.c.bf16 %v1356, %v1271
        %v1481 = vpack.c.bf16 %v1441, %v1441
        %v1482 = vpack.c.bf16 %v1358, %v1273
        %v1483 = vpack.c.bf16 %v1443, %v1443
        %v1484 = vpack.c.bf16 %v1360, %v1275
        %v1485 = vpack.c.bf16 %v1445, %v1445
        %v1486 = vpack.c.bf16 %v1362, %v1277
        %v1487 = vpack.c.bf16 %v1447, %v1447
        %v1488 = vpack.c.bf16 %v1364, %v1279
        %v1489 = vpack.c.bf16 %v1449, %v1449
        %v1490 = vpack.c.bf16 %v1366, %v1281
        %v1491 = vpack.c.bf16 %v1451, %v1451
        %v1492 = vpack.c.bf16 %v1368, %v1283
        %v1493 = vpack.c.bf16 %v1453, %v1453
        %1494 = vrot.lane.b32.xlu0 %v757, 88
        %v1495 = vpop.permute.xlu0 %1494
        %1496 = vrot.lane.b32.xlu0 %v765, 88
        %v1497 = vpop.permute.xlu0 %1496
        %v1500 = vsel %vm1235, %v1478, 0
        %v1503 = vsel %vm1235, %v1479, 0
        %vm1505 = vcmask 1043456
        %v1507 = vsel %vm1505, %v1497, 0
        %1509 = vmatprep.subr.bf16.mxu0 0
        %1510 = vmatpush1.bf16.msra.mxu0 0
        %1511 = vmatprep.subr.bf16.mxu0 0
        %1512 = vmatpush1.bf16.msra.mxu0 0
        %1513 = vmatprep.subr.bf16.mxu0 0
        %1514 = vmatpush1.bf16.msra.mxu0 0
        %1515 = vmatprep.subr.bf16.mxu0 0
        %1516 = vmatpush1.bf16.msra.mxu0 0
        %1517 = vmatprep.subr.bf16.mxu0 0
        %1518 = vmatpush1.bf16.msra.mxu0 0
        %1519 = vmatprep.subr.bf16.mxu0 0
        %1520 = vmatpush1.bf16.msra.mxu0 0
        %1521 = vmatprep.subr.bf16.mxu0 0
        %1522 = vmatpush1.bf16.msra.mxu0 %v1507
        %1523 = vmatprep.subr.bf16.mxu0 0
        %1524 = vmatpush1.bf16.msra.mxu0 %v1495
        %1525 = vmatprep.subr.bf16.mxu0 0
        %1526 = vmatpush2.bf16.msra.mxu0 0
        %1527 = vmatprep.subr.bf16.mxu0 0
        %1528 = vmatpush2.bf16.msra.mxu0 0
        %1529 = vmatprep.subr.bf16.mxu0 0
        %1530 = vmatpush2.bf16.msra.mxu0 0
        %1531 = vmatprep.subr.bf16.mxu0 0
        %1532 = vmatpush2.bf16.msra.mxu0 0
        %1533 = vmatprep.subr.bf16.mxu0 0
        %1534 = vmatpush2.bf16.msra.mxu0 0
        %1535 = vmatprep.subr.bf16.mxu0 0
        %1536 = vmatpush2.bf16.msra.mxu0 0
        %1537 = vmatprep.subr.bf16.mxu0 0
        %1538 = vmatpush2.bf16.msra.mxu0 0
        %1539 = vmatprep.subr.bf16.mxu0 0
        %1540 = vmatpush2.bf16.msra.mxu0 0
        %1541 = vmatprep.mubr.bf16.mxu0 0
        %1542 = vmatmul.mubr.bf16.gmra.mxu0 %v1500
        %v1543 = vpop.f32.mrf.mxu0
        %v1544 = vadd.f32 0.0, %v1543
        %v1545 = vpop.f32.mrf.mxu0
        %v1546 = vpop.f32.mrf.mxu0
        %v1547 = vadd.f32 0.0, %v1546
        %v1548 = vpop.f32.mrf.mxu0
        %1549 = vmatprep.mubr.bf16.mxu0 0
        %1550 = vmatmul.mubr.bf16.gmra.mxu0 %v1503
        %v1551 = vpop.f32.mrf.mxu0
        %v1552 = vadd.f32 0.0, %v1551
        %v1553 = vpop.f32.mrf.mxu0
        %v1554 = vpop.f32.mrf.mxu0
        %v1555 = vpop.f32.mrf.mxu0
        %1556 = vdwg.mxu0
        %1557 = vrot.lane.b32.xlu0 %v758, 88
        %v1558 = vpop.permute.xlu0 %1557
        %1559 = vrot.lane.b32.xlu0 %v766, 88
        %v1560 = vpop.permute.xlu0 %1559
        %v1563 = vsel %vm1235, %v1480, 0
        %v1566 = vsel %vm1235, %v1481, 0
        %v1569 = vsel %vm1505, %v1560, 0
        %1571 = vmatprep.subr.bf16.mxu0 0
        %1572 = vmatpush1.bf16.msra.mxu0 0
        %1573 = vmatprep.subr.bf16.mxu0 0
        %1574 = vmatpush1.bf16.msra.mxu0 0
        %1575 = vmatprep.subr.bf16.mxu0 0
        %1576 = vmatpush1.bf16.msra.mxu0 0
        %1577 = vmatprep.subr.bf16.mxu0 0
        %1578 = vmatpush1.bf16.msra.mxu0 0
        %1579 = vmatprep.subr.bf16.mxu0 0
        %1580 = vmatpush1.bf16.msra.mxu0 0
        %1581 = vmatprep.subr.bf16.mxu0 0
        %1582 = vmatpush1.bf16.msra.mxu0 0
        %1583 = vmatprep.subr.bf16.mxu0 0
        %1584 = vmatpush1.bf16.msra.mxu0 %v1569
        %1585 = vmatprep.subr.bf16.mxu0 0
        %1586 = vmatpush1.bf16.msra.mxu0 %v1558
        %1587 = vmatprep.subr.bf16.mxu0 0
        %1588 = vmatpush2.bf16.msra.mxu0 0
        %1589 = vmatprep.subr.bf16.mxu0 0
        %1590 = vmatpush2.bf16.msra.mxu0 0
        %1591 = vmatprep.subr.bf16.mxu0 0
        %1592 = vmatpush2.bf16.msra.mxu0 0
        %1593 = vmatprep.subr.bf16.mxu0 0
        %1594 = vmatpush2.bf16.msra.mxu0 0
        %1595 = vmatprep.subr.bf16.mxu0 0
        %1596 = vmatpush2.bf16.msra.mxu0 0
        %1597 = vmatprep.subr.bf16.mxu0 0
        %1598 = vmatpush2.bf16.msra.mxu0 0
        %1599 = vmatprep.subr.bf16.mxu0 0
        %1600 = vmatpush2.bf16.msra.mxu0 0
        %1601 = vmatprep.subr.bf16.mxu0 0
        %1602 = vmatpush2.bf16.msra.mxu0 0
        %1603 = vmatprep.mubr.bf16.mxu0 0
        %1604 = vmatmul.mubr.bf16.gmra.mxu0 %v1563
        %v1605 = vpop.f32.mrf.mxu0
        %v1606 = vadd.f32 0.0, %v1605
        %v1607 = vpop.f32.mrf.mxu0
        %v1608 = vpop.f32.mrf.mxu0
        %v1609 = vadd.f32 0.0, %v1608
        %v1610 = vpop.f32.mrf.mxu0
        %1611 = vmatprep.mubr.bf16.mxu0 0
        %1612 = vmatmul.mubr.bf16.gmra.mxu0 %v1566
        %v1613 = vpop.f32.mrf.mxu0
        %v1614 = vadd.f32 0.0, %v1613
        %v1615 = vpop.f32.mrf.mxu0
        %v1616 = vpop.f32.mrf.mxu0
        %v1617 = vpop.f32.mrf.mxu0
        %1618 = vdwg.mxu0
        %1619 = vrot.lane.b32.xlu0 %v759, 88
        %v1620 = vpop.permute.xlu0 %1619
        %1621 = vrot.lane.b32.xlu0 %v767, 88
        %v1622 = vpop.permute.xlu0 %1621
        %v1625 = vsel %vm1235, %v1482, 0
        %v1628 = vsel %vm1235, %v1483, 0
        %v1631 = vsel %vm1505, %v1622, 0
        %1633 = vmatprep.subr.bf16.mxu0 0
        %1634 = vmatpush1.bf16.msra.mxu0 0
        %1635 = vmatprep.subr.bf16.mxu0 0
        %1636 = vmatpush1.bf16.msra.mxu0 0
        %1637 = vmatprep.subr.bf16.mxu0 0
        %1638 = vmatpush1.bf16.msra.mxu0 0
        %1639 = vmatprep.subr.bf16.mxu0 0
        %1640 = vmatpush1.bf16.msra.mxu0 0
        %1641 = vmatprep.subr.bf16.mxu0 0
        %1642 = vmatpush1.bf16.msra.mxu0 0
        %1643 = vmatprep.subr.bf16.mxu0 0
        %1644 = vmatpush1.bf16.msra.mxu0 0
        %1645 = vmatprep.subr.bf16.mxu0 0
        %1646 = vmatpush1.bf16.msra.mxu0 %v1631
        %1647 = vmatprep.subr.bf16.mxu0 0
        %1648 = vmatpush1.bf16.msra.mxu0 %v1620
        %1649 = vmatprep.subr.bf16.mxu0 0
        %1650 = vmatpush2.bf16.msra.mxu0 0
        %1651 = vmatprep.subr.bf16.mxu0 0
        %1652 = vmatpush2.bf16.msra.mxu0 0
        %1653 = vmatprep.subr.bf16.mxu0 0
        %1654 = vmatpush2.bf16.msra.mxu0 0
        %1655 = vmatprep.subr.bf16.mxu0 0
        %1656 = vmatpush2.bf16.msra.mxu0 0
        %1657 = vmatprep.subr.bf16.mxu0 0
        %1658 = vmatpush2.bf16.msra.mxu0 0
        %1659 = vmatprep.subr.bf16.mxu0 0
        %1660 = vmatpush2.bf16.msra.mxu0 0
        %1661 = vmatprep.subr.bf16.mxu0 0
        %1662 = vmatpush2.bf16.msra.mxu0 0
        %1663 = vmatprep.subr.bf16.mxu0 0
        %1664 = vmatpush2.bf16.msra.mxu0 0
        %1665 = vmatprep.mubr.bf16.mxu0 0
        %1666 = vmatmul.mubr.bf16.gmra.mxu0 %v1625
        %v1667 = vpop.f32.mrf.mxu0
        %v1668 = vadd.f32 0.0, %v1667
        %v1669 = vpop.f32.mrf.mxu0
        %v1670 = vpop.f32.mrf.mxu0
        %v1671 = vadd.f32 0.0, %v1670
        %v1672 = vpop.f32.mrf.mxu0
        %1673 = vmatprep.mubr.bf16.mxu0 0
        %1674 = vmatmul.mubr.bf16.gmra.mxu0 %v1628
        %v1675 = vpop.f32.mrf.mxu0
        %v1676 = vadd.f32 0.0, %v1675
        %v1677 = vpop.f32.mrf.mxu0
        %v1678 = vpop.f32.mrf.mxu0
        %v1679 = vpop.f32.mrf.mxu0
        %1680 = vdwg.mxu0
        %1681 = vrot.lane.b32.xlu0 %v760, 88
        %v1682 = vpop.permute.xlu0 %1681
        %1683 = vrot.lane.b32.xlu0 %v768, 88
        %v1684 = vpop.permute.xlu0 %1683
        %v1687 = vsel %vm1235, %v1484, 0
        %v1690 = vsel %vm1235, %v1485, 0
        %v1693 = vsel %vm1505, %v1684, 0
        %1695 = vmatprep.subr.bf16.mxu0 0
        %1696 = vmatpush1.bf16.msra.mxu0 0
        %1697 = vmatprep.subr.bf16.mxu0 0
        %1698 = vmatpush1.bf16.msra.mxu0 0
        %1699 = vmatprep.subr.bf16.mxu0 0
        %1700 = vmatpush1.bf16.msra.mxu0 0
        %1701 = vmatprep.subr.bf16.mxu0 0
        %1702 = vmatpush1.bf16.msra.mxu0 0
        %1703 = vmatprep.subr.bf16.mxu0 0
        %1704 = vmatpush1.bf16.msra.mxu0 0
        %1705 = vmatprep.subr.bf16.mxu0 0
        %1706 = vmatpush1.bf16.msra.mxu0 0
        %1707 = vmatprep.subr.bf16.mxu0 0
        %1708 = vmatpush1.bf16.msra.mxu0 %v1693
        %1709 = vmatprep.subr.bf16.mxu0 0
        %1710 = vmatpush1.bf16.msra.mxu0 %v1682
        %1711 = vmatprep.subr.bf16.mxu0 0
        %1712 = vmatpush2.bf16.msra.mxu0 0
        %1713 = vmatprep.subr.bf16.mxu0 0
        %1714 = vmatpush2.bf16.msra.mxu0 0
        %1715 = vmatprep.subr.bf16.mxu0 0
        %1716 = vmatpush2.bf16.msra.mxu0 0
        %1717 = vmatprep.subr.bf16.mxu0 0
        %1718 = vmatpush2.bf16.msra.mxu0 0
        %1719 = vmatprep.subr.bf16.mxu0 0
        %1720 = vmatpush2.bf16.msra.mxu0 0
        %1721 = vmatprep.subr.bf16.mxu0 0
        %1722 = vmatpush2.bf16.msra.mxu0 0
        %1723 = vmatprep.subr.bf16.mxu0 0
        %1724 = vmatpush2.bf16.msra.mxu0 0
        %1725 = vmatprep.subr.bf16.mxu0 0
        %1726 = vmatpush2.bf16.msra.mxu0 0
        %1727 = vmatprep.mubr.bf16.mxu0 0
        %1728 = vmatmul.mubr.bf16.gmra.mxu0 %v1687
        %v1729 = vpop.f32.mrf.mxu0
        %v1730 = vadd.f32 0.0, %v1729
        %v1731 = vpop.f32.mrf.mxu0
        %v1732 = vpop.f32.mrf.mxu0
        %v1733 = vadd.f32 0.0, %v1732
        %v1734 = vpop.f32.mrf.mxu0
        %1735 = vmatprep.mubr.bf16.mxu0 0
        %1736 = vmatmul.mubr.bf16.gmra.mxu0 %v1690
        %v1737 = vpop.f32.mrf.mxu0
        %v1738 = vadd.f32 0.0, %v1737
        %v1739 = vpop.f32.mrf.mxu0
        %v1740 = vpop.f32.mrf.mxu0
        %v1741 = vpop.f32.mrf.mxu0
        %1742 = vdwg.mxu0
        %1743 = vrot.lane.b32.xlu0 %v761, 88
        %v1744 = vpop.permute.xlu0 %1743
        %1745 = vrot.lane.b32.xlu0 %v769, 88
        %v1746 = vpop.permute.xlu0 %1745
        %v1749 = vsel %vm1235, %v1486, 0
        %v1752 = vsel %vm1235, %v1487, 0
        %v1755 = vsel %vm1505, %v1746, 0
        %1757 = vmatprep.subr.bf16.mxu0 0
        %1758 = vmatpush1.bf16.msra.mxu0 0
        %1759 = vmatprep.subr.bf16.mxu0 0
        %1760 = vmatpush1.bf16.msra.mxu0 0
        %1761 = vmatprep.subr.bf16.mxu0 0
        %1762 = vmatpush1.bf16.msra.mxu0 0
        %1763 = vmatprep.subr.bf16.mxu0 0
        %1764 = vmatpush1.bf16.msra.mxu0 0
        %1765 = vmatprep.subr.bf16.mxu0 0
        %1766 = vmatpush1.bf16.msra.mxu0 0
        %1767 = vmatprep.subr.bf16.mxu0 0
        %1768 = vmatpush1.bf16.msra.mxu0 0
        %1769 = vmatprep.subr.bf16.mxu0 0
        %1770 = vmatpush1.bf16.msra.mxu0 %v1755
        %1771 = vmatprep.subr.bf16.mxu0 0
        %1772 = vmatpush1.bf16.msra.mxu0 %v1744
        %1773 = vmatprep.subr.bf16.mxu0 0
        %1774 = vmatpush2.bf16.msra.mxu0 0
        %1775 = vmatprep.subr.bf16.mxu0 0
        %1776 = vmatpush2.bf16.msra.mxu0 0
        %1777 = vmatprep.subr.bf16.mxu0 0
        %1778 = vmatpush2.bf16.msra.mxu0 0
        %1779 = vmatprep.subr.bf16.mxu0 0
        %1780 = vmatpush2.bf16.msra.mxu0 0
        %1781 = vmatprep.subr.bf16.mxu0 0
        %1782 = vmatpush2.bf16.msra.mxu0 0
        %1783 = vmatprep.subr.bf16.mxu0 0
        %1784 = vmatpush2.bf16.msra.mxu0 0
        %1785 = vmatprep.subr.bf16.mxu0 0
        %1786 = vmatpush2.bf16.msra.mxu0 0
        %1787 = vmatprep.subr.bf16.mxu0 0
        %1788 = vmatpush2.bf16.msra.mxu0 0
        %1789 = vmatprep.mubr.bf16.mxu0 0
        %1790 = vmatmul.mubr.bf16.gmra.mxu0 %v1749
        %v1791 = vpop.f32.mrf.mxu0
        %v1792 = vadd.f32 0.0, %v1791
        %v1793 = vpop.f32.mrf.mxu0
        %v1794 = vpop.f32.mrf.mxu0
        %v1795 = vadd.f32 0.0, %v1794
        %v1796 = vpop.f32.mrf.mxu0
        %1797 = vmatprep.mubr.bf16.mxu0 0
        %1798 = vmatmul.mubr.bf16.gmra.mxu0 %v1752
        %v1799 = vpop.f32.mrf.mxu0
        %v1800 = vadd.f32 0.0, %v1799
        %v1801 = vpop.f32.mrf.mxu0
        %v1802 = vpop.f32.mrf.mxu0
        %v1803 = vpop.f32.mrf.mxu0
        %1804 = vdwg.mxu0
        %1805 = vrot.lane.b32.xlu0 %v762, 88
        %v1806 = vpop.permute.xlu0 %1805
        %1807 = vrot.lane.b32.xlu0 %v770, 88
        %v1808 = vpop.permute.xlu0 %1807
        %v1811 = vsel %vm1235, %v1488, 0
        %v1814 = vsel %vm1235, %v1489, 0
        %v1817 = vsel %vm1505, %v1808, 0
        %1819 = vmatprep.subr.bf16.mxu0 0
        %1820 = vmatpush1.bf16.msra.mxu0 0
        %1821 = vmatprep.subr.bf16.mxu0 0
        %1822 = vmatpush1.bf16.msra.mxu0 0
        %1823 = vmatprep.subr.bf16.mxu0 0
        %1824 = vmatpush1.bf16.msra.mxu0 0
        %1825 = vmatprep.subr.bf16.mxu0 0
        %1826 = vmatpush1.bf16.msra.mxu0 0
        %1827 = vmatprep.subr.bf16.mxu0 0
        %1828 = vmatpush1.bf16.msra.mxu0 0
        %1829 = vmatprep.subr.bf16.mxu0 0
        %1830 = vmatpush1.bf16.msra.mxu0 0
        %1831 = vmatprep.subr.bf16.mxu0 0
        %1832 = vmatpush1.bf16.msra.mxu0 %v1817
        %1833 = vmatprep.subr.bf16.mxu0 0
        %1834 = vmatpush1.bf16.msra.mxu0 %v1806
        %1835 = vmatprep.subr.bf16.mxu0 0
        %1836 = vmatpush2.bf16.msra.mxu0 0
        %1837 = vmatprep.subr.bf16.mxu0 0
        %1838 = vmatpush2.bf16.msra.mxu0 0
        %1839 = vmatprep.subr.bf16.mxu0 0
        %1840 = vmatpush2.bf16.msra.mxu0 0
        %1841 = vmatprep.subr.bf16.mxu0 0
        %1842 = vmatpush2.bf16.msra.mxu0 0
        %1843 = vmatprep.subr.bf16.mxu0 0
        %1844 = vmatpush2.bf16.msra.mxu0 0
        %1845 = vmatprep.subr.bf16.mxu0 0
        %1846 = vmatpush2.bf16.msra.mxu0 0
        %1847 = vmatprep.subr.bf16.mxu0 0
        %1848 = vmatpush2.bf16.msra.mxu0 0
        %1849 = vmatprep.subr.bf16.mxu0 0
        %1850 = vmatpush2.bf16.msra.mxu0 0
        %1851 = vmatprep.mubr.bf16.mxu0 0
        %1852 = vmatmul.mubr.bf16.gmra.mxu0 %v1811
        %v1853 = vpop.f32.mrf.mxu0
        %v1854 = vadd.f32 0.0, %v1853
        %v1855 = vpop.f32.mrf.mxu0
        %v1856 = vpop.f32.mrf.mxu0
        %v1857 = vadd.f32 0.0, %v1856
        %v1858 = vpop.f32.mrf.mxu0
        %1859 = vmatprep.mubr.bf16.mxu0 0
        %1860 = vmatmul.mubr.bf16.gmra.mxu0 %v1814
        %v1861 = vpop.f32.mrf.mxu0
        %v1862 = vadd.f32 0.0, %v1861
        %v1863 = vpop.f32.mrf.mxu0
        %v1864 = vpop.f32.mrf.mxu0
        %v1865 = vpop.f32.mrf.mxu0
        %1866 = vdwg.mxu0
        %1867 = vrot.lane.b32.xlu0 %v763, 88
        %v1868 = vpop.permute.xlu0 %1867
        %1869 = vrot.lane.b32.xlu0 %v771, 88
        %v1870 = vpop.permute.xlu0 %1869
        %v1873 = vsel %vm1235, %v1490, 0
        %v1876 = vsel %vm1235, %v1491, 0
        %v1879 = vsel %vm1505, %v1870, 0
        %1881 = vmatprep.subr.bf16.mxu0 0
        %1882 = vmatpush1.bf16.msra.mxu0 0
        %1883 = vmatprep.subr.bf16.mxu0 0
        %1884 = vmatpush1.bf16.msra.mxu0 0
        %1885 = vmatprep.subr.bf16.mxu0 0
        %1886 = vmatpush1.bf16.msra.mxu0 0
        %1887 = vmatprep.subr.bf16.mxu0 0
        %1888 = vmatpush1.bf16.msra.mxu0 0
        %1889 = vmatprep.subr.bf16.mxu0 0
        %1890 = vmatpush1.bf16.msra.mxu0 0
        %1891 = vmatprep.subr.bf16.mxu0 0
        %1892 = vmatpush1.bf16.msra.mxu0 0
        %1893 = vmatprep.subr.bf16.mxu0 0
        %1894 = vmatpush1.bf16.msra.mxu0 %v1879
        %1895 = vmatprep.subr.bf16.mxu0 0
        %1896 = vmatpush1.bf16.msra.mxu0 %v1868
        %1897 = vmatprep.subr.bf16.mxu0 0
        %1898 = vmatpush2.bf16.msra.mxu0 0
        %1899 = vmatprep.subr.bf16.mxu0 0
        %1900 = vmatpush2.bf16.msra.mxu0 0
        %1901 = vmatprep.subr.bf16.mxu0 0
        %1902 = vmatpush2.bf16.msra.mxu0 0
        %1903 = vmatprep.subr.bf16.mxu0 0
        %1904 = vmatpush2.bf16.msra.mxu0 0
        %1905 = vmatprep.subr.bf16.mxu0 0
        %1906 = vmatpush2.bf16.msra.mxu0 0
        %1907 = vmatprep.subr.bf16.mxu0 0
        %1908 = vmatpush2.bf16.msra.mxu0 0
        %1909 = vmatprep.subr.bf16.mxu0 0
        %1910 = vmatpush2.bf16.msra.mxu0 0
        %1911 = vmatprep.subr.bf16.mxu0 0
        %1912 = vmatpush2.bf16.msra.mxu0 0
        %1913 = vmatprep.mubr.bf16.mxu0 0
        %1914 = vmatmul.mubr.bf16.gmra.mxu0 %v1873
        %v1915 = vpop.f32.mrf.mxu0
        %v1916 = vadd.f32 0.0, %v1915
        %v1917 = vpop.f32.mrf.mxu0
        %v1918 = vpop.f32.mrf.mxu0
        %v1919 = vadd.f32 0.0, %v1918
        %v1920 = vpop.f32.mrf.mxu0
        %1921 = vmatprep.mubr.bf16.mxu0 0
        %1922 = vmatmul.mubr.bf16.gmra.mxu0 %v1876
        %v1923 = vpop.f32.mrf.mxu0
        %v1924 = vadd.f32 0.0, %v1923
        %v1925 = vpop.f32.mrf.mxu0
        %v1926 = vpop.f32.mrf.mxu0
        %v1927 = vpop.f32.mrf.mxu0
        %1928 = vdwg.mxu0
        %1929 = vrot.lane.b32.xlu0 %v764, 88
        %v1930 = vpop.permute.xlu0 %1929
        %1931 = vrot.lane.b32.xlu0 %v772, 88
        %v1932 = vpop.permute.xlu0 %1931
        %v1935 = vsel %vm1235, %v1492, 0
        %v1938 = vsel %vm1235, %v1493, 0
        %v1941 = vsel %vm1505, %v1932, 0
        %1943 = vmatprep.subr.bf16.mxu0 0
        %1944 = vmatpush1.bf16.msra.mxu0 0
        %1945 = vmatprep.subr.bf16.mxu0 0
        %1946 = vmatpush1.bf16.msra.mxu0 0
        %1947 = vmatprep.subr.bf16.mxu0 0
        %1948 = vmatpush1.bf16.msra.mxu0 0
        %1949 = vmatprep.subr.bf16.mxu0 0
        %1950 = vmatpush1.bf16.msra.mxu0 0
        %1951 = vmatprep.subr.bf16.mxu0 0
        %1952 = vmatpush1.bf16.msra.mxu0 0
        %1953 = vmatprep.subr.bf16.mxu0 0
        %1954 = vmatpush1.bf16.msra.mxu0 0
        %1955 = vmatprep.subr.bf16.mxu0 0
        %1956 = vmatpush1.bf16.msra.mxu0 %v1941
        %1957 = vmatprep.subr.bf16.mxu0 0
        %1958 = vmatpush1.bf16.msra.mxu0 %v1930
        %1959 = vmatprep.subr.bf16.mxu0 0
        %1960 = vmatpush2.bf16.msra.mxu0 0
        %1961 = vmatprep.subr.bf16.mxu0 0
        %1962 = vmatpush2.bf16.msra.mxu0 0
        %1963 = vmatprep.subr.bf16.mxu0 0
        %1964 = vmatpush2.bf16.msra.mxu0 0
        %1965 = vmatprep.subr.bf16.mxu0 0
        %1966 = vmatpush2.bf16.msra.mxu0 0
        %1967 = vmatprep.subr.bf16.mxu0 0
        %1968 = vmatpush2.bf16.msra.mxu0 0
        %1969 = vmatprep.subr.bf16.mxu0 0
        %1970 = vmatpush2.bf16.msra.mxu0 0
        %1971 = vmatprep.subr.bf16.mxu0 0
        %1972 = vmatpush2.bf16.msra.mxu0 0
        %1973 = vmatprep.subr.bf16.mxu0 0
        %1974 = vmatpush2.bf16.msra.mxu0 0
        %1975 = vmatprep.mubr.bf16.mxu0 0
        %1976 = vmatmul.mubr.bf16.gmra.mxu0 %v1935
        %v1977 = vpop.f32.mrf.mxu0
        %v1978 = vadd.f32 0.0, %v1977
        %v1979 = vpop.f32.mrf.mxu0
        %v1980 = vpop.f32.mrf.mxu0
        %v1981 = vadd.f32 0.0, %v1980
        %v1982 = vpop.f32.mrf.mxu0
        %1983 = vmatprep.mubr.bf16.mxu0 0
        %1984 = vmatmul.mubr.bf16.gmra.mxu0 %v1938
        %v1985 = vpop.f32.mrf.mxu0
        %v1986 = vadd.f32 0.0, %v1985
        %v1987 = vpop.f32.mrf.mxu0
        %v1988 = vpop.f32.mrf.mxu0
        %v1989 = vpop.f32.mrf.mxu0
        %1990 = vdwg.mxu0
        %v1991 = vrcp.pop %v1286
        %v1992 = vrcp.pop %v1371
        %v1993 = vrcp.pop %v1456
        %v1994 = vrcp.pop %v1289
        %v1995 = vrcp.pop %v1374
        %v1996 = vrcp.pop %v1459
        %v1997 = vrcp.pop %v1292
        %v1998 = vrcp.pop %v1377
        %v1999 = vrcp.pop %v1462
        %v2000 = vrcp.pop %v1295
        %v2001 = vrcp.pop %v1380
        %v2002 = vrcp.pop %v1465
        %v2003 = vrcp.pop %v1298
        %v2004 = vrcp.pop %v1383
        %v2005 = vrcp.pop %v1468
        %v2006 = vrcp.pop %v1301
        %v2007 = vrcp.pop %v1386
        %v2008 = vrcp.pop %v1471
        %v2009 = vrcp.pop %v1304
        %v2010 = vrcp.pop %v1389
        %v2011 = vrcp.pop %v1474
        %v2012 = vrcp.pop %v1307
        %v2013 = vrcp.pop %v1392
        %v2014 = vrcp.pop %v1477
        %2016 = vset.pattern.permute.xlu0 0
        %2017 = vperm.xlu0 %2016, %v1991
        %v2018 = vpop.permute.xlu0 %2017
        %2021 = vset.pattern.permute.xlu0 0
        %2022 = vperm.xlu0 %2021, %v1992
        %v2023 = vpop.permute.xlu0 %2022
        %2026 = vset.pattern.permute.xlu0 0
        %2027 = vperm.xlu0 %2026, %v1993
        %v2028 = vpop.permute.xlu0 %2027
        %2031 = vset.pattern.permute.xlu0 0
        %2032 = vperm.xlu0 %2031, %v1994
        %v2033 = vpop.permute.xlu0 %2032
        %2036 = vset.pattern.permute.xlu0 0
        %2037 = vperm.xlu0 %2036, %v1995
        %v2038 = vpop.permute.xlu0 %2037
        %2041 = vset.pattern.permute.xlu0 0
        %2042 = vperm.xlu0 %2041, %v1996
        %v2043 = vpop.permute.xlu0 %2042
        %2046 = vset.pattern.permute.xlu0 0
        %2047 = vperm.xlu0 %2046, %v1997
        %v2048 = vpop.permute.xlu0 %2047
        %2051 = vset.pattern.permute.xlu0 0
        %2052 = vperm.xlu0 %2051, %v1998
        %v2053 = vpop.permute.xlu0 %2052
        %2056 = vset.pattern.permute.xlu0 0
        %2057 = vperm.xlu0 %2056, %v1999
        %v2058 = vpop.permute.xlu0 %2057
        %2061 = vset.pattern.permute.xlu0 0
        %2062 = vperm.xlu0 %2061, %v2000
        %v2063 = vpop.permute.xlu0 %2062
        %2066 = vset.pattern.permute.xlu0 0
        %2067 = vperm.xlu0 %2066, %v2001
        %v2068 = vpop.permute.xlu0 %2067
        %2071 = vset.pattern.permute.xlu0 0
        %2072 = vperm.xlu0 %2071, %v2002
        %v2073 = vpop.permute.xlu0 %2072
        %2076 = vset.pattern.permute.xlu0 0
        %2077 = vperm.xlu0 %2076, %v2003
        %v2078 = vpop.permute.xlu0 %2077
        %2081 = vset.pattern.permute.xlu0 0
        %2082 = vperm.xlu0 %2081, %v2004
        %v2083 = vpop.permute.xlu0 %2082
        %2086 = vset.pattern.permute.xlu0 0
        %2087 = vperm.xlu0 %2086, %v2005
        %v2088 = vpop.permute.xlu0 %2087
        %2091 = vset.pattern.permute.xlu0 0
        %2092 = vperm.xlu0 %2091, %v2006
        %v2093 = vpop.permute.xlu0 %2092
        %2096 = vset.pattern.permute.xlu0 0
        %2097 = vperm.xlu0 %2096, %v2007
        %v2098 = vpop.permute.xlu0 %2097
        %2101 = vset.pattern.permute.xlu0 0
        %2102 = vperm.xlu0 %2101, %v2008
        %v2103 = vpop.permute.xlu0 %2102
        %2106 = vset.pattern.permute.xlu0 0
        %2107 = vperm.xlu0 %2106, %v2009
        %v2108 = vpop.permute.xlu0 %2107
        %2111 = vset.pattern.permute.xlu0 0
        %2112 = vperm.xlu0 %2111, %v2010
        %v2113 = vpop.permute.xlu0 %2112
        %2116 = vset.pattern.permute.xlu0 0
        %2117 = vperm.xlu0 %2116, %v2011
        %v2118 = vpop.permute.xlu0 %2117
        %2121 = vset.pattern.permute.xlu0 0
        %2122 = vperm.xlu0 %2121, %v2012
        %v2123 = vpop.permute.xlu0 %2122
        %2126 = vset.pattern.permute.xlu0 0
        %2127 = vperm.xlu0 %2126, %v2013
        %v2128 = vpop.permute.xlu0 %2127
        %2131 = vset.pattern.permute.xlu0 0
        %2132 = vperm.xlu0 %2131, %v2014
        %v2133 = vpop.permute.xlu0 %2132
        %v2135 = vmul.f32 %v1544, %v2018
        %v2136 = vmul.f32 %v1547, %v2023
        %v2137 = vmul.f32 %v1552, %v2028
        %v2138 = vmul.f32 %v1606, %v2033
        %v2139 = vmul.f32 %v1609, %v2038
        %v2140 = vmul.f32 %v1614, %v2043
        %v2141 = vmul.f32 %v1668, %v2048
        %v2142 = vmul.f32 %v1671, %v2053
        %v2143 = vmul.f32 %v1676, %v2058
        %v2144 = vmul.f32 %v1730, %v2063
        %v2145 = vmul.f32 %v1733, %v2068
        %v2146 = vmul.f32 %v1738, %v2073
        %v2147 = vmul.f32 %v1792, %v2078
        %v2148 = vmul.f32 %v1795, %v2083
        %v2149 = vmul.f32 %v1800, %v2088
        %v2150 = vmul.f32 %v1854, %v2093
        %v2151 = vmul.f32 %v1857, %v2098
        %v2152 = vmul.f32 %v1862, %v2103
        %v2153 = vmul.f32 %v1916, %v2108
        %v2154 = vmul.f32 %v1919, %v2113
        %v2155 = vmul.f32 %v1924, %v2118
        %v2156 = vmul.f32 %v1978, %v2123
        %v2157 = vmul.f32 %v1981, %v2128
        %v2158 = vmul.f32 %v1986, %v2133
        %v2159 = vpack.c.bf16 %v2138, %v2135
        %v2160 = vpack.c.bf16 %v2144, %v2141
        %v2161 = vpack.c.bf16 %v2150, %v2147
        %v2162 = vpack.c.bf16 %v2156, %v2153
        %v2163 = vld [vmem:[%s4] sm:$0xf]
        %v2164 = vpack.c.bf16 %v2139, %v2136
        %v2165 = vpack.c.bf16 %v2145, %v2142
        %v2166 = vpack.c.bf16 %v2151, %v2148
        %v2167 = vpack.c.bf16 %v2157, %v2154
        %v2168 = vld [vmem:[%s4 + $0x8] sm:$0xf]
        %v2170 = vsel %vm779, %v2164, 0
        %v2173 = vsel %vm779, %v2165, 0
        %v2176 = vsel %vm779, %v2166, 0
        %v2179 = vsel %vm779, %v2167, 0
        %v2182 = vsel %vm1505, %v2168, 0
        %2184 = vmatprep.subr.bf16.mxu0 0
        %2185 = vmatpush1.bf16.msra.mxu0 0
        %2186 = vmatprep.subr.bf16.mxu0 0
        %2187 = vmatpush1.bf16.msra.mxu0 0
        %2188 = vmatprep.subr.bf16.mxu0 0
        %2189 = vmatpush1.bf16.msra.mxu0 0
        %2190 = vmatprep.subr.bf16.mxu0 0
        %2191 = vmatpush1.bf16.msra.mxu0 0
        %2192 = vmatprep.subr.bf16.mxu0 0
        %2193 = vmatpush1.bf16.msra.mxu0 0
        %2194 = vmatprep.subr.bf16.mxu0 0
        %2195 = vmatpush1.bf16.msra.mxu0 0
        %2196 = vmatprep.subr.bf16.mxu0 0
        %2197 = vmatpush1.bf16.msra.mxu0 0
        %2198 = vmatprep.subr.bf16.mxu0 0
        %2199 = vmatpush1.bf16.msra.mxu0 %v2182
        %2200 = vmatprep.subr.bf16.mxu0 0
        %2201 = vmatpush2.bf16.msra.mxu0 0
        %2202 = vmatprep.subr.bf16.mxu0 0
        %2203 = vmatpush2.bf16.msra.mxu0 0
        %2204 = vmatprep.subr.bf16.mxu0 0
        %2205 = vmatpush2.bf16.msra.mxu0 0
        %2206 = vmatprep.subr.bf16.mxu0 0
        %2207 = vmatpush2.bf16.msra.mxu0 0
        %2208 = vmatprep.subr.bf16.mxu0 0
        %2209 = vmatpush2.bf16.msra.mxu0 0
        %2210 = vmatprep.subr.bf16.mxu0 0
        %2211 = vmatpush2.bf16.msra.mxu0 0
        %2212 = vmatprep.subr.bf16.mxu0 0
        %2213 = vmatpush2.bf16.msra.mxu0 0
        %2214 = vmatprep.subr.bf16.mxu0 0
        %2215 = vmatpush2.bf16.msra.mxu0 0
        %2216 = vmatprep.mubr.bf16.mxu0 0
        %2217 = vmatmul.mubr.bf16.gmra.mxu0 %v2170
        %v2218 = vpop.f32.mrf.mxu0
        %v2219 = vadd.f32 0.0, %v2218
        %v2220 = vpop.f32.mrf.mxu0
        %v2221 = vpop.f32.mrf.mxu0
        %v2222 = vadd.f32 0.0, %v2221
        %v2223 = vpop.f32.mrf.mxu0
        %2224 = vmatprep.mubr.bf16.mxu0 0
        %2225 = vmatmul.mubr.bf16.gmra.mxu0 %v2173
        %v2226 = vpop.f32.mrf.mxu0
        %v2227 = vadd.f32 0.0, %v2226
        %v2228 = vpop.f32.mrf.mxu0
        %v2229 = vpop.f32.mrf.mxu0
        %v2230 = vadd.f32 0.0, %v2229
        %v2231 = vpop.f32.mrf.mxu0
        %2232 = vmatprep.mubr.bf16.mxu0 0
        %2233 = vmatmul.mubr.bf16.gmra.mxu0 %v2176
        %v2234 = vpop.f32.mrf.mxu0
        %v2235 = vadd.f32 0.0, %v2234
        %v2236 = vpop.f32.mrf.mxu0
        %v2237 = vpop.f32.mrf.mxu0
        %v2238 = vadd.f32 0.0, %v2237
        %v2239 = vpop.f32.mrf.mxu0
        %2240 = vmatprep.mubr.bf16.mxu0 0
        %2241 = vmatmul.mubr.bf16.gmra.mxu0 %v2179
        %v2242 = vpop.f32.mrf.mxu0
        %v2243 = vadd.f32 0.0, %v2242
        %v2244 = vpop.f32.mrf.mxu0
        %v2245 = vpop.f32.mrf.mxu0
        %v2246 = vadd.f32 0.0, %v2245
        %v2247 = vpop.f32.mrf.mxu0
        %2248 = vdwg.mxu0
        %v2250 = vsel %vm779, %v2159, 0
        %v2253 = vsel %vm779, %v2160, 0
        %v2256 = vsel %vm779, %v2161, 0
        %v2259 = vsel %vm779, %v2162, 0
        %v2262 = vsel %vm1505, %v2163, 0
        %2264 = vmatprep.subr.bf16.mxu0 0
        %2265 = vmatpush1.bf16.msra.mxu0 0
        %2266 = vmatprep.subr.bf16.mxu0 0
        %2267 = vmatpush1.bf16.msra.mxu0 0
        %2268 = vmatprep.subr.bf16.mxu0 0
        %2269 = vmatpush1.bf16.msra.mxu0 0
        %2270 = vmatprep.subr.bf16.mxu0 0
        %2271 = vmatpush1.bf16.msra.mxu0 0
        %2272 = vmatprep.subr.bf16.mxu0 0
        %2273 = vmatpush1.bf16.msra.mxu0 0
        %2274 = vmatprep.subr.bf16.mxu0 0
        %2275 = vmatpush1.bf16.msra.mxu0 0
        %2276 = vmatprep.subr.bf16.mxu0 0
        %2277 = vmatpush1.bf16.msra.mxu0 0
        %2278 = vmatprep.subr.bf16.mxu0 0
        %2279 = vmatpush1.bf16.msra.mxu0 %v2262
        %2280 = vmatprep.subr.bf16.mxu0 0
        %2281 = vmatpush2.bf16.msra.mxu0 0
        %2282 = vmatprep.subr.bf16.mxu0 0
        %2283 = vmatpush2.bf16.msra.mxu0 0
        %2284 = vmatprep.subr.bf16.mxu0 0
        %2285 = vmatpush2.bf16.msra.mxu0 0
        %2286 = vmatprep.subr.bf16.mxu0 0
        %2287 = vmatpush2.bf16.msra.mxu0 0
        %2288 = vmatprep.subr.bf16.mxu0 0
        %2289 = vmatpush2.bf16.msra.mxu0 0
        %2290 = vmatprep.subr.bf16.mxu0 0
        %2291 = vmatpush2.bf16.msra.mxu0 0
        %2292 = vmatprep.subr.bf16.mxu0 0
        %2293 = vmatpush2.bf16.msra.mxu0 0
        %2294 = vmatprep.subr.bf16.mxu0 0
        %2295 = vmatpush2.bf16.msra.mxu0 0
        %2296 = vmatprep.mubr.bf16.mxu0 0
        %2297 = vmatmul.mubr.bf16.gmra.mxu0 %v2250
        %v2298 = vpop.f32.mrf.mxu0
        %v2299 = vadd.f32 %v2219, %v2298
        %v2300 = vpop.f32.mrf.mxu0
        %v2301 = vpop.f32.mrf.mxu0
        %v2302 = vadd.f32 %v2222, %v2301
        %v2303 = vpop.f32.mrf.mxu0
        %2304 = vmatprep.mubr.bf16.mxu0 0
        %2305 = vmatmul.mubr.bf16.gmra.mxu0 %v2253
        %v2306 = vpop.f32.mrf.mxu0
        %v2307 = vadd.f32 %v2227, %v2306
        %v2308 = vpop.f32.mrf.mxu0
        %v2309 = vpop.f32.mrf.mxu0
        %v2310 = vadd.f32 %v2230, %v2309
        %v2311 = vpop.f32.mrf.mxu0
        %2312 = vmatprep.mubr.bf16.mxu0 0
        %2313 = vmatmul.mubr.bf16.gmra.mxu0 %v2256
        %v2314 = vpop.f32.mrf.mxu0
        %v2315 = vadd.f32 %v2235, %v2314
        %v2316 = vpop.f32.mrf.mxu0
        %v2317 = vpop.f32.mrf.mxu0
        %v2318 = vadd.f32 %v2238, %v2317
        %v2319 = vpop.f32.mrf.mxu0
        %2320 = vmatprep.mubr.bf16.mxu0 0
        %2321 = vmatmul.mubr.bf16.gmra.mxu0 %v2259
        %v2322 = vpop.f32.mrf.mxu0
        %v2323 = vadd.f32 %v2243, %v2322
        %v2324 = vpop.f32.mrf.mxu0
        %v2325 = vpop.f32.mrf.mxu0
        %v2326 = vadd.f32 %v2246, %v2325
        %v2327 = vpop.f32.mrf.mxu0
        %2328 = vdwg.mxu0
        %v2329 = vpack.c.bf16 %v2140, %v2137
        %v2330 = vpack.c.bf16 %v2146, %v2143
        %v2331 = vpack.c.bf16 %v2152, %v2149
        %v2332 = vpack.c.bf16 %v2158, %v2155
        %v2333 = vld [vmem:[%s4 + $0x10] sm:$0xf]
        %v2335 = vsel %vm779, %v2329, 0
        %v2338 = vsel %vm779, %v2330, 0
        %v2341 = vsel %vm779, %v2331, 0
        %v2344 = vsel %vm779, %v2332, 0
        %v2347 = vsel %vm1505, %v2333, 0
        %2349 = vmatprep.subr.bf16.mxu0 0
        %2350 = vmatpush1.bf16.msra.mxu0 0
        %2351 = vmatprep.subr.bf16.mxu0 0
        %2352 = vmatpush1.bf16.msra.mxu0 0
        %2353 = vmatprep.subr.bf16.mxu0 0
        %2354 = vmatpush1.bf16.msra.mxu0 0
        %2355 = vmatprep.subr.bf16.mxu0 0
        %2356 = vmatpush1.bf16.msra.mxu0 0
        %2357 = vmatprep.subr.bf16.mxu0 0
        %2358 = vmatpush1.bf16.msra.mxu0 0
        %2359 = vmatprep.subr.bf16.mxu0 0
        %2360 = vmatpush1.bf16.msra.mxu0 0
        %2361 = vmatprep.subr.bf16.mxu0 0
        %2362 = vmatpush1.bf16.msra.mxu0 0
        %2363 = vmatprep.subr.bf16.mxu0 0
        %2364 = vmatpush1.bf16.msra.mxu0 %v2347
        %2365 = vmatprep.subr.bf16.mxu0 0
        %2366 = vmatpush2.bf16.msra.mxu0 0
        %2367 = vmatprep.subr.bf16.mxu0 0
        %2368 = vmatpush2.bf16.msra.mxu0 0
        %2369 = vmatprep.subr.bf16.mxu0 0
        %2370 = vmatpush2.bf16.msra.mxu0 0
        %2371 = vmatprep.subr.bf16.mxu0 0
        %2372 = vmatpush2.bf16.msra.mxu0 0
        %2373 = vmatprep.subr.bf16.mxu0 0
        %2374 = vmatpush2.bf16.msra.mxu0 0
        %2375 = vmatprep.subr.bf16.mxu0 0
        %2376 = vmatpush2.bf16.msra.mxu0 0
        %2377 = vmatprep.subr.bf16.mxu0 0
        %2378 = vmatpush2.bf16.msra.mxu0 0
        %2379 = vmatprep.subr.bf16.mxu0 0
        %2380 = vmatpush2.bf16.msra.mxu0 0
        %2381 = vmatprep.mubr.bf16.mxu0 0
        %2382 = vmatmul.mubr.bf16.gmra.mxu0 %v2335
        %v2383 = vpop.f32.mrf.mxu0
        %v2384 = vadd.f32 0.0, %v2383
        %v2385 = vpop.f32.mrf.mxu0
        %v2386 = vpop.f32.mrf.mxu0
        %v2387 = vadd.f32 0.0, %v2386
        %v2388 = vpop.f32.mrf.mxu0
        %2389 = vmatprep.mubr.bf16.mxu0 0
        %2390 = vmatmul.mubr.bf16.gmra.mxu0 %v2338
        %v2391 = vpop.f32.mrf.mxu0
        %v2392 = vadd.f32 0.0, %v2391
        %v2393 = vpop.f32.mrf.mxu0
        %v2394 = vpop.f32.mrf.mxu0
        %v2395 = vadd.f32 0.0, %v2394
        %v2396 = vpop.f32.mrf.mxu0
        %2397 = vmatprep.mubr.bf16.mxu0 0
        %2398 = vmatmul.mubr.bf16.gmra.mxu0 %v2341
        %v2399 = vpop.f32.mrf.mxu0
        %v2400 = vadd.f32 0.0, %v2399
        %v2401 = vpop.f32.mrf.mxu0
        %v2402 = vpop.f32.mrf.mxu0
        %v2403 = vadd.f32 0.0, %v2402
        %v2404 = vpop.f32.mrf.mxu0
        %2405 = vmatprep.mubr.bf16.mxu0 0
        %2406 = vmatmul.mubr.bf16.gmra.mxu0 %v2344
        %v2407 = vpop.f32.mrf.mxu0
        %v2408 = vadd.f32 0.0, %v2407
        %v2409 = vpop.f32.mrf.mxu0
        %v2410 = vpop.f32.mrf.mxu0
        %v2411 = vadd.f32 0.0, %v2410
        %v2412 = vpop.f32.mrf.mxu0
        %2413 = vdwg.mxu0
        %v2414 = vadd.f32 %v2299, %v2384
        %v2415 = vadd.f32 %v2302, %v2387
        %v2416 = vadd.f32 %v2307, %v2392
        %v2417 = vadd.f32 %v2310, %v2395
        %v2418 = vadd.f32 %v2315, %v2400
        %v2419 = vadd.f32 %v2318, %v2403
        %v2420 = vadd.f32 %v2323, %v2408
        %v2421 = vadd.f32 %v2326, %v2411
        %2422 = vrot.lane.b32.xlu0 %v757, 64
        %v2423 = vpop.permute.xlu0 %2422
        %2424 = vrot.lane.b32.xlu0 %v757, 48
        %v2425 = vpop.permute.xlu0 %2424
        %2426 = vrot.lane.b32.xlu0 %v765, 48
        %v2427 = vpop.permute.xlu0 %2426
        %v2429 = vsel %vm779, %v2423, 0
        %v2432 = vsel %vm779, %v2425, 0
        %v2435 = vsel %vm779, %v2427, 0
        %2437 = vmatprep.subr.bf16.mxu0 0
        %2438 = vmatpush1.bf16.xpose.msra.mxu0 0
        %2439 = vmatprep.subr.bf16.mxu0 0
        %2440 = vmatpush1.bf16.xpose.msra.mxu0 0
        %2441 = vmatprep.subr.bf16.mxu0 0
        %2442 = vmatpush1.bf16.xpose.msra.mxu0 0
        %2443 = vmatprep.subr.bf16.mxu0 0
        %2444 = vmatpush1.bf16.xpose.msra.mxu0 0
        %2445 = vmatprep.subr.bf16.mxu0 0
        %2446 = vmatpush1.bf16.xpose.msra.mxu0 0
        %2447 = vmatprep.subr.bf16.mxu0 0
        %2448 = vmatpush1.bf16.xpose.msra.mxu0 0
        %2449 = vmatprep.subr.bf16.mxu0 0
        %2450 = vmatpush1.bf16.xpose.msra.mxu0 %v2435
        %2451 = vmatprep.subr.bf16.mxu0 0
        %2452 = vmatpush1.bf16.xpose.msra.mxu0 %v2432
        %2453 = vmatprep.subr.bf16.mxu0 0
        %2454 = vmatpush2.bf16.xpose.msra.mxu0 0
        %2455 = vmatprep.subr.bf16.mxu0 0
        %2456 = vmatpush2.bf16.xpose.msra.mxu0 0
        %2457 = vmatprep.subr.bf16.mxu0 0
        %2458 = vmatpush2.bf16.xpose.msra.mxu0 0
        %2459 = vmatprep.subr.bf16.mxu0 0
        %2460 = vmatpush2.bf16.xpose.msra.mxu0 0
        %2461 = vmatprep.subr.bf16.mxu0 0
        %2462 = vmatpush2.bf16.xpose.msra.mxu0 0
        %2463 = vmatprep.subr.bf16.mxu0 0
        %2464 = vmatpush2.bf16.xpose.msra.mxu0 0
        %2465 = vmatprep.subr.bf16.mxu0 0
        %2466 = vmatpush2.bf16.xpose.msra.mxu0 0
        %2467 = vmatprep.subr.bf16.mxu0 0
        %2468 = vmatpush2.bf16.xpose.msra.mxu0 0
        %2469 = vmatprep.mubr.bf16.mxu0 0
        %2470 = vmatmul.mubr.bf16.gmra.mxu0 %v2429
        %v2471 = vpop.f32.mrf.mxu0
        %v2472 = vadd.f32 0.0, %v2471
        %v2473 = vpop.f32.mrf.mxu0
        %v2474 = vpop.f32.mrf.mxu0
        %v2475 = vadd.f32 0.0, %v2474
        %v2476 = vpop.f32.mrf.mxu0
        %2477 = vdwg.mxu0
        %2478 = vrot.lane.b32.xlu0 %v758, 64
        %v2479 = vpop.permute.xlu0 %2478
        %2480 = vrot.lane.b32.xlu0 %v758, 48
        %v2481 = vpop.permute.xlu0 %2480
        %2482 = vrot.lane.b32.xlu0 %v766, 48
        %v2483 = vpop.permute.xlu0 %2482
        %v2485 = vsel %vm779, %v2479, 0
        %v2488 = vsel %vm779, %v2481, 0
        %v2491 = vsel %vm779, %v2483, 0
        %2493 = vmatprep.subr.bf16.mxu0 0
        %2494 = vmatpush1.bf16.xpose.msra.mxu0 0
        %2495 = vmatprep.subr.bf16.mxu0 0
        %2496 = vmatpush1.bf16.xpose.msra.mxu0 0
        %2497 = vmatprep.subr.bf16.mxu0 0
        %2498 = vmatpush1.bf16.xpose.msra.mxu0 0
        %2499 = vmatprep.subr.bf16.mxu0 0
        %2500 = vmatpush1.bf16.xpose.msra.mxu0 0
        %2501 = vmatprep.subr.bf16.mxu0 0
        %2502 = vmatpush1.bf16.xpose.msra.mxu0 0
        %2503 = vmatprep.subr.bf16.mxu0 0
        %2504 = vmatpush1.bf16.xpose.msra.mxu0 0
        %2505 = vmatprep.subr.bf16.mxu0 0
        %2506 = vmatpush1.bf16.xpose.msra.mxu0 %v2491
        %2507 = vmatprep.subr.bf16.mxu0 0
        %2508 = vmatpush1.bf16.xpose.msra.mxu0 %v2488
        %2509 = vmatprep.subr.bf16.mxu0 0
        %2510 = vmatpush2.bf16.xpose.msra.mxu0 0
        %2511 = vmatprep.subr.bf16.mxu0 0
        %2512 = vmatpush2.bf16.xpose.msra.mxu0 0
        %2513 = vmatprep.subr.bf16.mxu0 0
        %2514 = vmatpush2.bf16.xpose.msra.mxu0 0
        %2515 = vmatprep.subr.bf16.mxu0 0
        %2516 = vmatpush2.bf16.xpose.msra.mxu0 0
        %2517 = vmatprep.subr.bf16.mxu0 0
        %2518 = vmatpush2.bf16.xpose.msra.mxu0 0
        %2519 = vmatprep.subr.bf16.mxu0 0
        %2520 = vmatpush2.bf16.xpose.msra.mxu0 0
        %2521 = vmatprep.subr.bf16.mxu0 0
        %2522 = vmatpush2.bf16.xpose.msra.mxu0 0
        %2523 = vmatprep.subr.bf16.mxu0 0
        %2524 = vmatpush2.bf16.xpose.msra.mxu0 0
        %2525 = vmatprep.mubr.bf16.mxu0 0
        %2526 = vmatmul.mubr.bf16.gmra.mxu0 %v2485
        %v2527 = vpop.f32.mrf.mxu0
        %v2528 = vadd.f32 0.0, %v2527
        %v2529 = vpop.f32.mrf.mxu0
        %v2530 = vpop.f32.mrf.mxu0
        %v2531 = vadd.f32 0.0, %v2530
        %v2532 = vpop.f32.mrf.mxu0
        %2533 = vdwg.mxu0
        %2534 = vrot.lane.b32.xlu0 %v759, 64
        %v2535 = vpop.permute.xlu0 %2534
        %2536 = vrot.lane.b32.xlu0 %v759, 48
        %v2537 = vpop.permute.xlu0 %2536
        %2538 = vrot.lane.b32.xlu0 %v767, 48
        %v2539 = vpop.permute.xlu0 %2538
        %v2541 = vsel %vm779, %v2535, 0
        %v2544 = vsel %vm779, %v2537, 0
        %v2547 = vsel %vm779, %v2539, 0
        %2549 = vmatprep.subr.bf16.mxu0 0
        %2550 = vmatpush1.bf16.xpose.msra.mxu0 0
        %2551 = vmatprep.subr.bf16.mxu0 0
        %2552 = vmatpush1.bf16.xpose.msra.mxu0 0
        %2553 = vmatprep.subr.bf16.mxu0 0
        %2554 = vmatpush1.bf16.xpose.msra.mxu0 0
        %2555 = vmatprep.subr.bf16.mxu0 0
        %2556 = vmatpush1.bf16.xpose.msra.mxu0 0
        %2557 = vmatprep.subr.bf16.mxu0 0
        %2558 = vmatpush1.bf16.xpose.msra.mxu0 0
        %2559 = vmatprep.subr.bf16.mxu0 0
        %2560 = vmatpush1.bf16.xpose.msra.mxu0 0
        %2561 = vmatprep.subr.bf16.mxu0 0
        %2562 = vmatpush1.bf16.xpose.msra.mxu0 %v2547
        %2563 = vmatprep.subr.bf16.mxu0 0
        %2564 = vmatpush1.bf16.xpose.msra.mxu0 %v2544
        %2565 = vmatprep.subr.bf16.mxu0 0
        %2566 = vmatpush2.bf16.xpose.msra.mxu0 0
        %2567 = vmatprep.subr.bf16.mxu0 0
        %2568 = vmatpush2.bf16.xpose.msra.mxu0 0
        %2569 = vmatprep.subr.bf16.mxu0 0
        %2570 = vmatpush2.bf16.xpose.msra.mxu0 0
        %2571 = vmatprep.subr.bf16.mxu0 0
        %2572 = vmatpush2.bf16.xpose.msra.mxu0 0
        %2573 = vmatprep.subr.bf16.mxu0 0
        %2574 = vmatpush2.bf16.xpose.msra.mxu0 0
        %2575 = vmatprep.subr.bf16.mxu0 0
        %2576 = vmatpush2.bf16.xpose.msra.mxu0 0
        %2577 = vmatprep.subr.bf16.mxu0 0
        %2578 = vmatpush2.bf16.xpose.msra.mxu0 0
        %2579 = vmatprep.subr.bf16.mxu0 0
        %2580 = vmatpush2.bf16.xpose.msra.mxu0 0
        %2581 = vmatprep.mubr.bf16.mxu0 0
        %2582 = vmatmul.mubr.bf16.gmra.mxu0 %v2541
        %v2583 = vpop.f32.mrf.mxu0
        %v2584 = vadd.f32 0.0, %v2583
        %v2585 = vpop.f32.mrf.mxu0
        %v2586 = vpop.f32.mrf.mxu0
        %v2587 = vadd.f32 0.0, %v2586
        %v2588 = vpop.f32.mrf.mxu0
        %2589 = vdwg.mxu0
        %2590 = vrot.lane.b32.xlu0 %v760, 64
        %v2591 = vpop.permute.xlu0 %2590
        %2592 = vrot.lane.b32.xlu0 %v760, 48
        %v2593 = vpop.permute.xlu0 %2592
        %2594 = vrot.lane.b32.xlu0 %v768, 48
        %v2595 = vpop.permute.xlu0 %2594
        %v2597 = vsel %vm779, %v2591, 0
        %v2600 = vsel %vm779, %v2593, 0
        %v2603 = vsel %vm779, %v2595, 0
        %2605 = vmatprep.subr.bf16.mxu0 0
        %2606 = vmatpush1.bf16.xpose.msra.mxu0 0
        %2607 = vmatprep.subr.bf16.mxu0 0
        %2608 = vmatpush1.bf16.xpose.msra.mxu0 0
        %2609 = vmatprep.subr.bf16.mxu0 0
        %2610 = vmatpush1.bf16.xpose.msra.mxu0 0
        %2611 = vmatprep.subr.bf16.mxu0 0
        %2612 = vmatpush1.bf16.xpose.msra.mxu0 0
        %2613 = vmatprep.subr.bf16.mxu0 0
        %2614 = vmatpush1.bf16.xpose.msra.mxu0 0
        %2615 = vmatprep.subr.bf16.mxu0 0
        %2616 = vmatpush1.bf16.xpose.msra.mxu0 0
        %2617 = vmatprep.subr.bf16.mxu0 0
        %2618 = vmatpush1.bf16.xpose.msra.mxu0 %v2603
        %2619 = vmatprep.subr.bf16.mxu0 0
        %2620 = vmatpush1.bf16.xpose.msra.mxu0 %v2600
        %2621 = vmatprep.subr.bf16.mxu0 0
        %2622 = vmatpush2.bf16.xpose.msra.mxu0 0
        %2623 = vmatprep.subr.bf16.mxu0 0
        %2624 = vmatpush2.bf16.xpose.msra.mxu0 0
        %2625 = vmatprep.subr.bf16.mxu0 0
        %2626 = vmatpush2.bf16.xpose.msra.mxu0 0
        %2627 = vmatprep.subr.bf16.mxu0 0
        %2628 = vmatpush2.bf16.xpose.msra.mxu0 0
        %2629 = vmatprep.subr.bf16.mxu0 0
        %2630 = vmatpush2.bf16.xpose.msra.mxu0 0
        %2631 = vmatprep.subr.bf16.mxu0 0
        %2632 = vmatpush2.bf16.xpose.msra.mxu0 0
        %2633 = vmatprep.subr.bf16.mxu0 0
        %2634 = vmatpush2.bf16.xpose.msra.mxu0 0
        %2635 = vmatprep.subr.bf16.mxu0 0
        %2636 = vmatpush2.bf16.xpose.msra.mxu0 0
        %2637 = vmatprep.mubr.bf16.mxu0 0
        %2638 = vmatmul.mubr.bf16.gmra.mxu0 %v2597
        %v2639 = vpop.f32.mrf.mxu0
        %v2640 = vadd.f32 0.0, %v2639
        %v2641 = vpop.f32.mrf.mxu0
        %v2642 = vpop.f32.mrf.mxu0
        %v2643 = vadd.f32 0.0, %v2642
        %v2644 = vpop.f32.mrf.mxu0
        %2645 = vdwg.mxu0
        %2646 = vrot.lane.b32.xlu0 %v761, 64
        %v2647 = vpop.permute.xlu0 %2646
        %2648 = vrot.lane.b32.xlu0 %v761, 48
        %v2649 = vpop.permute.xlu0 %2648
        %2650 = vrot.lane.b32.xlu0 %v769, 48
        %v2651 = vpop.permute.xlu0 %2650
        %v2653 = vsel %vm779, %v2647, 0
        %v2656 = vsel %vm779, %v2649, 0
        %v2659 = vsel %vm779, %v2651, 0
        %2661 = vmatprep.subr.bf16.mxu0 0
        %2662 = vmatpush1.bf16.xpose.msra.mxu0 0
        %2663 = vmatprep.subr.bf16.mxu0 0
        %2664 = vmatpush1.bf16.xpose.msra.mxu0 0
        %2665 = vmatprep.subr.bf16.mxu0 0
        %2666 = vmatpush1.bf16.xpose.msra.mxu0 0
        %2667 = vmatprep.subr.bf16.mxu0 0
        %2668 = vmatpush1.bf16.xpose.msra.mxu0 0
        %2669 = vmatprep.subr.bf16.mxu0 0
        %2670 = vmatpush1.bf16.xpose.msra.mxu0 0
        %2671 = vmatprep.subr.bf16.mxu0 0
        %2672 = vmatpush1.bf16.xpose.msra.mxu0 0
        %2673 = vmatprep.subr.bf16.mxu0 0
        %2674 = vmatpush1.bf16.xpose.msra.mxu0 %v2659
        %2675 = vmatprep.subr.bf16.mxu0 0
        %2676 = vmatpush1.bf16.xpose.msra.mxu0 %v2656
        %2677 = vmatprep.subr.bf16.mxu0 0
        %2678 = vmatpush2.bf16.xpose.msra.mxu0 0
        %2679 = vmatprep.subr.bf16.mxu0 0
        %2680 = vmatpush2.bf16.xpose.msra.mxu0 0
        %2681 = vmatprep.subr.bf16.mxu0 0
        %2682 = vmatpush2.bf16.xpose.msra.mxu0 0
        %2683 = vmatprep.subr.bf16.mxu0 0
        %2684 = vmatpush2.bf16.xpose.msra.mxu0 0
        %2685 = vmatprep.subr.bf16.mxu0 0
        %2686 = vmatpush2.bf16.xpose.msra.mxu0 0
        %2687 = vmatprep.subr.bf16.mxu0 0
        %2688 = vmatpush2.bf16.xpose.msra.mxu0 0
        %2689 = vmatprep.subr.bf16.mxu0 0
        %2690 = vmatpush2.bf16.xpose.msra.mxu0 0
        %2691 = vmatprep.subr.bf16.mxu0 0
        %2692 = vmatpush2.bf16.xpose.msra.mxu0 0
        %2693 = vmatprep.mubr.bf16.mxu0 0
        %2694 = vmatmul.mubr.bf16.gmra.mxu0 %v2653
        %v2695 = vpop.f32.mrf.mxu0
        %v2696 = vadd.f32 0.0, %v2695
        %v2697 = vpop.f32.mrf.mxu0
        %v2698 = vpop.f32.mrf.mxu0
        %v2699 = vadd.f32 0.0, %v2698
        %v2700 = vpop.f32.mrf.mxu0
        %2701 = vdwg.mxu0
        %2702 = vrot.lane.b32.xlu0 %v762, 64
        %v2703 = vpop.permute.xlu0 %2702
        %2704 = vrot.lane.b32.xlu0 %v762, 48
        %v2705 = vpop.permute.xlu0 %2704
        %2706 = vrot.lane.b32.xlu0 %v770, 48
        %v2707 = vpop.permute.xlu0 %2706
        %v2709 = vsel %vm779, %v2703, 0
        %v2712 = vsel %vm779, %v2705, 0
        %v2715 = vsel %vm779, %v2707, 0
        %2717 = vmatprep.subr.bf16.mxu0 0
        %2718 = vmatpush1.bf16.xpose.msra.mxu0 0
        %2719 = vmatprep.subr.bf16.mxu0 0
        %2720 = vmatpush1.bf16.xpose.msra.mxu0 0
        %2721 = vmatprep.subr.bf16.mxu0 0
        %2722 = vmatpush1.bf16.xpose.msra.mxu0 0
        %2723 = vmatprep.subr.bf16.mxu0 0
        %2724 = vmatpush1.bf16.xpose.msra.mxu0 0
        %2725 = vmatprep.subr.bf16.mxu0 0
        %2726 = vmatpush1.bf16.xpose.msra.mxu0 0
        %2727 = vmatprep.subr.bf16.mxu0 0
        %2728 = vmatpush1.bf16.xpose.msra.mxu0 0
        %2729 = vmatprep.subr.bf16.mxu0 0
        %2730 = vmatpush1.bf16.xpose.msra.mxu0 %v2715
        %2731 = vmatprep.subr.bf16.mxu0 0
        %2732 = vmatpush1.bf16.xpose.msra.mxu0 %v2712
        %2733 = vmatprep.subr.bf16.mxu0 0
        %2734 = vmatpush2.bf16.xpose.msra.mxu0 0
        %2735 = vmatprep.subr.bf16.mxu0 0
        %2736 = vmatpush2.bf16.xpose.msra.mxu0 0
        %2737 = vmatprep.subr.bf16.mxu0 0
        %2738 = vmatpush2.bf16.xpose.msra.mxu0 0
        %2739 = vmatprep.subr.bf16.mxu0 0
        %2740 = vmatpush2.bf16.xpose.msra.mxu0 0
        %2741 = vmatprep.subr.bf16.mxu0 0
        %2742 = vmatpush2.bf16.xpose.msra.mxu0 0
        %2743 = vmatprep.subr.bf16.mxu0 0
        %2744 = vmatpush2.bf16.xpose.msra.mxu0 0
        %2745 = vmatprep.subr.bf16.mxu0 0
        %2746 = vmatpush2.bf16.xpose.msra.mxu0 0
        %2747 = vmatprep.subr.bf16.mxu0 0
        %2748 = vmatpush2.bf16.xpose.msra.mxu0 0
        %2749 = vmatprep.mubr.bf16.mxu0 0
        %2750 = vmatmul.mubr.bf16.gmra.mxu0 %v2709
        %v2751 = vpop.f32.mrf.mxu0
        %v2752 = vadd.f32 0.0, %v2751
        %v2753 = vpop.f32.mrf.mxu0
        %v2754 = vpop.f32.mrf.mxu0
        %v2755 = vadd.f32 0.0, %v2754
        %v2756 = vpop.f32.mrf.mxu0
        %2757 = vdwg.mxu0
        %2758 = vrot.lane.b32.xlu0 %v763, 64
        %v2759 = vpop.permute.xlu0 %2758
        %2760 = vrot.lane.b32.xlu0 %v763, 48
        %v2761 = vpop.permute.xlu0 %2760
        %2762 = vrot.lane.b32.xlu0 %v771, 48
        %v2763 = vpop.permute.xlu0 %2762
        %v2765 = vsel %vm779, %v2759, 0
        %v2768 = vsel %vm779, %v2761, 0
        %v2771 = vsel %vm779, %v2763, 0
        %2773 = vmatprep.subr.bf16.mxu0 0
        %2774 = vmatpush1.bf16.xpose.msra.mxu0 0
        %2775 = vmatprep.subr.bf16.mxu0 0
        %2776 = vmatpush1.bf16.xpose.msra.mxu0 0
        %2777 = vmatprep.subr.bf16.mxu0 0
        %2778 = vmatpush1.bf16.xpose.msra.mxu0 0
        %2779 = vmatprep.subr.bf16.mxu0 0
        %2780 = vmatpush1.bf16.xpose.msra.mxu0 0
        %2781 = vmatprep.subr.bf16.mxu0 0
        %2782 = vmatpush1.bf16.xpose.msra.mxu0 0
        %2783 = vmatprep.subr.bf16.mxu0 0
        %2784 = vmatpush1.bf16.xpose.msra.mxu0 0
        %2785 = vmatprep.subr.bf16.mxu0 0
        %2786 = vmatpush1.bf16.xpose.msra.mxu0 %v2771
        %2787 = vmatprep.subr.bf16.mxu0 0
        %2788 = vmatpush1.bf16.xpose.msra.mxu0 %v2768
        %2789 = vmatprep.subr.bf16.mxu0 0
        %2790 = vmatpush2.bf16.xpose.msra.mxu0 0
        %2791 = vmatprep.subr.bf16.mxu0 0
        %2792 = vmatpush2.bf16.xpose.msra.mxu0 0
        %2793 = vmatprep.subr.bf16.mxu0 0
        %2794 = vmatpush2.bf16.xpose.msra.mxu0 0
        %2795 = vmatprep.subr.bf16.mxu0 0
        %2796 = vmatpush2.bf16.xpose.msra.mxu0 0
        %2797 = vmatprep.subr.bf16.mxu0 0
        %2798 = vmatpush2.bf16.xpose.msra.mxu0 0
        %2799 = vmatprep.subr.bf16.mxu0 0
        %2800 = vmatpush2.bf16.xpose.msra.mxu0 0
        %2801 = vmatprep.subr.bf16.mxu0 0
        %2802 = vmatpush2.bf16.xpose.msra.mxu0 0
        %2803 = vmatprep.subr.bf16.mxu0 0
        %2804 = vmatpush2.bf16.xpose.msra.mxu0 0
        %2805 = vmatprep.mubr.bf16.mxu0 0
        %2806 = vmatmul.mubr.bf16.gmra.mxu0 %v2765
        %v2807 = vpop.f32.mrf.mxu0
        %v2808 = vadd.f32 0.0, %v2807
        %v2809 = vpop.f32.mrf.mxu0
        %v2810 = vpop.f32.mrf.mxu0
        %v2811 = vadd.f32 0.0, %v2810
        %v2812 = vpop.f32.mrf.mxu0
        %2813 = vdwg.mxu0
        %2814 = vrot.lane.b32.xlu0 %v764, 64
        %v2815 = vpop.permute.xlu0 %2814
        %2816 = vrot.lane.b32.xlu0 %v764, 48
        %v2817 = vpop.permute.xlu0 %2816
        %2818 = vrot.lane.b32.xlu0 %v772, 48
        %v2819 = vpop.permute.xlu0 %2818
        %v2821 = vsel %vm779, %v2815, 0
        %v2824 = vsel %vm779, %v2817, 0
        %v2827 = vsel %vm779, %v2819, 0
        %2829 = vmatprep.subr.bf16.mxu0 0
        %2830 = vmatpush1.bf16.xpose.msra.mxu0 0
        %2831 = vmatprep.subr.bf16.mxu0 0
        %2832 = vmatpush1.bf16.xpose.msra.mxu0 0
        %2833 = vmatprep.subr.bf16.mxu0 0
        %2834 = vmatpush1.bf16.xpose.msra.mxu0 0
        %2835 = vmatprep.subr.bf16.mxu0 0
        %2836 = vmatpush1.bf16.xpose.msra.mxu0 0
        %2837 = vmatprep.subr.bf16.mxu0 0
        %2838 = vmatpush1.bf16.xpose.msra.mxu0 0
        %2839 = vmatprep.subr.bf16.mxu0 0
        %2840 = vmatpush1.bf16.xpose.msra.mxu0 0
        %2841 = vmatprep.subr.bf16.mxu0 0
        %2842 = vmatpush1.bf16.xpose.msra.mxu0 %v2827
        %2843 = vmatprep.subr.bf16.mxu0 0
        %2844 = vmatpush1.bf16.xpose.msra.mxu0 %v2824
        %2845 = vmatprep.subr.bf16.mxu0 0
        %2846 = vmatpush2.bf16.xpose.msra.mxu0 0
        %2847 = vmatprep.subr.bf16.mxu0 0
        %2848 = vmatpush2.bf16.xpose.msra.mxu0 0
        %2849 = vmatprep.subr.bf16.mxu0 0
        %2850 = vmatpush2.bf16.xpose.msra.mxu0 0
        %2851 = vmatprep.subr.bf16.mxu0 0
        %2852 = vmatpush2.bf16.xpose.msra.mxu0 0
        %2853 = vmatprep.subr.bf16.mxu0 0
        %2854 = vmatpush2.bf16.xpose.msra.mxu0 0
        %2855 = vmatprep.subr.bf16.mxu0 0
        %2856 = vmatpush2.bf16.xpose.msra.mxu0 0
        %2857 = vmatprep.subr.bf16.mxu0 0
        %2858 = vmatpush2.bf16.xpose.msra.mxu0 0
        %2859 = vmatprep.subr.bf16.mxu0 0
        %2860 = vmatpush2.bf16.xpose.msra.mxu0 0
        %2861 = vmatprep.mubr.bf16.mxu0 0
        %2862 = vmatmul.mubr.bf16.gmra.mxu0 %v2821
        %v2863 = vpop.f32.mrf.mxu0
        %v2864 = vadd.f32 0.0, %v2863
        %v2865 = vpop.f32.mrf.mxu0
        %v2866 = vpop.f32.mrf.mxu0
        %v2867 = vadd.f32 0.0, %v2866
        %v2868 = vpop.f32.mrf.mxu0
        %2869 = vdwg.mxu0
        %v2870 = vsel %vm1226, %v2472, -1e+30
        %v2871 = vsel %vm1226, %v2528, -1e+30
        %v2872 = vsel %vm1226, %v2584, -1e+30
        %v2873 = vsel %vm1226, %v2640, -1e+30
        %v2874 = vsel %vm1226, %v2696, -1e+30
        %v2875 = vsel %vm1226, %v2752, -1e+30
        %v2876 = vsel %vm1226, %v2808, -1e+30
        %v2877 = vsel %vm1226, %v2864, -1e+30
        %v2878 = vsel %vm1235, %v2870, -inf
        %2879 = vmax.xlane.f32.xlu0 %v2878
        %v2880 = vpop.xlane.xlu0 %2879
        %v2881 = vsel %vm1235, %v2871, -inf
        %2882 = vmax.xlane.f32.xlu0 %v2881
        %v2883 = vpop.xlane.xlu0 %2882
        %v2884 = vsel %vm1235, %v2872, -inf
        %2885 = vmax.xlane.f32.xlu0 %v2884
        %v2886 = vpop.xlane.xlu0 %2885
        %v2887 = vsel %vm1235, %v2873, -inf
        %2888 = vmax.xlane.f32.xlu0 %v2887
        %v2889 = vpop.xlane.xlu0 %2888
        %v2890 = vsel %vm1235, %v2874, -inf
        %2891 = vmax.xlane.f32.xlu0 %v2890
        %v2892 = vpop.xlane.xlu0 %2891
        %v2893 = vsel %vm1235, %v2875, -inf
        %2894 = vmax.xlane.f32.xlu0 %v2893
        %v2895 = vpop.xlane.xlu0 %2894
        %v2896 = vsel %vm1235, %v2876, -inf
        %2897 = vmax.xlane.f32.xlu0 %v2896
        %v2898 = vpop.xlane.xlu0 %2897
        %v2899 = vsel %vm1235, %v2877, -inf
        %2900 = vmax.xlane.f32.xlu0 %v2899
        %v2901 = vpop.xlane.xlu0 %2900
        %v2902 = vsub.f32 %v2870, %v2880
        %v2903 = vsub.f32 %v2871, %v2883
        %v2904 = vsub.f32 %v2872, %v2886
        %v2905 = vsub.f32 %v2873, %v2889
        %v2906 = vsub.f32 %v2874, %v2892
        %v2907 = vsub.f32 %v2875, %v2895
        %v2908 = vsub.f32 %v2876, %v2898
        %v2909 = vsub.f32 %v2877, %v2901
        %v2910 = vmul.f32 %v2902, 1.442695
        %v2911 = vpow.pop %v2910
        %v2912 = vmul.f32 %v2903, 1.442695
        %v2913 = vpow.pop %v2912
        %v2914 = vmul.f32 %v2904, 1.442695
        %v2915 = vpow.pop %v2914
        %v2916 = vmul.f32 %v2905, 1.442695
        %v2917 = vpow.pop %v2916
        %v2918 = vmul.f32 %v2906, 1.442695
        %v2919 = vpow.pop %v2918
        %v2920 = vmul.f32 %v2907, 1.442695
        %v2921 = vpow.pop %v2920
        %v2922 = vmul.f32 %v2908, 1.442695
        %v2923 = vpow.pop %v2922
        %v2924 = vmul.f32 %v2909, 1.442695
        %v2925 = vpow.pop %v2924
        %v2926 = vsel %vm1235, %v2911, 0.0
        %2927 = vadd.xlane.f32.xlu0 %v2926
        %v2928 = vpop.xlane.xlu0 %2927
        %v2929 = vsel %vm1235, %v2913, 0.0
        %2930 = vadd.xlane.f32.xlu0 %v2929
        %v2931 = vpop.xlane.xlu0 %2930
        %v2932 = vsel %vm1235, %v2915, 0.0
        %2933 = vadd.xlane.f32.xlu0 %v2932
        %v2934 = vpop.xlane.xlu0 %2933
        %v2935 = vsel %vm1235, %v2917, 0.0
        %2936 = vadd.xlane.f32.xlu0 %v2935
        %v2937 = vpop.xlane.xlu0 %2936
        %v2938 = vsel %vm1235, %v2919, 0.0
        %2939 = vadd.xlane.f32.xlu0 %v2938
        %v2940 = vpop.xlane.xlu0 %2939
        %v2941 = vsel %vm1235, %v2921, 0.0
        %2942 = vadd.xlane.f32.xlu0 %v2941
        %v2943 = vpop.xlane.xlu0 %2942
        %v2944 = vsel %vm1235, %v2923, 0.0
        %2945 = vadd.xlane.f32.xlu0 %v2944
        %v2946 = vpop.xlane.xlu0 %2945
        %v2947 = vsel %vm1235, %v2925, 0.0
        %2948 = vadd.xlane.f32.xlu0 %v2947
        %v2949 = vpop.xlane.xlu0 %2948
        %v2950 = vsel %vm1312, %v2475, -1e+30
        %v2951 = vsel %vm1312, %v2531, -1e+30
        %v2952 = vsel %vm1312, %v2587, -1e+30
        %v2953 = vsel %vm1312, %v2643, -1e+30
        %v2954 = vsel %vm1312, %v2699, -1e+30
        %v2955 = vsel %vm1312, %v2755, -1e+30
        %v2956 = vsel %vm1312, %v2811, -1e+30
        %v2957 = vsel %vm1312, %v2867, -1e+30
        %v2958 = vsel %vm1235, %v2950, -inf
        %2959 = vmax.xlane.f32.xlu0 %v2958
        %v2960 = vpop.xlane.xlu0 %2959
        %v2961 = vsel %vm1235, %v2951, -inf
        %2962 = vmax.xlane.f32.xlu0 %v2961
        %v2963 = vpop.xlane.xlu0 %2962
        %v2964 = vsel %vm1235, %v2952, -inf
        %2965 = vmax.xlane.f32.xlu0 %v2964
        %v2966 = vpop.xlane.xlu0 %2965
        %v2967 = vsel %vm1235, %v2953, -inf
        %2968 = vmax.xlane.f32.xlu0 %v2967
        %v2969 = vpop.xlane.xlu0 %2968
        %v2970 = vsel %vm1235, %v2954, -inf
        %2971 = vmax.xlane.f32.xlu0 %v2970
        %v2972 = vpop.xlane.xlu0 %2971
        %v2973 = vsel %vm1235, %v2955, -inf
        %2974 = vmax.xlane.f32.xlu0 %v2973
        %v2975 = vpop.xlane.xlu0 %2974
        %v2976 = vsel %vm1235, %v2956, -inf
        %2977 = vmax.xlane.f32.xlu0 %v2976
        %v2978 = vpop.xlane.xlu0 %2977
        %v2979 = vsel %vm1235, %v2957, -inf
        %2980 = vmax.xlane.f32.xlu0 %v2979
        %v2981 = vpop.xlane.xlu0 %2980
        %v2982 = vsub.f32 %v2950, %v2960
        %v2983 = vsub.f32 %v2951, %v2963
        %v2984 = vsub.f32 %v2952, %v2966
        %v2985 = vsub.f32 %v2953, %v2969
        %v2986 = vsub.f32 %v2954, %v2972
        %v2987 = vsub.f32 %v2955, %v2975
        %v2988 = vsub.f32 %v2956, %v2978
        %v2989 = vsub.f32 %v2957, %v2981
        %v2990 = vmul.f32 %v2982, 1.442695
        %v2991 = vpow.pop %v2990
        %v2992 = vmul.f32 %v2983, 1.442695
        %v2993 = vpow.pop %v2992
        %v2994 = vmul.f32 %v2984, 1.442695
        %v2995 = vpow.pop %v2994
        %v2996 = vmul.f32 %v2985, 1.442695
        %v2997 = vpow.pop %v2996
        %v2998 = vmul.f32 %v2986, 1.442695
        %v2999 = vpow.pop %v2998
        %v3000 = vmul.f32 %v2987, 1.442695
        %v3001 = vpow.pop %v3000
        %v3002 = vmul.f32 %v2988, 1.442695
        %v3003 = vpow.pop %v3002
        %v3004 = vmul.f32 %v2989, 1.442695
        %v3005 = vpow.pop %v3004
        %v3006 = vsel %vm1235, %v2991, 0.0
        %3007 = vadd.xlane.f32.xlu0 %v3006
        %v3008 = vpop.xlane.xlu0 %3007
        %v3009 = vsel %vm1235, %v2993, 0.0
        %3010 = vadd.xlane.f32.xlu0 %v3009
        %v3011 = vpop.xlane.xlu0 %3010
        %v3012 = vsel %vm1235, %v2995, 0.0
        %3013 = vadd.xlane.f32.xlu0 %v3012
        %v3014 = vpop.xlane.xlu0 %3013
        %v3015 = vsel %vm1235, %v2997, 0.0
        %3016 = vadd.xlane.f32.xlu0 %v3015
        %v3017 = vpop.xlane.xlu0 %3016
        %v3018 = vsel %vm1235, %v2999, 0.0
        %3019 = vadd.xlane.f32.xlu0 %v3018
        %v3020 = vpop.xlane.xlu0 %3019
        %v3021 = vsel %vm1235, %v3001, 0.0
        %3022 = vadd.xlane.f32.xlu0 %v3021
        %v3023 = vpop.xlane.xlu0 %3022
        %v3024 = vsel %vm1235, %v3003, 0.0
        %3025 = vadd.xlane.f32.xlu0 %v3024
        %v3026 = vpop.xlane.xlu0 %3025
        %v3027 = vsel %vm1235, %v3005, 0.0
        %3028 = vadd.xlane.f32.xlu0 %v3027
        %v3029 = vpop.xlane.xlu0 %3028
        %v3030 = vsel %vm1397, %v2475, -1e+30
        %v3031 = vsel %vm1397, %v2531, -1e+30
        %v3032 = vsel %vm1397, %v2587, -1e+30
        %v3033 = vsel %vm1397, %v2643, -1e+30
        %v3034 = vsel %vm1397, %v2699, -1e+30
        %v3035 = vsel %vm1397, %v2755, -1e+30
        %v3036 = vsel %vm1397, %v2811, -1e+30
        %v3037 = vsel %vm1397, %v2867, -1e+30
        %v3038 = vsel %vm1235, %v3030, -inf
        %3039 = vmax.xlane.f32.xlu0 %v3038
        %v3040 = vpop.xlane.xlu0 %3039
        %v3041 = vsel %vm1235, %v3031, -inf
        %3042 = vmax.xlane.f32.xlu0 %v3041
        %v3043 = vpop.xlane.xlu0 %3042
        %v3044 = vsel %vm1235, %v3032, -inf
        %3045 = vmax.xlane.f32.xlu0 %v3044
        %v3046 = vpop.xlane.xlu0 %3045
        %v3047 = vsel %vm1235, %v3033, -inf
        %3048 = vmax.xlane.f32.xlu0 %v3047
        %v3049 = vpop.xlane.xlu0 %3048
        %v3050 = vsel %vm1235, %v3034, -inf
        %3051 = vmax.xlane.f32.xlu0 %v3050
        %v3052 = vpop.xlane.xlu0 %3051
        %v3053 = vsel %vm1235, %v3035, -inf
        %3054 = vmax.xlane.f32.xlu0 %v3053
        %v3055 = vpop.xlane.xlu0 %3054
        %v3056 = vsel %vm1235, %v3036, -inf
        %3057 = vmax.xlane.f32.xlu0 %v3056
        %v3058 = vpop.xlane.xlu0 %3057
        %v3059 = vsel %vm1235, %v3037, -inf
        %3060 = vmax.xlane.f32.xlu0 %v3059
        %v3061 = vpop.xlane.xlu0 %3060
        %v3062 = vsub.f32 %v3030, %v3040
        %v3063 = vsub.f32 %v3031, %v3043
        %v3064 = vsub.f32 %v3032, %v3046
        %v3065 = vsub.f32 %v3033, %v3049
        %v3066 = vsub.f32 %v3034, %v3052
        %v3067 = vsub.f32 %v3035, %v3055
        %v3068 = vsub.f32 %v3036, %v3058
        %v3069 = vsub.f32 %v3037, %v3061
        %v3070 = vmul.f32 %v3062, 1.442695
        %v3071 = vpow.pop %v3070
        %v3072 = vmul.f32 %v3063, 1.442695
        %v3073 = vpow.pop %v3072
        %v3074 = vmul.f32 %v3064, 1.442695
        %v3075 = vpow.pop %v3074
        %v3076 = vmul.f32 %v3065, 1.442695
        %v3077 = vpow.pop %v3076
        %v3078 = vmul.f32 %v3066, 1.442695
        %v3079 = vpow.pop %v3078
        %v3080 = vmul.f32 %v3067, 1.442695
        %v3081 = vpow.pop %v3080
        %v3082 = vmul.f32 %v3068, 1.442695
        %v3083 = vpow.pop %v3082
        %v3084 = vmul.f32 %v3069, 1.442695
        %v3085 = vpow.pop %v3084
        %v3086 = vsel %vm1235, %v3071, 0.0
        %3087 = vadd.xlane.f32.xlu0 %v3086
        %v3088 = vpop.xlane.xlu0 %3087
        %v3089 = vsel %vm1235, %v3073, 0.0
        %3090 = vadd.xlane.f32.xlu0 %v3089
        %v3091 = vpop.xlane.xlu0 %3090
        %v3092 = vsel %vm1235, %v3075, 0.0
        %3093 = vadd.xlane.f32.xlu0 %v3092
        %v3094 = vpop.xlane.xlu0 %3093
        %v3095 = vsel %vm1235, %v3077, 0.0
        %3096 = vadd.xlane.f32.xlu0 %v3095
        %v3097 = vpop.xlane.xlu0 %3096
        %v3098 = vsel %vm1235, %v3079, 0.0
        %3099 = vadd.xlane.f32.xlu0 %v3098
        %v3100 = vpop.xlane.xlu0 %3099
        %v3101 = vsel %vm1235, %v3081, 0.0
        %3102 = vadd.xlane.f32.xlu0 %v3101
        %v3103 = vpop.xlane.xlu0 %3102
        %v3104 = vsel %vm1235, %v3083, 0.0
        %3105 = vadd.xlane.f32.xlu0 %v3104
        %v3106 = vpop.xlane.xlu0 %3105
        %v3107 = vsel %vm1235, %v3085, 0.0
        %3108 = vadd.xlane.f32.xlu0 %v3107
        %v3109 = vpop.xlane.xlu0 %3108
        %v3110 = vpack.c.bf16 %v2991, %v2911
        %v3111 = vpack.c.bf16 %v3071, %v3071
        %v3112 = vpack.c.bf16 %v2993, %v2913
        %v3113 = vpack.c.bf16 %v3073, %v3073
        %v3114 = vpack.c.bf16 %v2995, %v2915
        %v3115 = vpack.c.bf16 %v3075, %v3075
        %v3116 = vpack.c.bf16 %v2997, %v2917
        %v3117 = vpack.c.bf16 %v3077, %v3077
        %v3118 = vpack.c.bf16 %v2999, %v2919
        %v3119 = vpack.c.bf16 %v3079, %v3079
        %v3120 = vpack.c.bf16 %v3001, %v2921
        %v3121 = vpack.c.bf16 %v3081, %v3081
        %v3122 = vpack.c.bf16 %v3003, %v2923
        %v3123 = vpack.c.bf16 %v3083, %v3083
        %v3124 = vpack.c.bf16 %v3005, %v2925
        %v3125 = vpack.c.bf16 %v3085, %v3085
        %3126 = vrot.lane.b32.xlu0 %v757, 24
        %v3127 = vpop.permute.xlu0 %3126
        %3128 = vrot.lane.b32.xlu0 %v765, 24
        %v3129 = vpop.permute.xlu0 %3128
        %v3132 = vsel %vm1235, %v3110, 0
        %v3135 = vsel %vm1235, %v3111, 0
        %v3138 = vsel %vm1505, %v3129, 0
        %3140 = vmatprep.subr.bf16.mxu0 0
        %3141 = vmatpush1.bf16.msra.mxu0 0
        %3142 = vmatprep.subr.bf16.mxu0 0
        %3143 = vmatpush1.bf16.msra.mxu0 0
        %3144 = vmatprep.subr.bf16.mxu0 0
        %3145 = vmatpush1.bf16.msra.mxu0 0
        %3146 = vmatprep.subr.bf16.mxu0 0
        %3147 = vmatpush1.bf16.msra.mxu0 0
        %3148 = vmatprep.subr.bf16.mxu0 0
        %3149 = vmatpush1.bf16.msra.mxu0 0
        %3150 = vmatprep.subr.bf16.mxu0 0
        %3151 = vmatpush1.bf16.msra.mxu0 0
        %3152 = vmatprep.subr.bf16.mxu0 0
        %3153 = vmatpush1.bf16.msra.mxu0 %v3138
        %3154 = vmatprep.subr.bf16.mxu0 0
        %3155 = vmatpush1.bf16.msra.mxu0 %v3127
        %3156 = vmatprep.subr.bf16.mxu0 0
        %3157 = vmatpush2.bf16.msra.mxu0 0
        %3158 = vmatprep.subr.bf16.mxu0 0
        %3159 = vmatpush2.bf16.msra.mxu0 0
        %3160 = vmatprep.subr.bf16.mxu0 0
        %3161 = vmatpush2.bf16.msra.mxu0 0
        %3162 = vmatprep.subr.bf16.mxu0 0
        %3163 = vmatpush2.bf16.msra.mxu0 0
        %3164 = vmatprep.subr.bf16.mxu0 0
        %3165 = vmatpush2.bf16.msra.mxu0 0
        %3166 = vmatprep.subr.bf16.mxu0 0
        %3167 = vmatpush2.bf16.msra.mxu0 0
        %3168 = vmatprep.subr.bf16.mxu0 0
        %3169 = vmatpush2.bf16.msra.mxu0 0
        %3170 = vmatprep.subr.bf16.mxu0 0
        %3171 = vmatpush2.bf16.msra.mxu0 0
        %3172 = vmatprep.mubr.bf16.mxu0 0
        %3173 = vmatmul.mubr.bf16.gmra.mxu0 %v3132
        %v3174 = vpop.f32.mrf.mxu0
        %v3175 = vadd.f32 0.0, %v3174
        %v3176 = vpop.f32.mrf.mxu0
        %v3177 = vpop.f32.mrf.mxu0
        %v3178 = vadd.f32 0.0, %v3177
        %v3179 = vpop.f32.mrf.mxu0
        %3180 = vmatprep.mubr.bf16.mxu0 0
        %3181 = vmatmul.mubr.bf16.gmra.mxu0 %v3135
        %v3182 = vpop.f32.mrf.mxu0
        %v3183 = vadd.f32 0.0, %v3182
        %v3184 = vpop.f32.mrf.mxu0
        %v3185 = vpop.f32.mrf.mxu0
        %v3186 = vpop.f32.mrf.mxu0
        %3187 = vdwg.mxu0
        %3188 = vrot.lane.b32.xlu0 %v758, 24
        %v3189 = vpop.permute.xlu0 %3188
        %3190 = vrot.lane.b32.xlu0 %v766, 24
        %v3191 = vpop.permute.xlu0 %3190
        %v3194 = vsel %vm1235, %v3112, 0
        %v3197 = vsel %vm1235, %v3113, 0
        %v3200 = vsel %vm1505, %v3191, 0
        %3202 = vmatprep.subr.bf16.mxu0 0
        %3203 = vmatpush1.bf16.msra.mxu0 0
        %3204 = vmatprep.subr.bf16.mxu0 0
        %3205 = vmatpush1.bf16.msra.mxu0 0
        %3206 = vmatprep.subr.bf16.mxu0 0
        %3207 = vmatpush1.bf16.msra.mxu0 0
        %3208 = vmatprep.subr.bf16.mxu0 0
        %3209 = vmatpush1.bf16.msra.mxu0 0
        %3210 = vmatprep.subr.bf16.mxu0 0
        %3211 = vmatpush1.bf16.msra.mxu0 0
        %3212 = vmatprep.subr.bf16.mxu0 0
        %3213 = vmatpush1.bf16.msra.mxu0 0
        %3214 = vmatprep.subr.bf16.mxu0 0
        %3215 = vmatpush1.bf16.msra.mxu0 %v3200
        %3216 = vmatprep.subr.bf16.mxu0 0
        %3217 = vmatpush1.bf16.msra.mxu0 %v3189
        %3218 = vmatprep.subr.bf16.mxu0 0
        %3219 = vmatpush2.bf16.msra.mxu0 0
        %3220 = vmatprep.subr.bf16.mxu0 0
        %3221 = vmatpush2.bf16.msra.mxu0 0
        %3222 = vmatprep.subr.bf16.mxu0 0
        %3223 = vmatpush2.bf16.msra.mxu0 0
        %3224 = vmatprep.subr.bf16.mxu0 0
        %3225 = vmatpush2.bf16.msra.mxu0 0
        %3226 = vmatprep.subr.bf16.mxu0 0
        %3227 = vmatpush2.bf16.msra.mxu0 0
        %3228 = vmatprep.subr.bf16.mxu0 0
        %3229 = vmatpush2.bf16.msra.mxu0 0
        %3230 = vmatprep.subr.bf16.mxu0 0
        %3231 = vmatpush2.bf16.msra.mxu0 0
        %3232 = vmatprep.subr.bf16.mxu0 0
        %3233 = vmatpush2.bf16.msra.mxu0 0
        %3234 = vmatprep.mubr.bf16.mxu0 0
        %3235 = vmatmul.mubr.bf16.gmra.mxu0 %v3194
        %v3236 = vpop.f32.mrf.mxu0
        %v3237 = vadd.f32 0.0, %v3236
        %v3238 = vpop.f32.mrf.mxu0
        %v3239 = vpop.f32.mrf.mxu0
        %v3240 = vadd.f32 0.0, %v3239
        %v3241 = vpop.f32.mrf.mxu0
        %3242 = vmatprep.mubr.bf16.mxu0 0
        %3243 = vmatmul.mubr.bf16.gmra.mxu0 %v3197
        %v3244 = vpop.f32.mrf.mxu0
        %v3245 = vadd.f32 0.0, %v3244
        %v3246 = vpop.f32.mrf.mxu0
        %v3247 = vpop.f32.mrf.mxu0
        %v3248 = vpop.f32.mrf.mxu0
        %3249 = vdwg.mxu0
        %3250 = vrot.lane.b32.xlu0 %v759, 24
        %v3251 = vpop.permute.xlu0 %3250
        %3252 = vrot.lane.b32.xlu0 %v767, 24
        %v3253 = vpop.permute.xlu0 %3252
        %v3256 = vsel %vm1235, %v3114, 0
        %v3259 = vsel %vm1235, %v3115, 0
        %v3262 = vsel %vm1505, %v3253, 0
        %3264 = vmatprep.subr.bf16.mxu0 0
        %3265 = vmatpush1.bf16.msra.mxu0 0
        %3266 = vmatprep.subr.bf16.mxu0 0
        %3267 = vmatpush1.bf16.msra.mxu0 0
        %3268 = vmatprep.subr.bf16.mxu0 0
        %3269 = vmatpush1.bf16.msra.mxu0 0
        %3270 = vmatprep.subr.bf16.mxu0 0
        %3271 = vmatpush1.bf16.msra.mxu0 0
        %3272 = vmatprep.subr.bf16.mxu0 0
        %3273 = vmatpush1.bf16.msra.mxu0 0
        %3274 = vmatprep.subr.bf16.mxu0 0
        %3275 = vmatpush1.bf16.msra.mxu0 0
        %3276 = vmatprep.subr.bf16.mxu0 0
        %3277 = vmatpush1.bf16.msra.mxu0 %v3262
        %3278 = vmatprep.subr.bf16.mxu0 0
        %3279 = vmatpush1.bf16.msra.mxu0 %v3251
        %3280 = vmatprep.subr.bf16.mxu0 0
        %3281 = vmatpush2.bf16.msra.mxu0 0
        %3282 = vmatprep.subr.bf16.mxu0 0
        %3283 = vmatpush2.bf16.msra.mxu0 0
        %3284 = vmatprep.subr.bf16.mxu0 0
        %3285 = vmatpush2.bf16.msra.mxu0 0
        %3286 = vmatprep.subr.bf16.mxu0 0
        %3287 = vmatpush2.bf16.msra.mxu0 0
        %3288 = vmatprep.subr.bf16.mxu0 0
        %3289 = vmatpush2.bf16.msra.mxu0 0
        %3290 = vmatprep.subr.bf16.mxu0 0
        %3291 = vmatpush2.bf16.msra.mxu0 0
        %3292 = vmatprep.subr.bf16.mxu0 0
        %3293 = vmatpush2.bf16.msra.mxu0 0
        %3294 = vmatprep.subr.bf16.mxu0 0
        %3295 = vmatpush2.bf16.msra.mxu0 0
        %3296 = vmatprep.mubr.bf16.mxu0 0
        %3297 = vmatmul.mubr.bf16.gmra.mxu0 %v3256
        %v3298 = vpop.f32.mrf.mxu0
        %v3299 = vadd.f32 0.0, %v3298
        %v3300 = vpop.f32.mrf.mxu0
        %v3301 = vpop.f32.mrf.mxu0
        %v3302 = vadd.f32 0.0, %v3301
        %v3303 = vpop.f32.mrf.mxu0
        %3304 = vmatprep.mubr.bf16.mxu0 0
        %3305 = vmatmul.mubr.bf16.gmra.mxu0 %v3259
        %v3306 = vpop.f32.mrf.mxu0
        %v3307 = vadd.f32 0.0, %v3306
        %v3308 = vpop.f32.mrf.mxu0
        %v3309 = vpop.f32.mrf.mxu0
        %v3310 = vpop.f32.mrf.mxu0
        %3311 = vdwg.mxu0
        %3312 = vrot.lane.b32.xlu0 %v760, 24
        %v3313 = vpop.permute.xlu0 %3312
        %3314 = vrot.lane.b32.xlu0 %v768, 24
        %v3315 = vpop.permute.xlu0 %3314
        %v3318 = vsel %vm1235, %v3116, 0
        %v3321 = vsel %vm1235, %v3117, 0
        %v3324 = vsel %vm1505, %v3315, 0
        %3326 = vmatprep.subr.bf16.mxu0 0
        %3327 = vmatpush1.bf16.msra.mxu0 0
        %3328 = vmatprep.subr.bf16.mxu0 0
        %3329 = vmatpush1.bf16.msra.mxu0 0
        %3330 = vmatprep.subr.bf16.mxu0 0
        %3331 = vmatpush1.bf16.msra.mxu0 0
        %3332 = vmatprep.subr.bf16.mxu0 0
        %3333 = vmatpush1.bf16.msra.mxu0 0
        %3334 = vmatprep.subr.bf16.mxu0 0
        %3335 = vmatpush1.bf16.msra.mxu0 0
        %3336 = vmatprep.subr.bf16.mxu0 0
        %3337 = vmatpush1.bf16.msra.mxu0 0
        %3338 = vmatprep.subr.bf16.mxu0 0
        %3339 = vmatpush1.bf16.msra.mxu0 %v3324
        %3340 = vmatprep.subr.bf16.mxu0 0
        %3341 = vmatpush1.bf16.msra.mxu0 %v3313
        %3342 = vmatprep.subr.bf16.mxu0 0
        %3343 = vmatpush2.bf16.msra.mxu0 0
        %3344 = vmatprep.subr.bf16.mxu0 0
        %3345 = vmatpush2.bf16.msra.mxu0 0
        %3346 = vmatprep.subr.bf16.mxu0 0
        %3347 = vmatpush2.bf16.msra.mxu0 0
        %3348 = vmatprep.subr.bf16.mxu0 0
        %3349 = vmatpush2.bf16.msra.mxu0 0
        %3350 = vmatprep.subr.bf16.mxu0 0
        %3351 = vmatpush2.bf16.msra.mxu0 0
        %3352 = vmatprep.subr.bf16.mxu0 0
        %3353 = vmatpush2.bf16.msra.mxu0 0
        %3354 = vmatprep.subr.bf16.mxu0 0
        %3355 = vmatpush2.bf16.msra.mxu0 0
        %3356 = vmatprep.subr.bf16.mxu0 0
        %3357 = vmatpush2.bf16.msra.mxu0 0
        %3358 = vmatprep.mubr.bf16.mxu0 0
        %3359 = vmatmul.mubr.bf16.gmra.mxu0 %v3318
        %v3360 = vpop.f32.mrf.mxu0
        %v3361 = vadd.f32 0.0, %v3360
        %v3362 = vpop.f32.mrf.mxu0
        %v3363 = vpop.f32.mrf.mxu0
        %v3364 = vadd.f32 0.0, %v3363
        %v3365 = vpop.f32.mrf.mxu0
        %3366 = vmatprep.mubr.bf16.mxu0 0
        %3367 = vmatmul.mubr.bf16.gmra.mxu0 %v3321
        %v3368 = vpop.f32.mrf.mxu0
        %v3369 = vadd.f32 0.0, %v3368
        %v3370 = vpop.f32.mrf.mxu0
        %v3371 = vpop.f32.mrf.mxu0
        %v3372 = vpop.f32.mrf.mxu0
        %3373 = vdwg.mxu0
        %3374 = vrot.lane.b32.xlu0 %v761, 24
        %v3375 = vpop.permute.xlu0 %3374
        %3376 = vrot.lane.b32.xlu0 %v769, 24
        %v3377 = vpop.permute.xlu0 %3376
        %v3380 = vsel %vm1235, %v3118, 0
        %v3383 = vsel %vm1235, %v3119, 0
        %v3386 = vsel %vm1505, %v3377, 0
        %3388 = vmatprep.subr.bf16.mxu0 0
        %3389 = vmatpush1.bf16.msra.mxu0 0
        %3390 = vmatprep.subr.bf16.mxu0 0
        %3391 = vmatpush1.bf16.msra.mxu0 0
        %3392 = vmatprep.subr.bf16.mxu0 0
        %3393 = vmatpush1.bf16.msra.mxu0 0
        %3394 = vmatprep.subr.bf16.mxu0 0
        %3395 = vmatpush1.bf16.msra.mxu0 0
        %3396 = vmatprep.subr.bf16.mxu0 0
        %3397 = vmatpush1.bf16.msra.mxu0 0
        %3398 = vmatprep.subr.bf16.mxu0 0
        %3399 = vmatpush1.bf16.msra.mxu0 0
        %3400 = vmatprep.subr.bf16.mxu0 0
        %3401 = vmatpush1.bf16.msra.mxu0 %v3386
        %3402 = vmatprep.subr.bf16.mxu0 0
        %3403 = vmatpush1.bf16.msra.mxu0 %v3375
        %3404 = vmatprep.subr.bf16.mxu0 0
        %3405 = vmatpush2.bf16.msra.mxu0 0
        %3406 = vmatprep.subr.bf16.mxu0 0
        %3407 = vmatpush2.bf16.msra.mxu0 0
        %3408 = vmatprep.subr.bf16.mxu0 0
        %3409 = vmatpush2.bf16.msra.mxu0 0
        %3410 = vmatprep.subr.bf16.mxu0 0
        %3411 = vmatpush2.bf16.msra.mxu0 0
        %3412 = vmatprep.subr.bf16.mxu0 0
        %3413 = vmatpush2.bf16.msra.mxu0 0
        %3414 = vmatprep.subr.bf16.mxu0 0
        %3415 = vmatpush2.bf16.msra.mxu0 0
        %3416 = vmatprep.subr.bf16.mxu0 0
        %3417 = vmatpush2.bf16.msra.mxu0 0
        %3418 = vmatprep.subr.bf16.mxu0 0
        %3419 = vmatpush2.bf16.msra.mxu0 0
        %3420 = vmatprep.mubr.bf16.mxu0 0
        %3421 = vmatmul.mubr.bf16.gmra.mxu0 %v3380
        %v3422 = vpop.f32.mrf.mxu0
        %v3423 = vadd.f32 0.0, %v3422
        %v3424 = vpop.f32.mrf.mxu0
        %v3425 = vpop.f32.mrf.mxu0
        %v3426 = vadd.f32 0.0, %v3425
        %v3427 = vpop.f32.mrf.mxu0
        %3428 = vmatprep.mubr.bf16.mxu0 0
        %3429 = vmatmul.mubr.bf16.gmra.mxu0 %v3383
        %v3430 = vpop.f32.mrf.mxu0
        %v3431 = vadd.f32 0.0, %v3430
        %v3432 = vpop.f32.mrf.mxu0
        %v3433 = vpop.f32.mrf.mxu0
        %v3434 = vpop.f32.mrf.mxu0
        %3435 = vdwg.mxu0
        %3436 = vrot.lane.b32.xlu0 %v762, 24
        %v3437 = vpop.permute.xlu0 %3436
        %3438 = vrot.lane.b32.xlu0 %v770, 24
        %v3439 = vpop.permute.xlu0 %3438
        %v3442 = vsel %vm1235, %v3120, 0
        %v3445 = vsel %vm1235, %v3121, 0
        %v3448 = vsel %vm1505, %v3439, 0
        %3450 = vmatprep.subr.bf16.mxu0 0
        %3451 = vmatpush1.bf16.msra.mxu0 0
        %3452 = vmatprep.subr.bf16.mxu0 0
        %3453 = vmatpush1.bf16.msra.mxu0 0
        %3454 = vmatprep.subr.bf16.mxu0 0
        %3455 = vmatpush1.bf16.msra.mxu0 0
        %3456 = vmatprep.subr.bf16.mxu0 0
        %3457 = vmatpush1.bf16.msra.mxu0 0
        %3458 = vmatprep.subr.bf16.mxu0 0
        %3459 = vmatpush1.bf16.msra.mxu0 0
        %3460 = vmatprep.subr.bf16.mxu0 0
        %3461 = vmatpush1.bf16.msra.mxu0 0
        %3462 = vmatprep.subr.bf16.mxu0 0
        %3463 = vmatpush1.bf16.msra.mxu0 %v3448
        %3464 = vmatprep.subr.bf16.mxu0 0
        %3465 = vmatpush1.bf16.msra.mxu0 %v3437
        %3466 = vmatprep.subr.bf16.mxu0 0
        %3467 = vmatpush2.bf16.msra.mxu0 0
        %3468 = vmatprep.subr.bf16.mxu0 0
        %3469 = vmatpush2.bf16.msra.mxu0 0
        %3470 = vmatprep.subr.bf16.mxu0 0
        %3471 = vmatpush2.bf16.msra.mxu0 0
        %3472 = vmatprep.subr.bf16.mxu0 0
        %3473 = vmatpush2.bf16.msra.mxu0 0
        %3474 = vmatprep.subr.bf16.mxu0 0
        %3475 = vmatpush2.bf16.msra.mxu0 0
        %3476 = vmatprep.subr.bf16.mxu0 0
        %3477 = vmatpush2.bf16.msra.mxu0 0
        %3478 = vmatprep.subr.bf16.mxu0 0
        %3479 = vmatpush2.bf16.msra.mxu0 0
        %3480 = vmatprep.subr.bf16.mxu0 0
        %3481 = vmatpush2.bf16.msra.mxu0 0
        %3482 = vmatprep.mubr.bf16.mxu0 0
        %3483 = vmatmul.mubr.bf16.gmra.mxu0 %v3442
        %v3484 = vpop.f32.mrf.mxu0
        %v3485 = vadd.f32 0.0, %v3484
        %v3486 = vpop.f32.mrf.mxu0
        %v3487 = vpop.f32.mrf.mxu0
        %v3488 = vadd.f32 0.0, %v3487
        %v3489 = vpop.f32.mrf.mxu0
        %3490 = vmatprep.mubr.bf16.mxu0 0
        %3491 = vmatmul.mubr.bf16.gmra.mxu0 %v3445
        %v3492 = vpop.f32.mrf.mxu0
        %v3493 = vadd.f32 0.0, %v3492
        %v3494 = vpop.f32.mrf.mxu0
        %v3495 = vpop.f32.mrf.mxu0
        %v3496 = vpop.f32.mrf.mxu0
        %3497 = vdwg.mxu0
        %3498 = vrot.lane.b32.xlu0 %v763, 24
        %v3499 = vpop.permute.xlu0 %3498
        %3500 = vrot.lane.b32.xlu0 %v771, 24
        %v3501 = vpop.permute.xlu0 %3500
        %v3504 = vsel %vm1235, %v3122, 0
        %v3507 = vsel %vm1235, %v3123, 0
        %v3510 = vsel %vm1505, %v3501, 0
        %3512 = vmatprep.subr.bf16.mxu0 0
        %3513 = vmatpush1.bf16.msra.mxu0 0
        %3514 = vmatprep.subr.bf16.mxu0 0
        %3515 = vmatpush1.bf16.msra.mxu0 0
        %3516 = vmatprep.subr.bf16.mxu0 0
        %3517 = vmatpush1.bf16.msra.mxu0 0
        %3518 = vmatprep.subr.bf16.mxu0 0
        %3519 = vmatpush1.bf16.msra.mxu0 0
        %3520 = vmatprep.subr.bf16.mxu0 0
        %3521 = vmatpush1.bf16.msra.mxu0 0
        %3522 = vmatprep.subr.bf16.mxu0 0
        %3523 = vmatpush1.bf16.msra.mxu0 0
        %3524 = vmatprep.subr.bf16.mxu0 0
        %3525 = vmatpush1.bf16.msra.mxu0 %v3510
        %3526 = vmatprep.subr.bf16.mxu0 0
        %3527 = vmatpush1.bf16.msra.mxu0 %v3499
        %3528 = vmatprep.subr.bf16.mxu0 0
        %3529 = vmatpush2.bf16.msra.mxu0 0
        %3530 = vmatprep.subr.bf16.mxu0 0
        %3531 = vmatpush2.bf16.msra.mxu0 0
        %3532 = vmatprep.subr.bf16.mxu0 0
        %3533 = vmatpush2.bf16.msra.mxu0 0
        %3534 = vmatprep.subr.bf16.mxu0 0
        %3535 = vmatpush2.bf16.msra.mxu0 0
        %3536 = vmatprep.subr.bf16.mxu0 0
        %3537 = vmatpush2.bf16.msra.mxu0 0
        %3538 = vmatprep.subr.bf16.mxu0 0
        %3539 = vmatpush2.bf16.msra.mxu0 0
        %3540 = vmatprep.subr.bf16.mxu0 0
        %3541 = vmatpush2.bf16.msra.mxu0 0
        %3542 = vmatprep.subr.bf16.mxu0 0
        %3543 = vmatpush2.bf16.msra.mxu0 0
        %3544 = vmatprep.mubr.bf16.mxu0 0
        %3545 = vmatmul.mubr.bf16.gmra.mxu0 %v3504
        %v3546 = vpop.f32.mrf.mxu0
        %v3547 = vadd.f32 0.0, %v3546
        %v3548 = vpop.f32.mrf.mxu0
        %v3549 = vpop.f32.mrf.mxu0
        %v3550 = vadd.f32 0.0, %v3549
        %v3551 = vpop.f32.mrf.mxu0
        %3552 = vmatprep.mubr.bf16.mxu0 0
        %3553 = vmatmul.mubr.bf16.gmra.mxu0 %v3507
        %v3554 = vpop.f32.mrf.mxu0
        %v3555 = vadd.f32 0.0, %v3554
        %v3556 = vpop.f32.mrf.mxu0
        %v3557 = vpop.f32.mrf.mxu0
        %v3558 = vpop.f32.mrf.mxu0
        %3559 = vdwg.mxu0
        %3560 = vrot.lane.b32.xlu0 %v764, 24
        %v3561 = vpop.permute.xlu0 %3560
        %3562 = vrot.lane.b32.xlu0 %v772, 24
        %v3563 = vpop.permute.xlu0 %3562
        %v3566 = vsel %vm1235, %v3124, 0
        %v3569 = vsel %vm1235, %v3125, 0
        %v3572 = vsel %vm1505, %v3563, 0
        %3574 = vmatprep.subr.bf16.mxu0 0
        %3575 = vmatpush1.bf16.msra.mxu0 0
        %3576 = vmatprep.subr.bf16.mxu0 0
        %3577 = vmatpush1.bf16.msra.mxu0 0
        %3578 = vmatprep.subr.bf16.mxu0 0
        %3579 = vmatpush1.bf16.msra.mxu0 0
        %3580 = vmatprep.subr.bf16.mxu0 0
        %3581 = vmatpush1.bf16.msra.mxu0 0
        %3582 = vmatprep.subr.bf16.mxu0 0
        %3583 = vmatpush1.bf16.msra.mxu0 0
        %3584 = vmatprep.subr.bf16.mxu0 0
        %3585 = vmatpush1.bf16.msra.mxu0 0
        %3586 = vmatprep.subr.bf16.mxu0 0
        %3587 = vmatpush1.bf16.msra.mxu0 %v3572
        %3588 = vmatprep.subr.bf16.mxu0 0
        %3589 = vmatpush1.bf16.msra.mxu0 %v3561
        %3590 = vmatprep.subr.bf16.mxu0 0
        %3591 = vmatpush2.bf16.msra.mxu0 0
        %3592 = vmatprep.subr.bf16.mxu0 0
        %3593 = vmatpush2.bf16.msra.mxu0 0
        %3594 = vmatprep.subr.bf16.mxu0 0
        %3595 = vmatpush2.bf16.msra.mxu0 0
        %3596 = vmatprep.subr.bf16.mxu0 0
        %3597 = vmatpush2.bf16.msra.mxu0 0
        %3598 = vmatprep.subr.bf16.mxu0 0
        %3599 = vmatpush2.bf16.msra.mxu0 0
        %3600 = vmatprep.subr.bf16.mxu0 0
        %3601 = vmatpush2.bf16.msra.mxu0 0
        %3602 = vmatprep.subr.bf16.mxu0 0
        %3603 = vmatpush2.bf16.msra.mxu0 0
        %3604 = vmatprep.subr.bf16.mxu0 0
        %3605 = vmatpush2.bf16.msra.mxu0 0
        %3606 = vmatprep.mubr.bf16.mxu0 0
        %3607 = vmatmul.mubr.bf16.gmra.mxu0 %v3566
        %v3608 = vpop.f32.mrf.mxu0
        %v3609 = vadd.f32 0.0, %v3608
        %v3610 = vpop.f32.mrf.mxu0
        %v3611 = vpop.f32.mrf.mxu0
        %v3612 = vadd.f32 0.0, %v3611
        %v3613 = vpop.f32.mrf.mxu0
        %3614 = vmatprep.mubr.bf16.mxu0 0
        %3615 = vmatmul.mubr.bf16.gmra.mxu0 %v3569
        %v3616 = vpop.f32.mrf.mxu0
        %v3617 = vadd.f32 0.0, %v3616
        %v3618 = vpop.f32.mrf.mxu0
        %v3619 = vpop.f32.mrf.mxu0
        %v3620 = vpop.f32.mrf.mxu0
        %3621 = vdwg.mxu0
        %v3622 = vrcp.pop %v2928
        %v3623 = vrcp.pop %v3008
        %v3624 = vrcp.pop %v3088
        %v3625 = vrcp.pop %v2931
        %v3626 = vrcp.pop %v3011
        %v3627 = vrcp.pop %v3091
        %v3628 = vrcp.pop %v2934
        %v3629 = vrcp.pop %v3014
        %v3630 = vrcp.pop %v3094
        %v3631 = vrcp.pop %v2937
        %v3632 = vrcp.pop %v3017
        %v3633 = vrcp.pop %v3097
        %v3634 = vrcp.pop %v2940
        %v3635 = vrcp.pop %v3020
        %v3636 = vrcp.pop %v3100
        %v3637 = vrcp.pop %v2943
        %v3638 = vrcp.pop %v3023
        %v3639 = vrcp.pop %v3103
        %v3640 = vrcp.pop %v2946
        %v3641 = vrcp.pop %v3026
        %v3642 = vrcp.pop %v3106
        %v3643 = vrcp.pop %v2949
        %v3644 = vrcp.pop %v3029
        %v3645 = vrcp.pop %v3109
        %3647 = vset.pattern.permute.xlu0 0
        %3648 = vperm.xlu0 %3647, %v3622
        %v3649 = vpop.permute.xlu0 %3648
        %3652 = vset.pattern.permute.xlu0 0
        %3653 = vperm.xlu0 %3652, %v3623
        %v3654 = vpop.permute.xlu0 %3653
        %3657 = vset.pattern.permute.xlu0 0
        %3658 = vperm.xlu0 %3657, %v3624
        %v3659 = vpop.permute.xlu0 %3658
        %3662 = vset.pattern.permute.xlu0 0
        %3663 = vperm.xlu0 %3662, %v3625
        %v3664 = vpop.permute.xlu0 %3663
        %3667 = vset.pattern.permute.xlu0 0
        %3668 = vperm.xlu0 %3667, %v3626
        %v3669 = vpop.permute.xlu0 %3668
        %3672 = vset.pattern.permute.xlu0 0
        %3673 = vperm.xlu0 %3672, %v3627
        %v3674 = vpop.permute.xlu0 %3673
        %3677 = vset.pattern.permute.xlu0 0
        %3678 = vperm.xlu0 %3677, %v3628
        %v3679 = vpop.permute.xlu0 %3678
        %3682 = vset.pattern.permute.xlu0 0
        %3683 = vperm.xlu0 %3682, %v3629
        %v3684 = vpop.permute.xlu0 %3683
        %3687 = vset.pattern.permute.xlu0 0
        %3688 = vperm.xlu0 %3687, %v3630
        %v3689 = vpop.permute.xlu0 %3688
        %3692 = vset.pattern.permute.xlu0 0
        %3693 = vperm.xlu0 %3692, %v3631
        %v3694 = vpop.permute.xlu0 %3693
        %3697 = vset.pattern.permute.xlu0 0
        %3698 = vperm.xlu0 %3697, %v3632
        %v3699 = vpop.permute.xlu0 %3698
        %3702 = vset.pattern.permute.xlu0 0
        %3703 = vperm.xlu0 %3702, %v3633
        %v3704 = vpop.permute.xlu0 %3703
        %3707 = vset.pattern.permute.xlu0 0
        %3708 = vperm.xlu0 %3707, %v3634
        %v3709 = vpop.permute.xlu0 %3708
        %3712 = vset.pattern.permute.xlu0 0
        %3713 = vperm.xlu0 %3712, %v3635
        %v3714 = vpop.permute.xlu0 %3713
        %3717 = vset.pattern.permute.xlu0 0
        %3718 = vperm.xlu0 %3717, %v3636
        %v3719 = vpop.permute.xlu0 %3718
        %3722 = vset.pattern.permute.xlu0 0
        %3723 = vperm.xlu0 %3722, %v3637
        %v3724 = vpop.permute.xlu0 %3723
        %3727 = vset.pattern.permute.xlu0 0
        %3728 = vperm.xlu0 %3727, %v3638
        %v3729 = vpop.permute.xlu0 %3728
        %3732 = vset.pattern.permute.xlu0 0
        %3733 = vperm.xlu0 %3732, %v3639
        %v3734 = vpop.permute.xlu0 %3733
        %3737 = vset.pattern.permute.xlu0 0
        %3738 = vperm.xlu0 %3737, %v3640
        %v3739 = vpop.permute.xlu0 %3738
        %3742 = vset.pattern.permute.xlu0 0
        %3743 = vperm.xlu0 %3742, %v3641
        %v3744 = vpop.permute.xlu0 %3743
        %3747 = vset.pattern.permute.xlu0 0
        %3748 = vperm.xlu0 %3747, %v3642
        %v3749 = vpop.permute.xlu0 %3748
        %3752 = vset.pattern.permute.xlu0 0
        %3753 = vperm.xlu0 %3752, %v3643
        %v3754 = vpop.permute.xlu0 %3753
        %3757 = vset.pattern.permute.xlu0 0
        %3758 = vperm.xlu0 %3757, %v3644
        %v3759 = vpop.permute.xlu0 %3758
        %3762 = vset.pattern.permute.xlu0 0
        %3763 = vperm.xlu0 %3762, %v3645
        %v3764 = vpop.permute.xlu0 %3763
        %v3766 = vmul.f32 %v3175, %v3649
        %v3767 = vmul.f32 %v3178, %v3654
        %v3768 = vmul.f32 %v3183, %v3659
        %v3769 = vmul.f32 %v3237, %v3664
        %v3770 = vmul.f32 %v3240, %v3669
        %v3771 = vmul.f32 %v3245, %v3674
        %v3772 = vmul.f32 %v3299, %v3679
        %v3773 = vmul.f32 %v3302, %v3684
        %v3774 = vmul.f32 %v3307, %v3689
        %v3775 = vmul.f32 %v3361, %v3694
        %v3776 = vmul.f32 %v3364, %v3699
        %v3777 = vmul.f32 %v3369, %v3704
        %v3778 = vmul.f32 %v3423, %v3709
        %v3779 = vmul.f32 %v3426, %v3714
        %v3780 = vmul.f32 %v3431, %v3719
        %v3781 = vmul.f32 %v3485, %v3724
        %v3782 = vmul.f32 %v3488, %v3729
        %v3783 = vmul.f32 %v3493, %v3734
        %v3784 = vmul.f32 %v3547, %v3739
        %v3785 = vmul.f32 %v3550, %v3744
        %v3786 = vmul.f32 %v3555, %v3749
        %v3787 = vmul.f32 %v3609, %v3754
        %v3788 = vmul.f32 %v3612, %v3759
        %v3789 = vmul.f32 %v3617, %v3764
        %v3790 = vpack.c.bf16 %v3769, %v3766
        %v3791 = vpack.c.bf16 %v3775, %v3772
        %v3792 = vpack.c.bf16 %v3781, %v3778
        %v3793 = vpack.c.bf16 %v3787, %v3784
        %v3794 = vld [vmem:[%s4 + $0x4] sm:$0xf]
        %v3796 = vsel %vm779, %v3790, 0
        %v3799 = vsel %vm779, %v3791, 0
        %v3802 = vsel %vm779, %v3792, 0
        %v3805 = vsel %vm779, %v3793, 0
        %v3808 = vsel %vm1505, %v3794, 0
        %3810 = vmatprep.subr.bf16.mxu0 0
        %3811 = vmatpush1.bf16.msra.mxu0 0
        %3812 = vmatprep.subr.bf16.mxu0 0
        %3813 = vmatpush1.bf16.msra.mxu0 0
        %3814 = vmatprep.subr.bf16.mxu0 0
        %3815 = vmatpush1.bf16.msra.mxu0 0
        %3816 = vmatprep.subr.bf16.mxu0 0
        %3817 = vmatpush1.bf16.msra.mxu0 0
        %3818 = vmatprep.subr.bf16.mxu0 0
        %3819 = vmatpush1.bf16.msra.mxu0 0
        %3820 = vmatprep.subr.bf16.mxu0 0
        %3821 = vmatpush1.bf16.msra.mxu0 0
        %3822 = vmatprep.subr.bf16.mxu0 0
        %3823 = vmatpush1.bf16.msra.mxu0 0
        %3824 = vmatprep.subr.bf16.mxu0 0
        %3825 = vmatpush1.bf16.msra.mxu0 %v3808
        %3826 = vmatprep.subr.bf16.mxu0 0
        %3827 = vmatpush2.bf16.msra.mxu0 0
        %3828 = vmatprep.subr.bf16.mxu0 0
        %3829 = vmatpush2.bf16.msra.mxu0 0
        %3830 = vmatprep.subr.bf16.mxu0 0
        %3831 = vmatpush2.bf16.msra.mxu0 0
        %3832 = vmatprep.subr.bf16.mxu0 0
        %3833 = vmatpush2.bf16.msra.mxu0 0
        %3834 = vmatprep.subr.bf16.mxu0 0
        %3835 = vmatpush2.bf16.msra.mxu0 0
        %3836 = vmatprep.subr.bf16.mxu0 0
        %3837 = vmatpush2.bf16.msra.mxu0 0
        %3838 = vmatprep.subr.bf16.mxu0 0
        %3839 = vmatpush2.bf16.msra.mxu0 0
        %3840 = vmatprep.subr.bf16.mxu0 0
        %3841 = vmatpush2.bf16.msra.mxu0 0
        %3842 = vmatprep.mubr.bf16.mxu0 0
        %3843 = vmatmul.mubr.bf16.gmra.mxu0 %v3796
        %v3844 = vpop.f32.mrf.mxu0
        %v3845 = vadd.f32 0.0, %v3844
        %v3846 = vpop.f32.mrf.mxu0
        %v3847 = vpop.f32.mrf.mxu0
        %v3848 = vadd.f32 0.0, %v3847
        %v3849 = vpop.f32.mrf.mxu0
        %3850 = vmatprep.mubr.bf16.mxu0 0
        %3851 = vmatmul.mubr.bf16.gmra.mxu0 %v3799
        %v3852 = vpop.f32.mrf.mxu0
        %v3853 = vadd.f32 0.0, %v3852
        %v3854 = vpop.f32.mrf.mxu0
        %v3855 = vpop.f32.mrf.mxu0
        %v3856 = vadd.f32 0.0, %v3855
        %v3857 = vpop.f32.mrf.mxu0
        %3858 = vmatprep.mubr.bf16.mxu0 0
        %3859 = vmatmul.mubr.bf16.gmra.mxu0 %v3802
        %v3860 = vpop.f32.mrf.mxu0
        %v3861 = vadd.f32 0.0, %v3860
        %v3862 = vpop.f32.mrf.mxu0
        %v3863 = vpop.f32.mrf.mxu0
        %v3864 = vadd.f32 0.0, %v3863
        %v3865 = vpop.f32.mrf.mxu0
        %3866 = vmatprep.mubr.bf16.mxu0 0
        %3867 = vmatmul.mubr.bf16.gmra.mxu0 %v3805
        %v3868 = vpop.f32.mrf.mxu0
        %v3869 = vadd.f32 0.0, %v3868
        %v3870 = vpop.f32.mrf.mxu0
        %v3871 = vpop.f32.mrf.mxu0
        %v3872 = vadd.f32 0.0, %v3871
        %v3873 = vpop.f32.mrf.mxu0
        %3874 = vdwg.mxu0
        %v3875 = vadd.f32 %v2414, %v3845
        %v3876 = vadd.f32 %v2415, %v3848
        %v3877 = vadd.f32 %v2416, %v3853
        %v3878 = vadd.f32 %v2417, %v3856
        %v3879 = vadd.f32 %v2418, %v3861
        %v3880 = vadd.f32 %v2419, %v3864
        %v3881 = vadd.f32 %v2420, %v3869
        %v3882 = vadd.f32 %v2421, %v3872
        %v3883 = vpack.c.bf16 %v3770, %v3767
        %v3884 = vpack.c.bf16 %v3776, %v3773
        %v3885 = vpack.c.bf16 %v3782, %v3779
        %v3886 = vpack.c.bf16 %v3788, %v3785
        %v3887 = vld [vmem:[%s4 + $0xc] sm:$0xf]
        %v3889 = vsel %vm779, %v3883, 0
        %v3892 = vsel %vm779, %v3884, 0
        %v3895 = vsel %vm779, %v3885, 0
        %v3898 = vsel %vm779, %v3886, 0
        %v3901 = vsel %vm1505, %v3887, 0
        %3903 = vmatprep.subr.bf16.mxu0 0
        %3904 = vmatpush1.bf16.msra.mxu0 0
        %3905 = vmatprep.subr.bf16.mxu0 0
        %3906 = vmatpush1.bf16.msra.mxu0 0
        %3907 = vmatprep.subr.bf16.mxu0 0
        %3908 = vmatpush1.bf16.msra.mxu0 0
        %3909 = vmatprep.subr.bf16.mxu0 0
        %3910 = vmatpush1.bf16.msra.mxu0 0
        %3911 = vmatprep.subr.bf16.mxu0 0
        %3912 = vmatpush1.bf16.msra.mxu0 0
        %3913 = vmatprep.subr.bf16.mxu0 0
        %3914 = vmatpush1.bf16.msra.mxu0 0
        %3915 = vmatprep.subr.bf16.mxu0 0
        %3916 = vmatpush1.bf16.msra.mxu0 0
        %3917 = vmatprep.subr.bf16.mxu0 0
        %3918 = vmatpush1.bf16.msra.mxu0 %v3901
        %3919 = vmatprep.subr.bf16.mxu0 0
        %3920 = vmatpush2.bf16.msra.mxu0 0
        %3921 = vmatprep.subr.bf16.mxu0 0
        %3922 = vmatpush2.bf16.msra.mxu0 0
        %3923 = vmatprep.subr.bf16.mxu0 0
        %3924 = vmatpush2.bf16.msra.mxu0 0
        %3925 = vmatprep.subr.bf16.mxu0 0
        %3926 = vmatpush2.bf16.msra.mxu0 0
        %3927 = vmatprep.subr.bf16.mxu0 0
        %3928 = vmatpush2.bf16.msra.mxu0 0
        %3929 = vmatprep.subr.bf16.mxu0 0
        %3930 = vmatpush2.bf16.msra.mxu0 0
        %3931 = vmatprep.subr.bf16.mxu0 0
        %3932 = vmatpush2.bf16.msra.mxu0 0
        %3933 = vmatprep.subr.bf16.mxu0 0
        %3934 = vmatpush2.bf16.msra.mxu0 0
        %3935 = vmatprep.mubr.bf16.mxu0 0
        %3936 = vmatmul.mubr.bf16.gmra.mxu0 %v3889
        %v3937 = vpop.f32.mrf.mxu0
        %v3938 = vadd.f32 0.0, %v3937
        %v3939 = vpop.f32.mrf.mxu0
        %v3940 = vpop.f32.mrf.mxu0
        %v3941 = vadd.f32 0.0, %v3940
        %v3942 = vpop.f32.mrf.mxu0
        %3943 = vmatprep.mubr.bf16.mxu0 0
        %3944 = vmatmul.mubr.bf16.gmra.mxu0 %v3892
        %v3945 = vpop.f32.mrf.mxu0
        %v3946 = vadd.f32 0.0, %v3945
        %v3947 = vpop.f32.mrf.mxu0
        %v3948 = vpop.f32.mrf.mxu0
        %v3949 = vadd.f32 0.0, %v3948
        %v3950 = vpop.f32.mrf.mxu0
        %3951 = vmatprep.mubr.bf16.mxu0 0
        %3952 = vmatmul.mubr.bf16.gmra.mxu0 %v3895
        %v3953 = vpop.f32.mrf.mxu0
        %v3954 = vadd.f32 0.0, %v3953
        %v3955 = vpop.f32.mrf.mxu0
        %v3956 = vpop.f32.mrf.mxu0
        %v3957 = vadd.f32 0.0, %v3956
        %v3958 = vpop.f32.mrf.mxu0
        %3959 = vmatprep.mubr.bf16.mxu0 0
        %3960 = vmatmul.mubr.bf16.gmra.mxu0 %v3898
        %v3961 = vpop.f32.mrf.mxu0
        %v3962 = vadd.f32 0.0, %v3961
        %v3963 = vpop.f32.mrf.mxu0
        %v3964 = vpop.f32.mrf.mxu0
        %v3965 = vadd.f32 0.0, %v3964
        %v3966 = vpop.f32.mrf.mxu0
        %3967 = vdwg.mxu0
        %v3968 = vadd.f32 %v3875, %v3938
        %v3969 = vadd.f32 %v3876, %v3941
        %v3970 = vadd.f32 %v3877, %v3946
        %v3971 = vadd.f32 %v3878, %v3949
        %v3972 = vadd.f32 %v3879, %v3954
        %v3973 = vadd.f32 %v3880, %v3957
        %v3974 = vadd.f32 %v3881, %v3962
        %v3975 = vadd.f32 %v3882, %v3965
        %v3976 = vpack.c.bf16 %v3771, %v3768
        %v3977 = vpack.c.bf16 %v3777, %v3774
        %v3978 = vpack.c.bf16 %v3783, %v3780
        %v3979 = vpack.c.bf16 %v3789, %v3786
        %v3980 = vld [vmem:[%s4 + $0x14] sm:$0xf]
        %v3982 = vsel %vm779, %v3976, 0
        %v3985 = vsel %vm779, %v3977, 0
        %v3988 = vsel %vm779, %v3978, 0
        %v3991 = vsel %vm779, %v3979, 0
        %v3994 = vsel %vm1505, %v3980, 0
        %3996 = vmatprep.subr.bf16.mxu0 0
        %3997 = vmatpush1.bf16.msra.mxu0 0
        %3998 = vmatprep.subr.bf16.mxu0 0
        %3999 = vmatpush1.bf16.msra.mxu0 0
        %4000 = vmatprep.subr.bf16.mxu0 0
        %4001 = vmatpush1.bf16.msra.mxu0 0
        %4002 = vmatprep.subr.bf16.mxu0 0
        %4003 = vmatpush1.bf16.msra.mxu0 0
        %4004 = vmatprep.subr.bf16.mxu0 0
        %4005 = vmatpush1.bf16.msra.mxu0 0
        %4006 = vmatprep.subr.bf16.mxu0 0
        %4007 = vmatpush1.bf16.msra.mxu0 0
        %4008 = vmatprep.subr.bf16.mxu0 0
        %4009 = vmatpush1.bf16.msra.mxu0 0
        %4010 = vmatprep.subr.bf16.mxu0 0
        %4011 = vmatpush1.bf16.msra.mxu0 %v3994
        %4012 = vmatprep.subr.bf16.mxu0 0
        %4013 = vmatpush2.bf16.msra.mxu0 0
        %4014 = vmatprep.subr.bf16.mxu0 0
        %4015 = vmatpush2.bf16.msra.mxu0 0
        %4016 = vmatprep.subr.bf16.mxu0 0
        %4017 = vmatpush2.bf16.msra.mxu0 0
        %4018 = vmatprep.subr.bf16.mxu0 0
        %4019 = vmatpush2.bf16.msra.mxu0 0
        %4020 = vmatprep.subr.bf16.mxu0 0
        %4021 = vmatpush2.bf16.msra.mxu0 0
        %4022 = vmatprep.subr.bf16.mxu0 0
        %4023 = vmatpush2.bf16.msra.mxu0 0
        %4024 = vmatprep.subr.bf16.mxu0 0
        %4025 = vmatpush2.bf16.msra.mxu0 0
        %4026 = vmatprep.subr.bf16.mxu0 0
        %4027 = vmatpush2.bf16.msra.mxu0 0
        %4028 = vmatprep.mubr.bf16.mxu0 0
        %4029 = vmatmul.mubr.bf16.gmra.mxu0 %v3982
        %v4030 = vpop.f32.mrf.mxu0
        %v4031 = vadd.f32 0.0, %v4030
        %v4032 = vpop.f32.mrf.mxu0
        %v4033 = vpop.f32.mrf.mxu0
        %v4034 = vadd.f32 0.0, %v4033
        %v4035 = vpop.f32.mrf.mxu0
        %4036 = vmatprep.mubr.bf16.mxu0 0
        %4037 = vmatmul.mubr.bf16.gmra.mxu0 %v3985
        %v4038 = vpop.f32.mrf.mxu0
        %v4039 = vadd.f32 0.0, %v4038
        %v4040 = vpop.f32.mrf.mxu0
        %v4041 = vpop.f32.mrf.mxu0
        %v4042 = vadd.f32 0.0, %v4041
        %v4043 = vpop.f32.mrf.mxu0
        %4044 = vmatprep.mubr.bf16.mxu0 0
        %4045 = vmatmul.mubr.bf16.gmra.mxu0 %v3988
        %v4046 = vpop.f32.mrf.mxu0
        %v4047 = vadd.f32 0.0, %v4046
        %v4048 = vpop.f32.mrf.mxu0
        %v4049 = vpop.f32.mrf.mxu0
        %v4050 = vadd.f32 0.0, %v4049
        %v4051 = vpop.f32.mrf.mxu0
        %4052 = vmatprep.mubr.bf16.mxu0 0
        %4053 = vmatmul.mubr.bf16.gmra.mxu0 %v3991
        %v4054 = vpop.f32.mrf.mxu0
        %v4055 = vadd.f32 0.0, %v4054
        %v4056 = vpop.f32.mrf.mxu0
        %v4057 = vpop.f32.mrf.mxu0
        %v4058 = vadd.f32 0.0, %v4057
        %v4059 = vpop.f32.mrf.mxu0
        %4060 = vdwg.mxu0
        %v4061 = vadd.f32 %v3968, %v4031
        %v4062 = vadd.f32 %v3969, %v4034
        %v4063 = vadd.f32 %v3970, %v4039
        %v4064 = vadd.f32 %v3971, %v4042
        %v4065 = vadd.f32 %v3972, %v4047
        %v4066 = vadd.f32 %v3973, %v4050
        %v4067 = vadd.f32 %v3974, %v4055
        %v4068 = vadd.f32 %v3975, %v4058
        %v4069 = vadd.f32 %v450, %v4061
        %v4070 = vadd.f32 %v451, %v4062
        %v4071 = vadd.f32 %v452, %v4063
        %v4072 = vadd.f32 %v453, %v4064
        %v4073 = vadd.f32 %v454, %v4065
        %v4074 = vadd.f32 %v455, %v4066
        %v4075 = vadd.f32 %v456, %v4067
        %v4076 = vadd.f32 %v457, %v4068
        %v4077 = vld [vmem:[%s5] sm:$0x1]
        %v4079 = vlaneseq
        %v4080 = vshrl.u32 %v4079, 7
        %v4081 = vsub.s32 0, %v4080
        %v4082 = vrot.slane %v4077, %v4081
        %v4084 = vadd.f32 %v4069, %v4082
        %v4085 = vadd.f32 %v4070, %v4082
        %v4086 = vadd.f32 %v4071, %v4082
        %v4087 = vadd.f32 %v4072, %v4082
        %v4088 = vadd.f32 %v4073, %v4082
        %v4089 = vadd.f32 %v4074, %v4082
        %v4090 = vadd.f32 %v4075, %v4082
        %v4091 = vadd.f32 %v4076, %v4082
        %v4092 = vld [vmem:[%s6] sm:$0x1]
        %v4093 = vld [vmem:[%s7] sm:$0x1]
        %v4094 = vsel %vm460, %v4084, 0.0
        %4095 = vadd.xlane.f32.xlu0 %v4094
        %v4096 = vpop.xlane.xlu0 %4095
        %v4097 = vsel %vm460, %v4085, 0.0
        %4098 = vadd.xlane.f32.xlu0 %v4097
        %v4099 = vpop.xlane.xlu0 %4098
        %v4100 = vsel %vm460, %v4086, 0.0
        %4101 = vadd.xlane.f32.xlu0 %v4100
        %v4102 = vpop.xlane.xlu0 %4101
        %v4103 = vsel %vm460, %v4087, 0.0
        %4104 = vadd.xlane.f32.xlu0 %v4103
        %v4105 = vpop.xlane.xlu0 %4104
        %v4106 = vsel %vm460, %v4088, 0.0
        %4107 = vadd.xlane.f32.xlu0 %v4106
        %v4108 = vpop.xlane.xlu0 %4107
        %v4109 = vsel %vm460, %v4089, 0.0
        %4110 = vadd.xlane.f32.xlu0 %v4109
        %v4111 = vpop.xlane.xlu0 %4110
        %v4112 = vsel %vm460, %v4090, 0.0
        %4113 = vadd.xlane.f32.xlu0 %v4112
        %v4114 = vpop.xlane.xlu0 %4113
        %v4115 = vsel %vm460, %v4091, 0.0
        %4116 = vadd.xlane.f32.xlu0 %v4115
        %v4117 = vpop.xlane.xlu0 %4116
        %v4118 = vmul.f32 %v4096, %v485
        %v4119 = vmul.f32 %v4099, %v485
        %v4120 = vmul.f32 %v4102, %v485
        %v4121 = vmul.f32 %v4105, %v485
        %v4122 = vmul.f32 %v4108, %v485
        %v4123 = vmul.f32 %v4111, %v485
        %v4124 = vmul.f32 %v4114, %v485
        %v4125 = vmul.f32 %v4117, %v485
        %v4126 = vsub.f32 %v4084, %v4118
        %v4127 = vsub.f32 %v4085, %v4119
        %v4128 = vsub.f32 %v4086, %v4120
        %v4129 = vsub.f32 %v4087, %v4121
        %v4130 = vsub.f32 %v4088, %v4122
        %v4131 = vsub.f32 %v4089, %v4123
        %v4132 = vsub.f32 %v4090, %v4124
        %v4133 = vsub.f32 %v4091, %v4125
        %v4134 = vmul.f32 %v4126, %v4126
        %v4135 = vmul.f32 %v4127, %v4127
        %v4136 = vmul.f32 %v4128, %v4128
        %v4137 = vmul.f32 %v4129, %v4129
        %v4138 = vmul.f32 %v4130, %v4130
        %v4139 = vmul.f32 %v4131, %v4131
        %v4140 = vmul.f32 %v4132, %v4132
        %v4141 = vmul.f32 %v4133, %v4133
        %v4142 = vsel %vm460, %v4134, 0.0
        %4143 = vadd.xlane.f32.xlu0 %v4142
        %v4144 = vpop.xlane.xlu0 %4143
        %v4145 = vsel %vm460, %v4135, 0.0
        %4146 = vadd.xlane.f32.xlu0 %v4145
        %v4147 = vpop.xlane.xlu0 %4146
        %v4148 = vsel %vm460, %v4136, 0.0
        %4149 = vadd.xlane.f32.xlu0 %v4148
        %v4150 = vpop.xlane.xlu0 %4149
        %v4151 = vsel %vm460, %v4137, 0.0
        %4152 = vadd.xlane.f32.xlu0 %v4151
        %v4153 = vpop.xlane.xlu0 %4152
        %v4154 = vsel %vm460, %v4138, 0.0
        %4155 = vadd.xlane.f32.xlu0 %v4154
        %v4156 = vpop.xlane.xlu0 %4155
        %v4157 = vsel %vm460, %v4139, 0.0
        %4158 = vadd.xlane.f32.xlu0 %v4157
        %v4159 = vpop.xlane.xlu0 %4158
        %v4160 = vsel %vm460, %v4140, 0.0
        %4161 = vadd.xlane.f32.xlu0 %v4160
        %v4162 = vpop.xlane.xlu0 %4161
        %v4163 = vsel %vm460, %v4141, 0.0
        %4164 = vadd.xlane.f32.xlu0 %v4163
        %v4165 = vpop.xlane.xlu0 %4164
        %v4166 = vmul.f32 %v4144, %v485
        %v4167 = vmul.f32 %v4147, %v485
        %v4168 = vmul.f32 %v4150, %v485
        %v4169 = vmul.f32 %v4153, %v485
        %v4170 = vmul.f32 %v4156, %v485
        %v4171 = vmul.f32 %v4159, %v485
        %v4172 = vmul.f32 %v4162, %v485
        %v4173 = vmul.f32 %v4165, %v485
        %v4174 = vadd.f32 %v4166, 1e-05
        %v4175 = vadd.f32 %v4167, 1e-05
        %v4176 = vadd.f32 %v4168, 1e-05
        %v4177 = vadd.f32 %v4169, 1e-05
        %v4178 = vadd.f32 %v4170, 1e-05
        %v4179 = vadd.f32 %v4171, 1e-05
        %v4180 = vadd.f32 %v4172, 1e-05
        %v4181 = vadd.f32 %v4173, 1e-05
        %v4182 = vrsqrt.pop %v4174
        %v4183 = vrsqrt.pop %v4175
        %v4184 = vrsqrt.pop %v4176
        %v4185 = vrsqrt.pop %v4177
        %v4186 = vrsqrt.pop %v4178
        %v4187 = vrsqrt.pop %v4179
        %v4188 = vrsqrt.pop %v4180
        %v4189 = vrsqrt.pop %v4181
        %v4190 = vmul.f32 %v4126, %v4182
        %v4191 = vmul.f32 %v4127, %v4183
        %v4192 = vmul.f32 %v4128, %v4184
        %v4193 = vmul.f32 %v4129, %v4185
        %v4194 = vmul.f32 %v4130, %v4186
        %v4195 = vmul.f32 %v4131, %v4187
        %v4196 = vmul.f32 %v4132, %v4188
        %v4197 = vmul.f32 %v4133, %v4189
        %v4199 = vlaneseq
        %v4200 = vshrl.u32 %v4199, 7
        %v4201 = vsub.s32 0, %v4200
        %v4202 = vrot.slane %v4092, %v4201
        %v4204 = vmul.f32 %v4190, %v4202
        %v4205 = vmul.f32 %v4191, %v4202
        %v4206 = vmul.f32 %v4192, %v4202
        %v4207 = vmul.f32 %v4193, %v4202
        %v4208 = vmul.f32 %v4194, %v4202
        %v4209 = vmul.f32 %v4195, %v4202
        %v4210 = vmul.f32 %v4196, %v4202
        %v4211 = vmul.f32 %v4197, %v4202
        %v4213 = vlaneseq
        %v4214 = vshrl.u32 %v4213, 7
        %v4215 = vsub.s32 0, %v4214
        %v4216 = vrot.slane %v4093, %v4215
        %v4218 = vadd.f32 %v4204, %v4216
        %v4219 = vadd.f32 %v4205, %v4216
        %v4220 = vadd.f32 %v4206, %v4216
        %v4221 = vadd.f32 %v4207, %v4216
        %v4222 = vadd.f32 %v4208, %v4216
        %v4223 = vadd.f32 %v4209, %v4216
        %v4224 = vadd.f32 %v4210, %v4216
        %v4225 = vadd.f32 %v4211, %v4216
        %v4226 = vpack.c.bf16 %v4219, %v4218
        %v4227 = vpack.c.bf16 %v4221, %v4220
        %v4228 = vpack.c.bf16 %v4223, %v4222
        %v4229 = vpack.c.bf16 %v4225, %v4224
        %v4230 = vld [vmem:[#allocation5] sm:$0xf]
        %v4231 = vld [vmem:[#allocation5 + $0x4] sm:$0xf]
        %v4232 = vld [vmem:[#allocation5 + $0x8] sm:$0xf]
        %v4233 = vld [vmem:[#allocation5 + $0xc] sm:$0xf]
        %v4234 = vld [vmem:[#allocation5 + $0x10] sm:$0xf]
        %v4235 = vld [vmem:[#allocation5 + $0x14] sm:$0xf]
        %v4236 = vld [vmem:[%s9] sm:$0x1]
        %v4238 = vlaneseq
        %v4239 = vshrl.u32 %v4238, 7
        %v4240 = vsub.s32 0, %v4239
        %v4241 = vrot.slane %v4236, %v4240
        %v4249 = vunpack.c.l.b16 %v4230
        %v4250 = vunpack.c.l.b16 %v4231
        %v4251 = vunpack.c.l.b16 %v4232
        %v4252 = vunpack.c.l.b16 %v4233
        %v4253 = vunpack.c.l.b16 %v4234
        %v4254 = vunpack.c.l.b16 %v4235
        %v4255 = vpack.c.b16 %v4250, %v4249
        %v4256 = vpack.c.b16 %v4252, %v4251
        %v4257 = vpack.c.b16 %v4254, %v4253
        %v4262 = vsel %vm460, %v4226, 0
        %v4265 = vsel %vm460, %v4227, 0
        %v4268 = vsel %vm460, %v4228, 0
        %v4271 = vsel %vm460, %v4229, 0
        %4273 = vmatprep.subr.bf16.mxu0 0
        %4274 = vmatpush1.bf16.msra.mxu0 0
        %4275 = vmatprep.subr.bf16.mxu0 0
        %4276 = vmatpush1.bf16.msra.mxu0 0
        %4277 = vmatprep.subr.bf16.mxu0 0
        %4278 = vmatpush1.bf16.msra.mxu0 0
        %4279 = vmatprep.subr.bf16.mxu0 0
        %4280 = vmatpush1.bf16.msra.mxu0 0
        %4281 = vmatprep.subr.bf16.mxu0 0
        %4282 = vmatpush1.bf16.msra.mxu0 0
        %4283 = vmatprep.subr.bf16.mxu0 0
        %4284 = vmatpush1.bf16.msra.mxu0 %v4257
        %4285 = vmatprep.subr.bf16.mxu0 0
        %4286 = vmatpush1.bf16.msra.mxu0 %v4256
        %4287 = vmatprep.subr.bf16.mxu0 0
        %4288 = vmatpush1.bf16.msra.mxu0 %v4255
        %4289 = vmatprep.subr.bf16.mxu0 0
        %4290 = vmatpush2.bf16.msra.mxu0 0
        %4291 = vmatprep.subr.bf16.mxu0 0
        %4292 = vmatpush2.bf16.msra.mxu0 0
        %4293 = vmatprep.subr.bf16.mxu0 0
        %4294 = vmatpush2.bf16.msra.mxu0 0
        %4295 = vmatprep.subr.bf16.mxu0 0
        %4296 = vmatpush2.bf16.msra.mxu0 0
        %4297 = vmatprep.subr.bf16.mxu0 0
        %4298 = vmatpush2.bf16.msra.mxu0 0
        %4299 = vmatprep.subr.bf16.mxu0 0
        %4300 = vmatpush2.bf16.msra.mxu0 0
        %4301 = vmatprep.subr.bf16.mxu0 0
        %4302 = vmatpush2.bf16.msra.mxu0 0
        %4303 = vmatprep.subr.bf16.mxu0 0
        %4304 = vmatpush2.bf16.msra.mxu0 0
        %4305 = vmatprep.mubr.bf16.mxu0 0
        %4306 = vmatmul.mubr.bf16.gmra.mxu0 %v4262
        %v4307 = vpop.f32.mrf.mxu0
        %v4308 = vadd.f32 %v4241, %v4307
        %v4309 = vpop.f32.mrf.mxu0
        %v4310 = vpop.f32.mrf.mxu0
        %v4311 = vadd.f32 %v4241, %v4310
        %v4312 = vpop.f32.mrf.mxu0
        %4313 = vmatprep.mubr.bf16.mxu0 0
        %4314 = vmatmul.mubr.bf16.gmra.mxu0 %v4265
        %v4315 = vpop.f32.mrf.mxu0
        %v4316 = vadd.f32 %v4241, %v4315
        %v4317 = vpop.f32.mrf.mxu0
        %v4318 = vpop.f32.mrf.mxu0
        %v4319 = vadd.f32 %v4241, %v4318
        %v4320 = vpop.f32.mrf.mxu0
        %4321 = vmatprep.mubr.bf16.mxu0 0
        %4322 = vmatmul.mubr.bf16.gmra.mxu0 %v4268
        %v4323 = vpop.f32.mrf.mxu0
        %v4324 = vadd.f32 %v4241, %v4323
        %v4325 = vpop.f32.mrf.mxu0
        %v4326 = vpop.f32.mrf.mxu0
        %v4327 = vadd.f32 %v4241, %v4326
        %v4328 = vpop.f32.mrf.mxu0
        %4329 = vmatprep.mubr.bf16.mxu0 0
        %4330 = vmatmul.mubr.bf16.gmra.mxu0 %v4271
        %v4331 = vpop.f32.mrf.mxu0
        %v4332 = vadd.f32 %v4241, %v4331
        %v4333 = vpop.f32.mrf.mxu0
        %v4334 = vpop.f32.mrf.mxu0
        %v4335 = vadd.f32 %v4241, %v4334
        %v4336 = vpop.f32.mrf.mxu0
        %4337 = vdwg.mxu0
        %v4338 = vmul.f32 %v4308, 0.5
        %v4339 = vmul.f32 %v4311, 0.5
        %v4340 = vmul.f32 %v4316, 0.5
        %v4341 = vmul.f32 %v4319, 0.5
        %v4342 = vmul.f32 %v4324, 0.5
        %v4343 = vmul.f32 %v4327, 0.5
        %v4344 = vmul.f32 %v4332, 0.5
        %v4345 = vmul.f32 %v4335, 0.5
        %v4346 = vmul.f32 %v4308, 0.70710677
        %v4347 = vmul.f32 %v4311, 0.70710677
        %v4348 = vmul.f32 %v4316, 0.70710677
        %v4349 = vmul.f32 %v4319, 0.70710677
        %v4350 = vmul.f32 %v4324, 0.70710677
        %v4351 = vmul.f32 %v4327, 0.70710677
        %v4352 = vmul.f32 %v4332, 0.70710677
        %v4353 = vmul.f32 %v4335, 0.70710677
        %v4354 = vand.u32 2147483647, %v4346
        %v4355 = vand.u32 2147483647, %v4347
        %v4356 = vand.u32 2147483647, %v4348
        %v4357 = vand.u32 2147483647, %v4349
        %v4358 = vand.u32 2147483647, %v4350
        %v4359 = vand.u32 2147483647, %v4351
        %v4360 = vand.u32 2147483647, %v4352
        %v4361 = vand.u32 2147483647, %v4353
        %v4362 = vmul.f32 %v4354, 0.3275911
        %v4363 = vmul.f32 %v4355, 0.3275911
        %v4364 = vmul.f32 %v4356, 0.3275911
        %v4365 = vmul.f32 %v4357, 0.3275911
        %v4366 = vmul.f32 %v4358, 0.3275911
        %v4367 = vmul.f32 %v4359, 0.3275911
        %v4368 = vmul.f32 %v4360, 0.3275911
        %v4369 = vmul.f32 %v4361, 0.3275911
        %v4370 = vadd.f32 %v4362, 1.0
        %v4371 = vadd.f32 %v4363, 1.0
        %v4372 = vadd.f32 %v4364, 1.0
        %v4373 = vadd.f32 %v4365, 1.0
        %v4374 = vadd.f32 %v4366, 1.0
        %v4375 = vadd.f32 %v4367, 1.0
        %v4376 = vadd.f32 %v4368, 1.0
        %v4377 = vadd.f32 %v4369, 1.0
        %v4378 = vrcp.pop %v4370
        %v4379 = vmul.f32 1.0, %v4378
        %v4380 = vrcp.pop %v4371
        %v4381 = vmul.f32 1.0, %v4380
        %v4382 = vrcp.pop %v4372
        %v4383 = vmul.f32 1.0, %v4382
        %v4384 = vrcp.pop %v4373
        %v4385 = vmul.f32 1.0, %v4384
        %v4386 = vrcp.pop %v4374
        %v4387 = vmul.f32 1.0, %v4386
        %v4388 = vrcp.pop %v4375
        %v4389 = vmul.f32 1.0, %v4388
        %v4390 = vrcp.pop %v4376
        %v4391 = vmul.f32 1.0, %v4390
        %v4392 = vrcp.pop %v4377
        %v4393 = vmul.f32 1.0, %v4392
        %v4394 = vmul.f32 %v4379, 1.0614054
        %v4395 = vmul.f32 %v4381, 1.0614054
        %v4396 = vmul.f32 %v4383, 1.0614054
        %v4397 = vmul.f32 %v4385, 1.0614054
        %v4398 = vmul.f32 %v4387, 1.0614054
        %v4399 = vmul.f32 %v4389, 1.0614054
        %v4400 = vmul.f32 %v4391, 1.0614054
        %v4401 = vmul.f32 %v4393, 1.0614054
        %v4402 = vadd.f32 %v4394, -1.4531521
        %v4403 = vadd.f32 %v4395, -1.4531521
        %v4404 = vadd.f32 %v4396, -1.4531521
        %v4405 = vadd.f32 %v4397, -1.4531521
        %v4406 = vadd.f32 %v4398, -1.4531521
        %v4407 = vadd.f32 %v4399, -1.4531521
        %v4408 = vadd.f32 %v4400, -1.4531521
        %v4409 = vadd.f32 %v4401, -1.4531521
        %v4410 = vmul.f32 %v4402, %v4379
        %v4411 = vmul.f32 %v4403, %v4381
        %v4412 = vmul.f32 %v4404, %v4383
        %v4413 = vmul.f32 %v4405, %v4385
        %v4414 = vmul.f32 %v4406, %v4387
        %v4415 = vmul.f32 %v4407, %v4389
        %v4416 = vmul.f32 %v4408, %v4391
        %v4417 = vmul.f32 %v4409, %v4393
        %v4418 = vadd.f32 %v4410, 1.4214138
        %v4419 = vadd.f32 %v4411, 1.4214138
        %v4420 = vadd.f32 %v4412, 1.4214138
        %v4421 = vadd.f32 %v4413, 1.4214138
        %v4422 = vadd.f32 %v4414, 1.4214138
        %v4423 = vadd.f32 %v4415, 1.4214138
        %v4424 = vadd.f32 %v4416, 1.4214138
        %v4425 = vadd.f32 %v4417, 1.4214138
        %v4426 = vmul.f32 %v4418, %v4379
        %v4427 = vmul.f32 %v4419, %v4381
        %v4428 = vmul.f32 %v4420, %v4383
        %v4429 = vmul.f32 %v4421, %v4385
        %v4430 = vmul.f32 %v4422, %v4387
        %v4431 = vmul.f32 %v4423, %v4389
        %v4432 = vmul.f32 %v4424, %v4391
        %v4433 = vmul.f32 %v4425, %v4393
        %v4434 = vadd.f32 %v4426, -0.28449672
        %v4435 = vadd.f32 %v4427, -0.28449672
        %v4436 = vadd.f32 %v4428, -0.28449672
        %v4437 = vadd.f32 %v4429, -0.28449672
        %v4438 = vadd.f32 %v4430, -0.28449672
        %v4439 = vadd.f32 %v4431, -0.28449672
        %v4440 = vadd.f32 %v4432, -0.28449672
        %v4441 = vadd.f32 %v4433, -0.28449672
        %v4442 = vmul.f32 %v4434, %v4379
        %v4443 = vmul.f32 %v4435, %v4381
        %v4444 = vmul.f32 %v4436, %v4383
        %v4445 = vmul.f32 %v4437, %v4385
        %v4446 = vmul.f32 %v4438, %v4387
        %v4447 = vmul.f32 %v4439, %v4389
        %v4448 = vmul.f32 %v4440, %v4391
        %v4449 = vmul.f32 %v4441, %v4393
        %v4450 = vadd.f32 %v4442, 0.2548296
        %v4451 = vadd.f32 %v4443, 0.2548296
        %v4452 = vadd.f32 %v4444, 0.2548296
        %v4453 = vadd.f32 %v4445, 0.2548296
        %v4454 = vadd.f32 %v4446, 0.2548296
        %v4455 = vadd.f32 %v4447, 0.2548296
        %v4456 = vadd.f32 %v4448, 0.2548296
        %v4457 = vadd.f32 %v4449, 0.2548296
        %v4458 = vmul.f32 %v4450, %v4379
        %v4459 = vmul.f32 %v4451, %v4381
        %v4460 = vmul.f32 %v4452, %v4383
        %v4461 = vmul.f32 %v4453, %v4385
        %v4462 = vmul.f32 %v4454, %v4387
        %v4463 = vmul.f32 %v4455, %v4389
        %v4464 = vmul.f32 %v4456, %v4391
        %v4465 = vmul.f32 %v4457, %v4393
        %v4466 = vsub.f32 0.0, %v4354
        %v4467 = vsub.f32 0.0, %v4355
        %v4468 = vsub.f32 0.0, %v4356
        %v4469 = vsub.f32 0.0, %v4357
        %v4470 = vsub.f32 0.0, %v4358
        %v4471 = vsub.f32 0.0, %v4359
        %v4472 = vsub.f32 0.0, %v4360
        %v4473 = vsub.f32 0.0, %v4361
        %v4474 = vmul.f32 %v4466, %v4354
        %v4475 = vmul.f32 %v4467, %v4355
        %v4476 = vmul.f32 %v4468, %v4356
        %v4477 = vmul.f32 %v4469, %v4357
        %v4478 = vmul.f32 %v4470, %v4358
        %v4479 = vmul.f32 %v4471, %v4359
        %v4480 = vmul.f32 %v4472, %v4360
        %v4481 = vmul.f32 %v4473, %v4361
        %v4482 = vmul.f32 %v4474, 1.442695
        %v4483 = vpow.pop %v4482
        %v4484 = vmul.f32 %v4475, 1.442695
        %v4485 = vpow.pop %v4484
        %v4486 = vmul.f32 %v4476, 1.442695
        %v4487 = vpow.pop %v4486
        %v4488 = vmul.f32 %v4477, 1.442695
        %v4489 = vpow.pop %v4488
        %v4490 = vmul.f32 %v4478, 1.442695
        %v4491 = vpow.pop %v4490
        %v4492 = vmul.f32 %v4479, 1.442695
        %v4493 = vpow.pop %v4492
        %v4494 = vmul.f32 %v4480, 1.442695
        %v4495 = vpow.pop %v4494
        %v4496 = vmul.f32 %v4481, 1.442695
        %v4497 = vpow.pop %v4496
        %v4498 = vmul.f32 %v4458, %v4483
        %v4499 = vmul.f32 %v4459, %v4485
        %v4500 = vmul.f32 %v4460, %v4487
        %v4501 = vmul.f32 %v4461, %v4489
        %v4502 = vmul.f32 %v4462, %v4491
        %v4503 = vmul.f32 %v4463, %v4493
        %v4504 = vmul.f32 %v4464, %v4495
        %v4505 = vmul.f32 %v4465, %v4497
        %v4506 = vsub.f32 1.0, %v4498
        %v4507 = vsub.f32 1.0, %v4499
        %v4508 = vsub.f32 1.0, %v4500
        %v4509 = vsub.f32 1.0, %v4501
        %v4510 = vsub.f32 1.0, %v4502
        %v4511 = vsub.f32 1.0, %v4503
        %v4512 = vsub.f32 1.0, %v4504
        %v4513 = vsub.f32 1.0, %v4505
        %vm4514 = vcmp.ge.f32.partialorder %v4346, 0.0
        %vm4515 = vcmp.ge.f32.partialorder %v4347, 0.0
        %vm4516 = vcmp.ge.f32.partialorder %v4348, 0.0
        %vm4517 = vcmp.ge.f32.partialorder %v4349, 0.0
        %vm4518 = vcmp.ge.f32.partialorder %v4350, 0.0
        %vm4519 = vcmp.ge.f32.partialorder %v4351, 0.0
        %vm4520 = vcmp.ge.f32.partialorder %v4352, 0.0
        %vm4521 = vcmp.ge.f32.partialorder %v4353, 0.0
        %v4522 = vsub.f32 0.0, %v4506
        %v4523 = vsub.f32 0.0, %v4507
        %v4524 = vsub.f32 0.0, %v4508
        %v4525 = vsub.f32 0.0, %v4509
        %v4526 = vsub.f32 0.0, %v4510
        %v4527 = vsub.f32 0.0, %v4511
        %v4528 = vsub.f32 0.0, %v4512
        %v4529 = vsub.f32 0.0, %v4513
        %v4530 = vsel %vm4514, %v4506, %v4522
        %v4531 = vsel %vm4515, %v4507, %v4523
        %v4532 = vsel %vm4516, %v4508, %v4524
        %v4533 = vsel %vm4517, %v4509, %v4525
        %v4534 = vsel %vm4518, %v4510, %v4526
        %v4535 = vsel %vm4519, %v4511, %v4527
        %v4536 = vsel %vm4520, %v4512, %v4528
        %v4537 = vsel %vm4521, %v4513, %v4529
        %v4538 = vadd.f32 %v4530, 1.0
        %v4539 = vadd.f32 %v4531, 1.0
        %v4540 = vadd.f32 %v4532, 1.0
        %v4541 = vadd.f32 %v4533, 1.0
        %v4542 = vadd.f32 %v4534, 1.0
        %v4543 = vadd.f32 %v4535, 1.0
        %v4544 = vadd.f32 %v4536, 1.0
        %v4545 = vadd.f32 %v4537, 1.0
        %v4546 = vmul.f32 %v4338, %v4538
        %v4547 = vmul.f32 %v4339, %v4539
        %v4548 = vmul.f32 %v4340, %v4540
        %v4549 = vmul.f32 %v4341, %v4541
        %v4550 = vmul.f32 %v4342, %v4542
        %v4551 = vmul.f32 %v4343, %v4543
        %v4552 = vmul.f32 %v4344, %v4544
        %v4553 = vmul.f32 %v4345, %v4545
        %v4554 = vpack.c.bf16 %v4547, %v4546
        %v4555 = vpack.c.bf16 %v4549, %v4548
        %v4556 = vpack.c.bf16 %v4551, %v4550
        %v4557 = vpack.c.bf16 %v4553, %v4552
        %v4558 = vld [vmem:[%s10] sm:$0xf]
        %v4559 = vld [vmem:[%s10 + $0x4] sm:$0xf]
        %v4560 = vld [vmem:[%s10 + $0x8] sm:$0xf]
        %v4561 = vld [vmem:[%s10 + $0xc] sm:$0xf]
        %v4562 = vld [vmem:[%s10 + $0x10] sm:$0xf]
        %v4563 = vld [vmem:[%s10 + $0x14] sm:$0xf]
        %v4564 = vld [vmem:[%s10 + $0x18] sm:$0xf]
        %v4565 = vld [vmem:[%s10 + $0x1c] sm:$0xf]
        %v4566 = vld [vmem:[%s11] sm:$0x1]
        %v4568 = vlaneseq
        %v4569 = vshrl.u32 %v4568, 7
        %v4570 = vsub.s32 0, %v4569
        %v4571 = vrot.slane %v4566, %v4570
        %v4581 = vunpack.c.l.b16 %v4558
        %v4582 = vunpack.c.l.b16 %v4559
        %v4583 = vunpack.c.l.b16 %v4560
        %v4584 = vunpack.c.l.b16 %v4561
        %v4585 = vunpack.c.l.b16 %v4562
        %v4586 = vunpack.c.l.b16 %v4563
        %v4587 = vunpack.c.l.b16 %v4564
        %v4588 = vunpack.c.l.b16 %v4565
        %v4589 = vpack.c.b16 %v4582, %v4581
        %v4590 = vpack.c.b16 %v4584, %v4583
        %v4591 = vpack.c.b16 %v4586, %v4585
        %v4592 = vpack.c.b16 %v4588, %v4587
        %vm4597 = vcmask 523264
        %v4599 = vsel %vm4597, %v4554, 0
        %v4602 = vsel %vm4597, %v4555, 0
        %v4605 = vsel %vm4597, %v4556, 0
        %v4608 = vsel %vm4597, %v4557, 0
        %4610 = vmatprep.subr.bf16.mxu0 0
        %4611 = vmatpush1.bf16.msra.mxu0 0
        %4612 = vmatprep.subr.bf16.mxu0 0
        %4613 = vmatpush1.bf16.msra.mxu0 0
        %4614 = vmatprep.subr.bf16.mxu0 0
        %4615 = vmatpush1.bf16.msra.mxu0 0
        %4616 = vmatprep.subr.bf16.mxu0 0
        %4617 = vmatpush1.bf16.msra.mxu0 0
        %4618 = vmatprep.subr.bf16.mxu0 0
        %4619 = vmatpush1.bf16.msra.mxu0 %v4592
        %4620 = vmatprep.subr.bf16.mxu0 0
        %4621 = vmatpush1.bf16.msra.mxu0 %v4591
        %4622 = vmatprep.subr.bf16.mxu0 0
        %4623 = vmatpush1.bf16.msra.mxu0 %v4590
        %4624 = vmatprep.subr.bf16.mxu0 0
        %4625 = vmatpush1.bf16.msra.mxu0 %v4589
        %4626 = vmatprep.subr.bf16.mxu0 0
        %4627 = vmatpush2.bf16.msra.mxu0 0
        %4628 = vmatprep.subr.bf16.mxu0 0
        %4629 = vmatpush2.bf16.msra.mxu0 0
        %4630 = vmatprep.subr.bf16.mxu0 0
        %4631 = vmatpush2.bf16.msra.mxu0 0
        %4632 = vmatprep.subr.bf16.mxu0 0
        %4633 = vmatpush2.bf16.msra.mxu0 0
        %4634 = vmatprep.subr.bf16.mxu0 0
        %4635 = vmatpush2.bf16.msra.mxu0 0
        %4636 = vmatprep.subr.bf16.mxu0 0
        %4637 = vmatpush2.bf16.msra.mxu0 0
        %4638 = vmatprep.subr.bf16.mxu0 0
        %4639 = vmatpush2.bf16.msra.mxu0 0
        %4640 = vmatprep.subr.bf16.mxu0 0
        %4641 = vmatpush2.bf16.msra.mxu0 0
        %4642 = vmatprep.mubr.bf16.mxu0 0
        %4643 = vmatmul.mubr.bf16.gmra.mxu0 %v4599
        %v4644 = vpop.f32.mrf.mxu0
        %v4645 = vadd.f32 %v4571, %v4644
        %v4646 = vpop.f32.mrf.mxu0
        %v4647 = vpop.f32.mrf.mxu0
        %v4648 = vadd.f32 %v4571, %v4647
        %v4649 = vpop.f32.mrf.mxu0
        %4650 = vmatprep.mubr.bf16.mxu0 0
        %4651 = vmatmul.mubr.bf16.gmra.mxu0 %v4602
        %v4652 = vpop.f32.mrf.mxu0
        %v4653 = vadd.f32 %v4571, %v4652
        %v4654 = vpop.f32.mrf.mxu0
        %v4655 = vpop.f32.mrf.mxu0
        %v4656 = vadd.f32 %v4571, %v4655
        %v4657 = vpop.f32.mrf.mxu0
        %4658 = vmatprep.mubr.bf16.mxu0 0
        %4659 = vmatmul.mubr.bf16.gmra.mxu0 %v4605
        %v4660 = vpop.f32.mrf.mxu0
        %v4661 = vadd.f32 %v4571, %v4660
        %v4662 = vpop.f32.mrf.mxu0
        %v4663 = vpop.f32.mrf.mxu0
        %v4664 = vadd.f32 %v4571, %v4663
        %v4665 = vpop.f32.mrf.mxu0
        %4666 = vmatprep.mubr.bf16.mxu0 0
        %4667 = vmatmul.mubr.bf16.gmra.mxu0 %v4608
        %v4668 = vpop.f32.mrf.mxu0
        %v4669 = vadd.f32 %v4571, %v4668
        %v4670 = vpop.f32.mrf.mxu0
        %v4671 = vpop.f32.mrf.mxu0
        %v4672 = vadd.f32 %v4571, %v4671
        %v4673 = vpop.f32.mrf.mxu0
        %4674 = vdwg.mxu0
        %v4675 = vadd.f32 %v4084, %v4645
        %v4676 = vadd.f32 %v4085, %v4648
        %v4677 = vadd.f32 %v4086, %v4653
        %v4678 = vadd.f32 %v4087, %v4656
        %v4679 = vadd.f32 %v4088, %v4661
        %v4680 = vadd.f32 %v4089, %v4664
        %v4681 = vadd.f32 %v4090, %v4669
        %v4682 = vadd.f32 %v4091, %v4672
        %4683 = vst.msk [vmem:[%s446] sm:$0xff] %vm460, %v4675
        %4684 = vst.msk [vmem:[%s446 + $0x8] sm:$0xff] %vm460, %v4676
        %4685 = vst.msk [vmem:[%s446 + $0x10] sm:$0xff] %vm460, %v4677
        %4686 = vst.msk [vmem:[%s446 + $0x18] sm:$0xff] %vm460, %v4678
        %4687 = vst.msk [vmem:[%s446 + $0x20] sm:$0xff] %vm460, %v4679
        %4688 = vst.msk [vmem:[%s446 + $0x28] sm:$0xff] %vm460, %v4680
        %4689 = vst.msk [vmem:[%s446 + $0x30] sm:$0xff] %vm460, %v4681
        %4690 = vst.msk [vmem:[%s446 + $0x38] sm:$0xff] %vm460, %v4682
        %s4691 = sand.u32 %s295, 1
        %s4692 = scalar_lea.sflag [#allocation4], %s4691
        %s4693 = sand.u32 %s295, 1
        %s4694 = smul.addr %s4693, 64
        %s4695 = scalar_lea.vmem [#allocation7], %s4694
        // Predicated region
        $region77: #{tpu_custom_call.1} parent=67 // pred_check
          %p4696 = pneg %p305
        $region78: #{tpu_custom_call.1} parent=67 // pred_check_branch
          %4698 = sbr.rel (%p4696) target = $region80
        $region79: #{tpu_custom_call.1} parent=67 // pred_region
          %s4699 = smul.u32 8, %s30
          %s4701 = ssub.s32 1024, 1024
          %4702 = vsyncadd %s4692, %s4701
          %s4703 = smul.addr %s4699, 128
          %s4704 = scalar_lea.hbm %s12, %s4703
          %s4705 = sshll.u32 %s4695, 4
          %s4706 = int_to_ptr.vmem [resolvable:$true] %s4705
          %4711 = dma.vmem_to_hbm [thread:$0]  %s4706, 1024, %s4704, %s4692, 128, 128, 8
        $region80: #{tpu_custom_call.1} parent=67 // pred_fallthru
          _
      $region68: #{tpu_custom_call.1} parent=5 // pred_fallthru
        _
      %p4712 = scmp.le.s32.totalorder 2, %s25
      // Predicated region
      $region81: #{tpu_custom_call.1} parent=5 // pred_check
        %p4713 = pneg %p4712
      $region82: #{tpu_custom_call.1} parent=5 // pred_check_branch
        %4715 = sbr.rel (%p4713) target = $region84
      $region83: #{tpu_custom_call.1} parent=5 // pred_region
        %s4716 = ssub.s32 %s25, 2
        // Predicated region
        $region85: #{tpu_custom_call.1} parent=83 // pred_check
          %p4717 = pneg %p311
        $region86: #{tpu_custom_call.1} parent=83 // pred_check_branch
          %4719 = sbr.rel (%p4717) target = $region88
        $region87: #{tpu_custom_call.1} parent=83 // pred_region
          %s4720 = sand.u32 %s296, 1
          %s4721 = scalar_lea.sflag [#allocation4], %s4720
          %s4722 = sand.u32 %s296, 1
          %s4723 = smul.addr %s4722, 64
          %s4724 = scalar_lea.vmem [#allocation7], %s4723
          %4725 = dma.done %s4721, 1024
        $region88: #{tpu_custom_call.1} parent=83 // pred_fallthru
          _
      $region84: #{tpu_custom_call.1} parent=5 // pred_fallthru
        _
    $region6: #{tpu_custom_call.1} parent=1 // loop_footer
      %s29 = sadd.s32 1, %s25
    $region7: #{tpu_custom_call.1} parent=1 // loop_footer_branch
      %24 = sbr.rel target = $region3
    $region8: #{tpu_custom_call.1} parent=1 // loop_exit
      _
    %4726 = vsyncpa [#allocation3], 1
    %s4727 = scalar_lea.sflag [#allocation3], 1
    %4728 = vsyncpa %s4727, 1
    %4729 = vsyncpa [#allocation6], 1
    %4730 = vsyncpa [#allocation4], 1
    %s4731 = scalar_lea.sflag [#allocation4], 1
    %4732 = vsyncpa %s4731, 1

</llo_original>
